<compile_context>
chip_gen: v6e
topology: v6e:2x2x1
jax: 0.10.0
libtpu: 0.0.40
codegen_flags: <defaults>
</compile_context>

<pallas_src>
import functools

import jax
import jax.numpy as jnp
from jax import lax
from jax.experimental import pallas as pl
from jax.experimental.pallas import tpu as pltpu


# ----------------------------------------------------------------------------
# In-kernel helpers
# ----------------------------------------------------------------------------
def _lstm_cell(xg_row, h, c, whh, g_mask, H):
    """One LSTM cell step. xg_row: (B, 4H) = x@W_ih^T + b_ih + b_hh.
    Gate order follows PyTorch nn.LSTM: [i, f, g, o]."""
    gates = xg_row + jnp.dot(h, whh, preferred_element_type=jnp.float32)  # (B, 4H)
    sig = jax.nn.sigmoid(gates)          # full 128-lane EUP pass
    tnh = jnp.tanh(gates)                # full 128-lane EUP pass
    act = jnp.where(g_mask, tnh, sig)    # tanh only on the g-gate lanes
    i_g = act[:, 0 * H:1 * H]
    f_g = act[:, 1 * H:2 * H]
    g_g = act[:, 2 * H:3 * H]
    o_g = act[:, 3 * H:4 * H]
    c_new = f_g * c + i_g * g_g
    h_new = o_g * jnp.tanh(c_new)
    return h_new, c_new


def _bidir_layer(x_flat, w_ih_ref, w_hh_ref, b_ref, out_scr, g_mask, T, B, H):
    """x_flat: (T*B, F) time-major rows. Writes (T*B, 2H) [h_fwd | h_bwd]
    (time-aligned) into the VMEM scratch out_scr."""
    whh_f = w_hh_ref[0]                                     # (H, 4H)
    whh_b = w_hh_ref[1]
    # Input projections for both directions (biases already folded in).
    xg_f = jnp.dot(x_flat, w_ih_ref[0],
                   preferred_element_type=jnp.float32) + b_ref[0]   # (T*B, 4H)
    xg_b = jnp.dot(x_flat, w_ih_ref[1],
                   preferred_element_type=jnp.float32) + b_ref[1]

    zeros = jnp.zeros((B, H), jnp.float32)
    h_f, c_f = zeros, zeros
    h_b, c_b = zeros, zeros
    # Static (fully unrolled) time loop; both directions advance per step.
    for t in range(T):
        tt = T - 1 - t                                       # reversed index (no flip)
        h_f, c_f = _lstm_cell(xg_f[t * B:(t + 1) * B, :], h_f, c_f,
                              whh_f, g_mask, H)
        h_b, c_b = _lstm_cell(xg_b[tt * B:(tt + 1) * B, :], h_b, c_b,
                              whh_b, g_mask, H)
        out_scr[t * B:(t + 1) * B, 0:H] = h_f
        out_scr[tt * B:(tt + 1) * B, H:2 * H] = h_b


# ----------------------------------------------------------------------------
# Fused forward kernel (single pallas_call, no grid)
# ----------------------------------------------------------------------------
def fused_forward_kernel(ids_ref, embed_ref,
                         w_ih0_ref, w_hh0_ref, b0_ref,
                         w_ih1_ref, w_hh1_ref, b1_ref,
                         w_lin_ref, b_lin_ref,
                         out_ref,
                         l0_scr, l1_scr,
                         *, T, B, H, V):
    TB = T * B

    # Embedding lookup as a one-hot matmul (MXU-friendly in-kernel gather).
    lane_v = lax.broadcasted_iota(jnp.int32, (TB, V), 1)
    onehot = (ids_ref[...] == lane_v).astype(jnp.float32)            # (TB, V)
    x = jnp.dot(onehot, embed_ref[...],
                preferred_element_type=jnp.float32)                  # (TB, E)

    # Per-lane gate mask: lanes [2H, 3H) are the tanh ("g") gate.
    lane_g = lax.broadcasted_iota(jnp.int32, (1, 4 * H), 1)
    g_mask = (lane_g >= 2 * H) & (lane_g < 3 * H)

    # Two bidirectional LSTM layers.
    _bidir_layer(x, w_ih0_ref, w_hh0_ref, b0_ref, l0_scr, g_mask, T, B, H)
    _bidir_layer(l0_scr[...], w_ih1_ref, w_hh1_ref, b1_ref, l1_scr, g_mask, T, B, H)

    # Final Linear(2H -> 5) folded into the epilogue.
    out_ref[...] = (
        jnp.dot(l1_scr[...], w_lin_ref[...], preferred_element_type=jnp.float32)
        + b_lin_ref[...]
    ).astype(out_ref.dtype)
    # TODO(synk): on v7x the two directions could be split across the 2 TensorCores
    # via a parallel grid axis / core_map; kept single-core fused variant here.


# ----------------------------------------------------------------------------
# Parameter init (PyTorch-layout) and one-time packing
# ----------------------------------------------------------------------------
def init_params(key, vocab_size, embed_size, hidden_size):
    keys = iter(jax.random.split(key, 32))

    def u(shape, scale):
        return jax.random.uniform(next(keys), shape, jnp.float32,
                                  minval=-scale, maxval=scale)

    params = {"embed": jax.random.normal(next(keys), (vocab_size, embed_size),
                                         jnp.float32)}
    k_lstm = 1.0 / (hidden_size ** 0.5)
    lstm = []
    for layer in range(2):
        in_size = embed_size if layer == 0 else 2 * hidden_size
        dirs = []
        for _d in range(2):  # 0: forward, 1: reverse
            dirs.append(dict(
                w_ih=u((4 * hidden_size, in_size), k_lstm),
                w_hh=u((4 * hidden_size, hidden_size), k_lstm),
                b_ih=u((4 * hidden_size,), k_lstm),
                b_hh=u((4 * hidden_size,), k_lstm),
            ))
        lstm.append(dirs)
    params["lstm"] = lstm
    k_lin = 1.0 / ((2 * hidden_size) ** 0.5)
    params["lin_w"] = u((5, 2 * hidden_size), k_lin)
    params["lin_b"] = u((5,), k_lin)
    return params


def pack_params(params):
    """Pre-transpose / stack weights and pre-sum biases (done once, not per call)."""
    packed = {"embed": params["embed"]}
    for layer in range(2):
        dirs = params["lstm"][layer]
        packed[f"w_ih{layer}"] = jnp.stack([dirs[d]["w_ih"].T for d in range(2)])  # (2, in, 4H)
        packed[f"w_hh{layer}"] = jnp.stack([dirs[d]["w_hh"].T for d in range(2)])  # (2, H, 4H)
        packed[f"b{layer}"] = jnp.stack([
            (dirs[d]["b_ih"] + dirs[d]["b_hh"]).reshape(1, -1) for d in range(2)
        ])                                                                          # (2, 1, 4H)
    packed["w_lin"] = params["lin_w"].T              # (2H, 5)
    packed["b_lin"] = params["lin_b"].reshape(1, -1)  # (1, 5)
    return packed


# ----------------------------------------------------------------------------
# Forward wrapper
# ----------------------------------------------------------------------------
def forward(packed, inpt):
    T, B = inpt.shape
    H = packed["w_hh0"].shape[1]
    V = packed["embed"].shape[0]
    TB = T * B

    ids2 = inpt.reshape(TB, 1).astype(jnp.int32)   # time-major rows of B

    kernel = functools.partial(fused_forward_kernel, T=T, B=B, H=H, V=V)
    out_flat = pl.pallas_call(
        kernel,
        out_shape=jax.ShapeDtypeStruct((TB, 5), jnp.float32),
        scratch_shapes=[
            pltpu.VMEM((TB, 2 * H), jnp.float32),   # layer-0 output sequence
            pltpu.VMEM((TB, 2 * H), jnp.float32),   # layer-1 output sequence
        ],
    )(ids2, packed["embed"],
      packed["w_ih0"], packed["w_hh0"], packed["b0"],
      packed["w_ih1"], packed["w_hh1"], packed["b1"],
      packed["w_lin"], packed["b_lin"])
    return out_flat.reshape(T, B, 5)


if __name__ == "__main__":
    vocab_size, embed_size, hidden_size = 32, 16, 32
    T, B = 8, 2

    key = jax.random.PRNGKey(0)
    k_param, k_inp = jax.random.split(key)
    params = init_params(k_param, vocab_size, embed_size, hidden_size)
    packed = pack_params(params)                       # one-time weight packing
    inpt = jax.random.randint(k_inp, (T, B), 0, vocab_size, dtype=jnp.int32)

    fwd = jax.jit(forward)
    out = jax.block_until_ready(fwd(packed, inpt))
    assert out.shape == (T, B, 5) and out.dtype == jnp.float32
    print("KERNEL_OK")
</pallas_src>

<mosaic_0001>
module attributes {stable_mosaic.version = 11 : i64} {
  func.func @fused_forward_kernel(%arg0: memref<16x1xi32, #tpu.memory_space<vmem>>, %arg1: memref<32x16xf32, #tpu.memory_space<vmem>>, %arg2: memref<2x16x128xf32, #tpu.memory_space<vmem>>, %arg3: memref<2x32x128xf32, #tpu.memory_space<vmem>>, %arg4: memref<2x1x128xf32, #tpu.memory_space<vmem>>, %arg5: memref<2x64x128xf32, #tpu.memory_space<vmem>>, %arg6: memref<2x32x128xf32, #tpu.memory_space<vmem>>, %arg7: memref<2x1x128xf32, #tpu.memory_space<vmem>>, %arg8: memref<64x5xf32, #tpu.memory_space<vmem>>, %arg9: memref<1x5xf32, #tpu.memory_space<vmem>>, %arg10: memref<16x5xf32, #tpu.memory_space<vmem>>, %arg11: memref<16x64xf32, #tpu.memory_space<vmem>>, %arg12: memref<16x64xf32, #tpu.memory_space<vmem>>) attributes {dimension_semantics = [], scalar_prefetch = 0 : i64, scratch_operands = 2 : i64, tpu.core_type = #tpu.core_type<tc>} {
    %0 = tpu.iota {dimensions = array<i32: 1>} : vector<16x32xi32>
    %c0 = arith.constant 0 : index
    %c0_0 = arith.constant 0 : index
    %1 = vector.load %arg0[%c0, %c0_0] : memref<16x1xi32, #tpu.memory_space<vmem>>, vector<16x1xi32>
    %2 = vector.broadcast %1 : vector<16x1xi32> to vector<16x32xi32>
    %3 = arith.cmpi eq, %2, %0 : vector<16x32xi32>
    %4 = arith.extui %3 : vector<16x32xi1> to vector<16x32xi32>
    %5 = arith.sitofp %4 : vector<16x32xi32> to vector<16x32xf32>
    %c0_1 = arith.constant 0 : index
    %c0_2 = arith.constant 0 : index
    %6 = vector.load %arg1[%c0_1, %c0_2] : memref<32x16xf32, #tpu.memory_space<vmem>>, vector<32x16xf32>
    %cst = arith.constant dense<0.000000e+00> : vector<16x16xf32>
    %7 = tpu.matmul %5, %6, %cst {dimension_numbers = #tpu.dot_dimension_numbers<[1], [0], [0], [1], [0, 0, 1, 1], [], []>} : vector<16x32xf32>, vector<32x16xf32>, vector<16x16xf32> -> vector<16x16xf32>
    %8 = tpu.iota {dimensions = array<i32: 1>} : vector<1x128xi32>
    %c64_i32 = arith.constant 64 : i32
    %9 = vector.broadcast %c64_i32 : i32 to vector<1x128xi32>
    %10 = arith.cmpi sge, %8, %9 : vector<1x128xi32>
    %c96_i32 = arith.constant 96 : i32
    %11 = vector.broadcast %c96_i32 : i32 to vector<1x128xi32>
    %12 = arith.cmpi slt, %8, %11 : vector<1x128xi32>
    %13 = arith.andi %10, %12 : vector<1x128xi1>
    %c0_3 = arith.constant 0 : index
    %c0_4 = arith.constant 0 : index
    %c0_5 = arith.constant 0 : index
    %14 = vector.load %arg3[%c0_3, %c0_4, %c0_5] : memref<2x32x128xf32, #tpu.memory_space<vmem>>, vector<1x32x128xf32>
    %15 = vector.shape_cast %14 : vector<1x32x128xf32> to vector<32x128xf32>
    %c1 = arith.constant 1 : index
    %c0_6 = arith.constant 0 : index
    %c0_7 = arith.constant 0 : index
    %16 = vector.load %arg3[%c1, %c0_6, %c0_7] : memref<2x32x128xf32, #tpu.memory_space<vmem>>, vector<1x32x128xf32>
    %17 = vector.shape_cast %16 : vector<1x32x128xf32> to vector<32x128xf32>
    %c0_8 = arith.constant 0 : index
    %c0_9 = arith.constant 0 : index
    %c0_10 = arith.constant 0 : index
    %18 = vector.load %arg2[%c0_8, %c0_9, %c0_10] : memref<2x16x128xf32, #tpu.memory_space<vmem>>, vector<1x16x128xf32>
    %19 = vector.shape_cast %18 : vector<1x16x128xf32> to vector<16x128xf32>
    %cst_11 = arith.constant dense<0.000000e+00> : vector<16x128xf32>
    %20 = tpu.matmul %7, %19, %cst_11 {dimension_numbers = #tpu.dot_dimension_numbers<[1], [0], [0], [1], [0, 0, 1, 1], [], []>} : vector<16x16xf32>, vector<16x128xf32>, vector<16x128xf32> -> vector<16x128xf32>
    %c0_12 = arith.constant 0 : index
    %c0_13 = arith.constant 0 : index
    %c0_14 = arith.constant 0 : index
    %21 = vector.load %arg4[%c0_12, %c0_13, %c0_14] : memref<2x1x128xf32, #tpu.memory_space<vmem>>, vector<1x1x128xf32>
    %22 = vector.shape_cast %21 : vector<1x1x128xf32> to vector<1x128xf32>
    %23 = vector.broadcast %22 : vector<1x128xf32> to vector<16x128xf32>
    %24 = arith.addf %20, %23 : vector<16x128xf32>
    %c1_15 = arith.constant 1 : index
    %c0_16 = arith.constant 0 : index
    %c0_17 = arith.constant 0 : index
    %25 = vector.load %arg2[%c1_15, %c0_16, %c0_17] : memref<2x16x128xf32, #tpu.memory_space<vmem>>, vector<1x16x128xf32>
    %26 = vector.shape_cast %25 : vector<1x16x128xf32> to vector<16x128xf32>
    %cst_18 = arith.constant dense<0.000000e+00> : vector<16x128xf32>
    %27 = tpu.matmul %7, %26, %cst_18 {dimension_numbers = #tpu.dot_dimension_numbers<[1], [0], [0], [1], [0, 0, 1, 1], [], []>} : vector<16x16xf32>, vector<16x128xf32>, vector<16x128xf32> -> vector<16x128xf32>
    %c1_19 = arith.constant 1 : index
    %c0_20 = arith.constant 0 : index
    %c0_21 = arith.constant 0 : index
    %28 = vector.load %arg4[%c1_19, %c0_20, %c0_21] : memref<2x1x128xf32, #tpu.memory_space<vmem>>, vector<1x1x128xf32>
    %29 = vector.shape_cast %28 : vector<1x1x128xf32> to vector<1x128xf32>
    %30 = vector.broadcast %29 : vector<1x128xf32> to vector<16x128xf32>
    %31 = arith.addf %27, %30 : vector<16x128xf32>
    %cst_22 = arith.constant 0.000000e+00 : f32
    %32 = vector.broadcast %cst_22 : f32 to vector<2x32xf32>
    %33 = vector.extract_strided_slice %24 {offsets = [0, 0], sizes = [2, 128], strides = [1, 1]} : vector<16x128xf32> to vector<2x128xf32>
    %cst_23 = arith.constant dense<0.000000e+00> : vector<2x128xf32>
    %34 = tpu.matmul %32, %15, %cst_23 {dimension_numbers = #tpu.dot_dimension_numbers<[1], [0], [0], [1], [0, 0, 1, 1], [], []>} : vector<2x32xf32>, vector<32x128xf32>, vector<2x128xf32> -> vector<2x128xf32>
    %35 = arith.addf %33, %34 : vector<2x128xf32>
    %36 = arith.negf %35 : vector<2x128xf32>
    %37 = math.exp %36 : vector<2x128xf32>
    %cst_24 = arith.constant 1.000000e+00 : f32
    %38 = vector.broadcast %cst_24 : f32 to vector<2x128xf32>
    %39 = arith.addf %38, %37 : vector<2x128xf32>
    %40 = arith.divf %38, %39 : vector<2x128xf32>
    %41 = math.tanh %35 : vector<2x128xf32>
    %42 = vector.shape_cast %13 : vector<1x128xi1> to vector<1x128xi1>
    %43 = vector.broadcast %42 : vector<1x128xi1> to vector<2x128xi1>
    %44 = arith.select %43, %41, %40 : vector<2x128xi1>, vector<2x128xf32>
    %45 = vector.extract_strided_slice %44 {offsets = [0, 0], sizes = [2, 32], strides = [1, 1]} : vector<2x128xf32> to vector<2x32xf32>
    %46 = vector.extract_strided_slice %44 {offsets = [0, 32], sizes = [2, 32], strides = [1, 1]} : vector<2x128xf32> to vector<2x32xf32>
    %47 = vector.extract_strided_slice %44 {offsets = [0, 64], sizes = [2, 32], strides = [1, 1]} : vector<2x128xf32> to vector<2x32xf32>
    %48 = vector.extract_strided_slice %44 {offsets = [0, 96], sizes = [2, 32], strides = [1, 1]} : vector<2x128xf32> to vector<2x32xf32>
    %49 = arith.mulf %46, %32 : vector<2x32xf32>
    %50 = arith.mulf %45, %47 : vector<2x32xf32>
    %51 = arith.addf %49, %50 : vector<2x32xf32>
    %52 = math.tanh %51 : vector<2x32xf32>
    %53 = arith.mulf %48, %52 : vector<2x32xf32>
    %54 = vector.extract_strided_slice %31 {offsets = [14, 0], sizes = [2, 128], strides = [1, 1]} : vector<16x128xf32> to vector<2x128xf32>
    %cst_25 = arith.constant dense<0.000000e+00> : vector<2x128xf32>
    %55 = tpu.matmul %32, %17, %cst_25 {dimension_numbers = #tpu.dot_dimension_numbers<[1], [0], [0], [1], [0, 0, 1, 1], [], []>} : vector<2x32xf32>, vector<32x128xf32>, vector<2x128xf32> -> vector<2x128xf32>
    %56 = arith.addf %54, %55 : vector<2x128xf32>
    %57 = arith.negf %56 : vector<2x128xf32>
    %58 = math.exp %57 : vector<2x128xf32>
    %cst_26 = arith.constant 1.000000e+00 : f32
    %59 = vector.broadcast %cst_26 : f32 to vector<2x128xf32>
    %60 = arith.addf %59, %58 : vector<2x128xf32>
    %61 = arith.divf %59, %60 : vector<2x128xf32>
    %62 = math.tanh %56 : vector<2x128xf32>
    %63 = vector.shape_cast %13 : vector<1x128xi1> to vector<1x128xi1>
    %64 = vector.broadcast %63 : vector<1x128xi1> to vector<2x128xi1>
    %65 = arith.select %64, %62, %61 : vector<2x128xi1>, vector<2x128xf32>
    %66 = vector.extract_strided_slice %65 {offsets = [0, 0], sizes = [2, 32], strides = [1, 1]} : vector<2x128xf32> to vector<2x32xf32>
    %67 = vector.extract_strided_slice %65 {offsets = [0, 32], sizes = [2, 32], strides = [1, 1]} : vector<2x128xf32> to vector<2x32xf32>
    %68 = vector.extract_strided_slice %65 {offsets = [0, 64], sizes = [2, 32], strides = [1, 1]} : vector<2x128xf32> to vector<2x32xf32>
    %69 = vector.extract_strided_slice %65 {offsets = [0, 96], sizes = [2, 32], strides = [1, 1]} : vector<2x128xf32> to vector<2x32xf32>
    %70 = arith.mulf %67, %32 : vector<2x32xf32>
    %71 = arith.mulf %66, %68 : vector<2x32xf32>
    %72 = arith.addf %70, %71 : vector<2x32xf32>
    %73 = math.tanh %72 : vector<2x32xf32>
    %74 = arith.mulf %69, %73 : vector<2x32xf32>
    %c0_27 = arith.constant 0 : index
    %c0_28 = arith.constant 0 : index
    %75 = vector.load %arg11[%c0_27, %c0_28] : memref<16x64xf32, #tpu.memory_space<vmem>>, vector<2x32xf32>
    tpu.vector_store %arg11[%c0_27, %c0_28], %53 {strides = array<i32>} : memref<16x64xf32, #tpu.memory_space<vmem>>, vector<2x32xf32>,
    %c14 = arith.constant 14 : index
    %c32 = arith.constant 32 : index
    %76 = vector.load %arg11[%c14, %c32] : memref<16x64xf32, #tpu.memory_space<vmem>>, vector<2x32xf32>
    tpu.vector_store %arg11[%c14, %c32], %74 {strides = array<i32>} : memref<16x64xf32, #tpu.memory_space<vmem>>, vector<2x32xf32>,
    %77 = vector.extract_strided_slice %24 {offsets = [2, 0], sizes = [2, 128], strides = [1, 1]} : vector<16x128xf32> to vector<2x128xf32>
    %cst_29 = arith.constant dense<0.000000e+00> : vector<2x128xf32>
    %78 = tpu.matmul %53, %15, %cst_29 {dimension_numbers = #tpu.dot_dimension_numbers<[1], [0], [0], [1], [0, 0, 1, 1], [], []>} : vector<2x32xf32>, vector<32x128xf32>, vector<2x128xf32> -> vector<2x128xf32>
    %79 = arith.addf %77, %78 : vector<2x128xf32>
    %80 = arith.negf %79 : vector<2x128xf32>
    %81 = math.exp %80 : vector<2x128xf32>
    %cst_30 = arith.constant 1.000000e+00 : f32
    %82 = vector.broadcast %cst_30 : f32 to vector<2x128xf32>
    %83 = arith.addf %82, %81 : vector<2x128xf32>
    %84 = arith.divf %82, %83 : vector<2x128xf32>
    %85 = math.tanh %79 : vector<2x128xf32>
    %86 = vector.shape_cast %13 : vector<1x128xi1> to vector<1x128xi1>
    %87 = vector.broadcast %86 : vector<1x128xi1> to vector<2x128xi1>
    %88 = arith.select %87, %85, %84 : vector<2x128xi1>, vector<2x128xf32>
    %89 = vector.extract_strided_slice %88 {offsets = [0, 0], sizes = [2, 32], strides = [1, 1]} : vector<2x128xf32> to vector<2x32xf32>
    %90 = vector.extract_strided_slice %88 {offsets = [0, 32], sizes = [2, 32], strides = [1, 1]} : vector<2x128xf32> to vector<2x32xf32>
    %91 = vector.extract_strided_slice %88 {offsets = [0, 64], sizes = [2, 32], strides = [1, 1]} : vector<2x128xf32> to vector<2x32xf32>
    %92 = vector.extract_strided_slice %88 {offsets = [0, 96], sizes = [2, 32], strides = [1, 1]} : vector<2x128xf32> to vector<2x32xf32>
    %93 = arith.mulf %90, %51 : vector<2x32xf32>
    %94 = arith.mulf %89, %91 : vector<2x32xf32>
    %95 = arith.addf %93, %94 : vector<2x32xf32>
    %96 = math.tanh %95 : vector<2x32xf32>
    %97 = arith.mulf %92, %96 : vector<2x32xf32>
    %98 = vector.extract_strided_slice %31 {offsets = [12, 0], sizes = [2, 128], strides = [1, 1]} : vector<16x128xf32> to vector<2x128xf32>
    %cst_31 = arith.constant dense<0.000000e+00> : vector<2x128xf32>
    %99 = tpu.matmul %74, %17, %cst_31 {dimension_numbers = #tpu.dot_dimension_numbers<[1], [0], [0], [1], [0, 0, 1, 1], [], []>} : vector<2x32xf32>, vector<32x128xf32>, vector<2x128xf32> -> vector<2x128xf32>
    %100 = arith.addf %98, %99 : vector<2x128xf32>
    %101 = arith.negf %100 : vector<2x128xf32>
    %102 = math.exp %101 : vector<2x128xf32>
    %cst_32 = arith.constant 1.000000e+00 : f32
    %103 = vector.broadcast %cst_32 : f32 to vector<2x128xf32>
    %104 = arith.addf %103, %102 : vector<2x128xf32>
    %105 = arith.divf %103, %104 : vector<2x128xf32>
    %106 = math.tanh %100 : vector<2x128xf32>
    %107 = vector.shape_cast %13 : vector<1x128xi1> to vector<1x128xi1>
    %108 = vector.broadcast %107 : vector<1x128xi1> to vector<2x128xi1>
    %109 = arith.select %108, %106, %105 : vector<2x128xi1>, vector<2x128xf32>
    %110 = vector.extract_strided_slice %109 {offsets = [0, 0], sizes = [2, 32], strides = [1, 1]} : vector<2x128xf32> to vector<2x32xf32>
    %111 = vector.extract_strided_slice %109 {offsets = [0, 32], sizes = [2, 32], strides = [1, 1]} : vector<2x128xf32> to vector<2x32xf32>
    %112 = vector.extract_strided_slice %109 {offsets = [0, 64], sizes = [2, 32], strides = [1, 1]} : vector<2x128xf32> to vector<2x32xf32>
    %113 = vector.extract_strided_slice %109 {offsets = [0, 96], sizes = [2, 32], strides = [1, 1]} : vector<2x128xf32> to vector<2x32xf32>
    %114 = arith.mulf %111, %72 : vector<2x32xf32>
    %115 = arith.mulf %110, %112 : vector<2x32xf32>
    %116 = arith.addf %114, %115 : vector<2x32xf32>
    %117 = math.tanh %116 : vector<2x32xf32>
    %118 = arith.mulf %113, %117 : vector<2x32xf32>
    %c2 = arith.constant 2 : index
    %c0_33 = arith.constant 0 : index
    %119 = vector.load %arg11[%c2, %c0_33] : memref<16x64xf32, #tpu.memory_space<vmem>>, vector<2x32xf32>
    tpu.vector_store %arg11[%c2, %c0_33], %97 {strides = array<i32>} : memref<16x64xf32, #tpu.memory_space<vmem>>, vector<2x32xf32>,
    %c12 = arith.constant 12 : index
    %c32_34 = arith.constant 32 : index
    %120 = vector.load %arg11[%c12, %c32_34] : memref<16x64xf32, #tpu.memory_space<vmem>>, vector<2x32xf32>
    tpu.vector_store %arg11[%c12, %c32_34], %118 {strides = array<i32>} : memref<16x64xf32, #tpu.memory_space<vmem>>, vector<2x32xf32>,
    %121 = vector.extract_strided_slice %24 {offsets = [4, 0], sizes = [2, 128], strides = [1, 1]} : vector<16x128xf32> to vector<2x128xf32>
    %cst_35 = arith.constant dense<0.000000e+00> : vector<2x128xf32>
    %122 = tpu.matmul %97, %15, %cst_35 {dimension_numbers = #tpu.dot_dimension_numbers<[1], [0], [0], [1], [0, 0, 1, 1], [], []>} : vector<2x32xf32>, vector<32x128xf32>, vector<2x128xf32> -> vector<2x128xf32>
    %123 = arith.addf %121, %122 : vector<2x128xf32>
    %124 = arith.negf %123 : vector<2x128xf32>
    %125 = math.exp %124 : vector<2x128xf32>
    %cst_36 = arith.constant 1.000000e+00 : f32
    %126 = vector.broadcast %cst_36 : f32 to vector<2x128xf32>
    %127 = arith.addf %126, %125 : vector<2x128xf32>
    %128 = arith.divf %126, %127 : vector<2x128xf32>
    %129 = math.tanh %123 : vector<2x128xf32>
    %130 = vector.shape_cast %13 : vector<1x128xi1> to vector<1x128xi1>
    %131 = vector.broadcast %130 : vector<1x128xi1> to vector<2x128xi1>
    %132 = arith.select %131, %129, %128 : vector<2x128xi1>, vector<2x128xf32>
    %133 = vector.extract_strided_slice %132 {offsets = [0, 0], sizes = [2, 32], strides = [1, 1]} : vector<2x128xf32> to vector<2x32xf32>
    %134 = vector.extract_strided_slice %132 {offsets = [0, 32], sizes = [2, 32], strides = [1, 1]} : vector<2x128xf32> to vector<2x32xf32>
    %135 = vector.extract_strided_slice %132 {offsets = [0, 64], sizes = [2, 32], strides = [1, 1]} : vector<2x128xf32> to vector<2x32xf32>
    %136 = vector.extract_strided_slice %132 {offsets = [0, 96], sizes = [2, 32], strides = [1, 1]} : vector<2x128xf32> to vector<2x32xf32>
    %137 = arith.mulf %134, %95 : vector<2x32xf32>
    %138 = arith.mulf %133, %135 : vector<2x32xf32>
    %139 = arith.addf %137, %138 : vector<2x32xf32>
    %140 = math.tanh %139 : vector<2x32xf32>
    %141 = arith.mulf %136, %140 : vector<2x32xf32>
    %142 = vector.extract_strided_slice %31 {offsets = [10, 0], sizes = [2, 128], strides = [1, 1]} : vector<16x128xf32> to vector<2x128xf32>
    %cst_37 = arith.constant dense<0.000000e+00> : vector<2x128xf32>
    %143 = tpu.matmul %118, %17, %cst_37 {dimension_numbers = #tpu.dot_dimension_numbers<[1], [0], [0], [1], [0, 0, 1, 1], [], []>} : vector<2x32xf32>, vector<32x128xf32>, vector<2x128xf32> -> vector<2x128xf32>
    %144 = arith.addf %142, %143 : vector<2x128xf32>
    %145 = arith.negf %144 : vector<2x128xf32>
    %146 = math.exp %145 : vector<2x128xf32>
    %cst_38 = arith.constant 1.000000e+00 : f32
    %147 = vector.broadcast %cst_38 : f32 to vector<2x128xf32>
    %148 = arith.addf %147, %146 : vector<2x128xf32>
    %149 = arith.divf %147, %148 : vector<2x128xf32>
    %150 = math.tanh %144 : vector<2x128xf32>
    %151 = vector.shape_cast %13 : vector<1x128xi1> to vector<1x128xi1>
    %152 = vector.broadcast %151 : vector<1x128xi1> to vector<2x128xi1>
    %153 = arith.select %152, %150, %149 : vector<2x128xi1>, vector<2x128xf32>
    %154 = vector.extract_strided_slice %153 {offsets = [0, 0], sizes = [2, 32], strides = [1, 1]} : vector<2x128xf32> to vector<2x32xf32>
    %155 = vector.extract_strided_slice %153 {offsets = [0, 32], sizes = [2, 32], strides = [1, 1]} : vector<2x128xf32> to vector<2x32xf32>
    %156 = vector.extract_strided_slice %153 {offsets = [0, 64], sizes = [2, 32], strides = [1, 1]} : vector<2x128xf32> to vector<2x32xf32>
    %157 = vector.extract_strided_slice %153 {offsets = [0, 96], sizes = [2, 32], strides = [1, 1]} : vector<2x128xf32> to vector<2x32xf32>
    %158 = arith.mulf %155, %116 : vector<2x32xf32>
    %159 = arith.mulf %154, %156 : vector<2x32xf32>
    %160 = arith.addf %158, %159 : vector<2x32xf32>
    %161 = math.tanh %160 : vector<2x32xf32>
    %162 = arith.mulf %157, %161 : vector<2x32xf32>
    %c4 = arith.constant 4 : index
    %c0_39 = arith.constant 0 : index
    %163 = vector.load %arg11[%c4, %c0_39] : memref<16x64xf32, #tpu.memory_space<vmem>>, vector<2x32xf32>
    tpu.vector_store %arg11[%c4, %c0_39], %141 {strides = array<i32>} : memref<16x64xf32, #tpu.memory_space<vmem>>, vector<2x32xf32>,
    %c10 = arith.constant 10 : index
    %c32_40 = arith.constant 32 : index
    %164 = vector.load %arg11[%c10, %c32_40] : memref<16x64xf32, #tpu.memory_space<vmem>>, vector<2x32xf32>
    tpu.vector_store %arg11[%c10, %c32_40], %162 {strides = array<i32>} : memref<16x64xf32, #tpu.memory_space<vmem>>, vector<2x32xf32>,
    %165 = vector.extract_strided_slice %24 {offsets = [6, 0], sizes = [2, 128], strides = [1, 1]} : vector<16x128xf32> to vector<2x128xf32>
    %cst_41 = arith.constant dense<0.000000e+00> : vector<2x128xf32>
    %166 = tpu.matmul %141, %15, %cst_41 {dimension_numbers = #tpu.dot_dimension_numbers<[1], [0], [0], [1], [0, 0, 1, 1], [], []>} : vector<2x32xf32>, vector<32x128xf32>, vector<2x128xf32> -> vector<2x128xf32>
    %167 = arith.addf %165, %166 : vector<2x128xf32>
    %168 = arith.negf %167 : vector<2x128xf32>
    %169 = math.exp %168 : vector<2x128xf32>
    %cst_42 = arith.constant 1.000000e+00 : f32
    %170 = vector.broadcast %cst_42 : f32 to vector<2x128xf32>
    %171 = arith.addf %170, %169 : vector<2x128xf32>
    %172 = arith.divf %170, %171 : vector<2x128xf32>
    %173 = math.tanh %167 : vector<2x128xf32>
    %174 = vector.shape_cast %13 : vector<1x128xi1> to vector<1x128xi1>
    %175 = vector.broadcast %174 : vector<1x128xi1> to vector<2x128xi1>
    %176 = arith.select %175, %173, %172 : vector<2x128xi1>, vector<2x128xf32>
    %177 = vector.extract_strided_slice %176 {offsets = [0, 0], sizes = [2, 32], strides = [1, 1]} : vector<2x128xf32> to vector<2x32xf32>
    %178 = vector.extract_strided_slice %176 {offsets = [0, 32], sizes = [2, 32], strides = [1, 1]} : vector<2x128xf32> to vector<2x32xf32>
    %179 = vector.extract_strided_slice %176 {offsets = [0, 64], sizes = [2, 32], strides = [1, 1]} : vector<2x128xf32> to vector<2x32xf32>
    %180 = vector.extract_strided_slice %176 {offsets = [0, 96], sizes = [2, 32], strides = [1, 1]} : vector<2x128xf32> to vector<2x32xf32>
    %181 = arith.mulf %178, %139 : vector<2x32xf32>
    %182 = arith.mulf %177, %179 : vector<2x32xf32>
    %183 = arith.addf %181, %182 : vector<2x32xf32>
    %184 = math.tanh %183 : vector<2x32xf32>
    %185 = arith.mulf %180, %184 : vector<2x32xf32>
    %186 = vector.extract_strided_slice %31 {offsets = [8, 0], sizes = [2, 128], strides = [1, 1]} : vector<16x128xf32> to vector<2x128xf32>
    %cst_43 = arith.constant dense<0.000000e+00> : vector<2x128xf32>
    %187 = tpu.matmul %162, %17, %cst_43 {dimension_numbers = #tpu.dot_dimension_numbers<[1], [0], [0], [1], [0, 0, 1, 1], [], []>} : vector<2x32xf32>, vector<32x128xf32>, vector<2x128xf32> -> vector<2x128xf32>
    %188 = arith.addf %186, %187 : vector<2x128xf32>
    %189 = arith.negf %188 : vector<2x128xf32>
    %190 = math.exp %189 : vector<2x128xf32>
    %cst_44 = arith.constant 1.000000e+00 : f32
    %191 = vector.broadcast %cst_44 : f32 to vector<2x128xf32>
    %192 = arith.addf %191, %190 : vector<2x128xf32>
    %193 = arith.divf %191, %192 : vector<2x128xf32>
    %194 = math.tanh %188 : vector<2x128xf32>
    %195 = vector.shape_cast %13 : vector<1x128xi1> to vector<1x128xi1>
    %196 = vector.broadcast %195 : vector<1x128xi1> to vector<2x128xi1>
    %197 = arith.select %196, %194, %193 : vector<2x128xi1>, vector<2x128xf32>
    %198 = vector.extract_strided_slice %197 {offsets = [0, 0], sizes = [2, 32], strides = [1, 1]} : vector<2x128xf32> to vector<2x32xf32>
    %199 = vector.extract_strided_slice %197 {offsets = [0, 32], sizes = [2, 32], strides = [1, 1]} : vector<2x128xf32> to vector<2x32xf32>
    %200 = vector.extract_strided_slice %197 {offsets = [0, 64], sizes = [2, 32], strides = [1, 1]} : vector<2x128xf32> to vector<2x32xf32>
    %201 = vector.extract_strided_slice %197 {offsets = [0, 96], sizes = [2, 32], strides = [1, 1]} : vector<2x128xf32> to vector<2x32xf32>
    %202 = arith.mulf %199, %160 : vector<2x32xf32>
    %203 = arith.mulf %198, %200 : vector<2x32xf32>
    %204 = arith.addf %202, %203 : vector<2x32xf32>
    %205 = math.tanh %204 : vector<2x32xf32>
    %206 = arith.mulf %201, %205 : vector<2x32xf32>
    %c6 = arith.constant 6 : index
    %c0_45 = arith.constant 0 : index
    %207 = vector.load %arg11[%c6, %c0_45] : memref<16x64xf32, #tpu.memory_space<vmem>>, vector<2x32xf32>
    tpu.vector_store %arg11[%c6, %c0_45], %185 {strides = array<i32>} : memref<16x64xf32, #tpu.memory_space<vmem>>, vector<2x32xf32>,
    %c8 = arith.constant 8 : index
    %c32_46 = arith.constant 32 : index
    %208 = vector.load %arg11[%c8, %c32_46] : memref<16x64xf32, #tpu.memory_space<vmem>>, vector<2x32xf32>
    tpu.vector_store %arg11[%c8, %c32_46], %206 {strides = array<i32>} : memref<16x64xf32, #tpu.memory_space<vmem>>, vector<2x32xf32>,
    %209 = vector.extract_strided_slice %24 {offsets = [8, 0], sizes = [2, 128], strides = [1, 1]} : vector<16x128xf32> to vector<2x128xf32>
    %cst_47 = arith.constant dense<0.000000e+00> : vector<2x128xf32>
    %210 = tpu.matmul %185, %15, %cst_47 {dimension_numbers = #tpu.dot_dimension_numbers<[1], [0], [0], [1], [0, 0, 1, 1], [], []>} : vector<2x32xf32>, vector<32x128xf32>, vector<2x128xf32> -> vector<2x128xf32>
    %211 = arith.addf %209, %210 : vector<2x128xf32>
    %212 = arith.negf %211 : vector<2x128xf32>
    %213 = math.exp %212 : vector<2x128xf32>
    %cst_48 = arith.constant 1.000000e+00 : f32
    %214 = vector.broadcast %cst_48 : f32 to vector<2x128xf32>
    %215 = arith.addf %214, %213 : vector<2x128xf32>
    %216 = arith.divf %214, %215 : vector<2x128xf32>
    %217 = math.tanh %211 : vector<2x128xf32>
    %218 = vector.shape_cast %13 : vector<1x128xi1> to vector<1x128xi1>
    %219 = vector.broadcast %218 : vector<1x128xi1> to vector<2x128xi1>
    %220 = arith.select %219, %217, %216 : vector<2x128xi1>, vector<2x128xf32>
    %221 = vector.extract_strided_slice %220 {offsets = [0, 0], sizes = [2, 32], strides = [1, 1]} : vector<2x128xf32> to vector<2x32xf32>
    %222 = vector.extract_strided_slice %220 {offsets = [0, 32], sizes = [2, 32], strides = [1, 1]} : vector<2x128xf32> to vector<2x32xf32>
    %223 = vector.extract_strided_slice %220 {offsets = [0, 64], sizes = [2, 32], strides = [1, 1]} : vector<2x128xf32> to vector<2x32xf32>
    %224 = vector.extract_strided_slice %220 {offsets = [0, 96], sizes = [2, 32], strides = [1, 1]} : vector<2x128xf32> to vector<2x32xf32>
    %225 = arith.mulf %222, %183 : vector<2x32xf32>
    %226 = arith.mulf %221, %223 : vector<2x32xf32>
    %227 = arith.addf %225, %226 : vector<2x32xf32>
    %228 = math.tanh %227 : vector<2x32xf32>
    %229 = arith.mulf %224, %228 : vector<2x32xf32>
    %230 = vector.extract_strided_slice %31 {offsets = [6, 0], sizes = [2, 128], strides = [1, 1]} : vector<16x128xf32> to vector<2x128xf32>
    %cst_49 = arith.constant dense<0.000000e+00> : vector<2x128xf32>
    %231 = tpu.matmul %206, %17, %cst_49 {dimension_numbers = #tpu.dot_dimension_numbers<[1], [0], [0], [1], [0, 0, 1, 1], [], []>} : vector<2x32xf32>, vector<32x128xf32>, vector<2x128xf32> -> vector<2x128xf32>
    %232 = arith.addf %230, %231 : vector<2x128xf32>
    %233 = arith.negf %232 : vector<2x128xf32>
    %234 = math.exp %233 : vector<2x128xf32>
    %cst_50 = arith.constant 1.000000e+00 : f32
    %235 = vector.broadcast %cst_50 : f32 to vector<2x128xf32>
    %236 = arith.addf %235, %234 : vector<2x128xf32>
    %237 = arith.divf %235, %236 : vector<2x128xf32>
    %238 = math.tanh %232 : vector<2x128xf32>
    %239 = vector.shape_cast %13 : vector<1x128xi1> to vector<1x128xi1>
    %240 = vector.broadcast %239 : vector<1x128xi1> to vector<2x128xi1>
    %241 = arith.select %240, %238, %237 : vector<2x128xi1>, vector<2x128xf32>
    %242 = vector.extract_strided_slice %241 {offsets = [0, 0], sizes = [2, 32], strides = [1, 1]} : vector<2x128xf32> to vector<2x32xf32>
    %243 = vector.extract_strided_slice %241 {offsets = [0, 32], sizes = [2, 32], strides = [1, 1]} : vector<2x128xf32> to vector<2x32xf32>
    %244 = vector.extract_strided_slice %241 {offsets = [0, 64], sizes = [2, 32], strides = [1, 1]} : vector<2x128xf32> to vector<2x32xf32>
    %245 = vector.extract_strided_slice %241 {offsets = [0, 96], sizes = [2, 32], strides = [1, 1]} : vector<2x128xf32> to vector<2x32xf32>
    %246 = arith.mulf %243, %204 : vector<2x32xf32>
    %247 = arith.mulf %242, %244 : vector<2x32xf32>
    %248 = arith.addf %246, %247 : vector<2x32xf32>
    %249 = math.tanh %248 : vector<2x32xf32>
    %250 = arith.mulf %245, %249 : vector<2x32xf32>
    %c8_51 = arith.constant 8 : index
    %c0_52 = arith.constant 0 : index
    %251 = vector.load %arg11[%c8_51, %c0_52] : memref<16x64xf32, #tpu.memory_space<vmem>>, vector<2x32xf32>
    tpu.vector_store %arg11[%c8_51, %c0_52], %229 {strides = array<i32>} : memref<16x64xf32, #tpu.memory_space<vmem>>, vector<2x32xf32>,
    %c6_53 = arith.constant 6 : index
    %c32_54 = arith.constant 32 : index
    %252 = vector.load %arg11[%c6_53, %c32_54] : memref<16x64xf32, #tpu.memory_space<vmem>>, vector<2x32xf32>
    tpu.vector_store %arg11[%c6_53, %c32_54], %250 {strides = array<i32>} : memref<16x64xf32, #tpu.memory_space<vmem>>, vector<2x32xf32>,
    %253 = vector.extract_strided_slice %24 {offsets = [10, 0], sizes = [2, 128], strides = [1, 1]} : vector<16x128xf32> to vector<2x128xf32>
    %cst_55 = arith.constant dense<0.000000e+00> : vector<2x128xf32>
    %254 = tpu.matmul %229, %15, %cst_55 {dimension_numbers = #tpu.dot_dimension_numbers<[1], [0], [0], [1], [0, 0, 1, 1], [], []>} : vector<2x32xf32>, vector<32x128xf32>, vector<2x128xf32> -> vector<2x128xf32>
    %255 = arith.addf %253, %254 : vector<2x128xf32>
    %256 = arith.negf %255 : vector<2x128xf32>
    %257 = math.exp %256 : vector<2x128xf32>
    %cst_56 = arith.constant 1.000000e+00 : f32
    %258 = vector.broadcast %cst_56 : f32 to vector<2x128xf32>
    %259 = arith.addf %258, %257 : vector<2x128xf32>
    %260 = arith.divf %258, %259 : vector<2x128xf32>
    %261 = math.tanh %255 : vector<2x128xf32>
    %262 = vector.shape_cast %13 : vector<1x128xi1> to vector<1x128xi1>
    %263 = vector.broadcast %262 : vector<1x128xi1> to vector<2x128xi1>
    %264 = arith.select %263, %261, %260 : vector<2x128xi1>, vector<2x128xf32>
    %265 = vector.extract_strided_slice %264 {offsets = [0, 0], sizes = [2, 32], strides = [1, 1]} : vector<2x128xf32> to vector<2x32xf32>
    %266 = vector.extract_strided_slice %264 {offsets = [0, 32], sizes = [2, 32], strides = [1, 1]} : vector<2x128xf32> to vector<2x32xf32>
    %267 = vector.extract_strided_slice %264 {offsets = [0, 64], sizes = [2, 32], strides = [1, 1]} : vector<2x128xf32> to vector<2x32xf32>
    %268 = vector.extract_strided_slice %264 {offsets = [0, 96], sizes = [2, 32], strides = [1, 1]} : vector<2x128xf32> to vector<2x32xf32>
    %269 = arith.mulf %266, %227 : vector<2x32xf32>
    %270 = arith.mulf %265, %267 : vector<2x32xf32>
    %271 = arith.addf %269, %270 : vector<2x32xf32>
    %272 = math.tanh %271 : vector<2x32xf32>
    %273 = arith.mulf %268, %272 : vector<2x32xf32>
    %274 = vector.extract_strided_slice %31 {offsets = [4, 0], sizes = [2, 128], strides = [1, 1]} : vector<16x128xf32> to vector<2x128xf32>
    %cst_57 = arith.constant dense<0.000000e+00> : vector<2x128xf32>
    %275 = tpu.matmul %250, %17, %cst_57 {dimension_numbers = #tpu.dot_dimension_numbers<[1], [0], [0], [1], [0, 0, 1, 1], [], []>} : vector<2x32xf32>, vector<32x128xf32>, vector<2x128xf32> -> vector<2x128xf32>
    %276 = arith.addf %274, %275 : vector<2x128xf32>
    %277 = arith.negf %276 : vector<2x128xf32>
    %278 = math.exp %277 : vector<2x128xf32>
    %cst_58 = arith.constant 1.000000e+00 : f32
    %279 = vector.broadcast %cst_58 : f32 to vector<2x128xf32>
    %280 = arith.addf %279, %278 : vector<2x128xf32>
    %281 = arith.divf %279, %280 : vector<2x128xf32>
    %282 = math.tanh %276 : vector<2x128xf32>
    %283 = vector.shape_cast %13 : vector<1x128xi1> to vector<1x128xi1>
    %284 = vector.broadcast %283 : vector<1x128xi1> to vector<2x128xi1>
    %285 = arith.select %284, %282, %281 : vector<2x128xi1>, vector<2x128xf32>
    %286 = vector.extract_strided_slice %285 {offsets = [0, 0], sizes = [2, 32], strides = [1, 1]} : vector<2x128xf32> to vector<2x32xf32>
    %287 = vector.extract_strided_slice %285 {offsets = [0, 32], sizes = [2, 32], strides = [1, 1]} : vector<2x128xf32> to vector<2x32xf32>
    %288 = vector.extract_strided_slice %285 {offsets = [0, 64], sizes = [2, 32], strides = [1, 1]} : vector<2x128xf32> to vector<2x32xf32>
    %289 = vector.extract_strided_slice %285 {offsets = [0, 96], sizes = [2, 32], strides = [1, 1]} : vector<2x128xf32> to vector<2x32xf32>
    %290 = arith.mulf %287, %248 : vector<2x32xf32>
    %291 = arith.mulf %286, %288 : vector<2x32xf32>
    %292 = arith.addf %290, %291 : vector<2x32xf32>
    %293 = math.tanh %292 : vector<2x32xf32>
    %294 = arith.mulf %289, %293 : vector<2x32xf32>
    %c10_59 = arith.constant 10 : index
    %c0_60 = arith.constant 0 : index
    %295 = vector.load %arg11[%c10_59, %c0_60] : memref<16x64xf32, #tpu.memory_space<vmem>>, vector<2x32xf32>
    tpu.vector_store %arg11[%c10_59, %c0_60], %273 {strides = array<i32>} : memref<16x64xf32, #tpu.memory_space<vmem>>, vector<2x32xf32>,
    %c4_61 = arith.constant 4 : index
    %c32_62 = arith.constant 32 : index
    %296 = vector.load %arg11[%c4_61, %c32_62] : memref<16x64xf32, #tpu.memory_space<vmem>>, vector<2x32xf32>
    tpu.vector_store %arg11[%c4_61, %c32_62], %294 {strides = array<i32>} : memref<16x64xf32, #tpu.memory_space<vmem>>, vector<2x32xf32>,
    %297 = vector.extract_strided_slice %24 {offsets = [12, 0], sizes = [2, 128], strides = [1, 1]} : vector<16x128xf32> to vector<2x128xf32>
    %cst_63 = arith.constant dense<0.000000e+00> : vector<2x128xf32>
    %298 = tpu.matmul %273, %15, %cst_63 {dimension_numbers = #tpu.dot_dimension_numbers<[1], [0], [0], [1], [0, 0, 1, 1], [], []>} : vector<2x32xf32>, vector<32x128xf32>, vector<2x128xf32> -> vector<2x128xf32>
    %299 = arith.addf %297, %298 : vector<2x128xf32>
    %300 = arith.negf %299 : vector<2x128xf32>
    %301 = math.exp %300 : vector<2x128xf32>
    %cst_64 = arith.constant 1.000000e+00 : f32
    %302 = vector.broadcast %cst_64 : f32 to vector<2x128xf32>
    %303 = arith.addf %302, %301 : vector<2x128xf32>
    %304 = arith.divf %302, %303 : vector<2x128xf32>
    %305 = math.tanh %299 : vector<2x128xf32>
    %306 = vector.shape_cast %13 : vector<1x128xi1> to vector<1x128xi1>
    %307 = vector.broadcast %306 : vector<1x128xi1> to vector<2x128xi1>
    %308 = arith.select %307, %305, %304 : vector<2x128xi1>, vector<2x128xf32>
    %309 = vector.extract_strided_slice %308 {offsets = [0, 0], sizes = [2, 32], strides = [1, 1]} : vector<2x128xf32> to vector<2x32xf32>
    %310 = vector.extract_strided_slice %308 {offsets = [0, 32], sizes = [2, 32], strides = [1, 1]} : vector<2x128xf32> to vector<2x32xf32>
    %311 = vector.extract_strided_slice %308 {offsets = [0, 64], sizes = [2, 32], strides = [1, 1]} : vector<2x128xf32> to vector<2x32xf32>
    %312 = vector.extract_strided_slice %308 {offsets = [0, 96], sizes = [2, 32], strides = [1, 1]} : vector<2x128xf32> to vector<2x32xf32>
    %313 = arith.mulf %310, %271 : vector<2x32xf32>
    %314 = arith.mulf %309, %311 : vector<2x32xf32>
    %315 = arith.addf %313, %314 : vector<2x32xf32>
    %316 = math.tanh %315 : vector<2x32xf32>
    %317 = arith.mulf %312, %316 : vector<2x32xf32>
    %318 = vector.extract_strided_slice %31 {offsets = [2, 0], sizes = [2, 128], strides = [1, 1]} : vector<16x128xf32> to vector<2x128xf32>
    %cst_65 = arith.constant dense<0.000000e+00> : vector<2x128xf32>
    %319 = tpu.matmul %294, %17, %cst_65 {dimension_numbers = #tpu.dot_dimension_numbers<[1], [0], [0], [1], [0, 0, 1, 1], [], []>} : vector<2x32xf32>, vector<32x128xf32>, vector<2x128xf32> -> vector<2x128xf32>
    %320 = arith.addf %318, %319 : vector<2x128xf32>
    %321 = arith.negf %320 : vector<2x128xf32>
    %322 = math.exp %321 : vector<2x128xf32>
    %cst_66 = arith.constant 1.000000e+00 : f32
    %323 = vector.broadcast %cst_66 : f32 to vector<2x128xf32>
    %324 = arith.addf %323, %322 : vector<2x128xf32>
    %325 = arith.divf %323, %324 : vector<2x128xf32>
    %326 = math.tanh %320 : vector<2x128xf32>
    %327 = vector.shape_cast %13 : vector<1x128xi1> to vector<1x128xi1>
    %328 = vector.broadcast %327 : vector<1x128xi1> to vector<2x128xi1>
    %329 = arith.select %328, %326, %325 : vector<2x128xi1>, vector<2x128xf32>
    %330 = vector.extract_strided_slice %329 {offsets = [0, 0], sizes = [2, 32], strides = [1, 1]} : vector<2x128xf32> to vector<2x32xf32>
    %331 = vector.extract_strided_slice %329 {offsets = [0, 32], sizes = [2, 32], strides = [1, 1]} : vector<2x128xf32> to vector<2x32xf32>
    %332 = vector.extract_strided_slice %329 {offsets = [0, 64], sizes = [2, 32], strides = [1, 1]} : vector<2x128xf32> to vector<2x32xf32>
    %333 = vector.extract_strided_slice %329 {offsets = [0, 96], sizes = [2, 32], strides = [1, 1]} : vector<2x128xf32> to vector<2x32xf32>
    %334 = arith.mulf %331, %292 : vector<2x32xf32>
    %335 = arith.mulf %330, %332 : vector<2x32xf32>
    %336 = arith.addf %334, %335 : vector<2x32xf32>
    %337 = math.tanh %336 : vector<2x32xf32>
    %338 = arith.mulf %333, %337 : vector<2x32xf32>
    %c12_67 = arith.constant 12 : index
    %c0_68 = arith.constant 0 : index
    %339 = vector.load %arg11[%c12_67, %c0_68] : memref<16x64xf32, #tpu.memory_space<vmem>>, vector<2x32xf32>
    tpu.vector_store %arg11[%c12_67, %c0_68], %317 {strides = array<i32>} : memref<16x64xf32, #tpu.memory_space<vmem>>, vector<2x32xf32>,
    %c2_69 = arith.constant 2 : index
    %c32_70 = arith.constant 32 : index
    %340 = vector.load %arg11[%c2_69, %c32_70] : memref<16x64xf32, #tpu.memory_space<vmem>>, vector<2x32xf32>
    tpu.vector_store %arg11[%c2_69, %c32_70], %338 {strides = array<i32>} : memref<16x64xf32, #tpu.memory_space<vmem>>, vector<2x32xf32>,
    %341 = vector.extract_strided_slice %24 {offsets = [14, 0], sizes = [2, 128], strides = [1, 1]} : vector<16x128xf32> to vector<2x128xf32>
    %cst_71 = arith.constant dense<0.000000e+00> : vector<2x128xf32>
    %342 = tpu.matmul %317, %15, %cst_71 {dimension_numbers = #tpu.dot_dimension_numbers<[1], [0], [0], [1], [0, 0, 1, 1], [], []>} : vector<2x32xf32>, vector<32x128xf32>, vector<2x128xf32> -> vector<2x128xf32>
    %343 = arith.addf %341, %342 : vector<2x128xf32>
    %344 = arith.negf %343 : vector<2x128xf32>
    %345 = math.exp %344 : vector<2x128xf32>
    %cst_72 = arith.constant 1.000000e+00 : f32
    %346 = vector.broadcast %cst_72 : f32 to vector<2x128xf32>
    %347 = arith.addf %346, %345 : vector<2x128xf32>
    %348 = arith.divf %346, %347 : vector<2x128xf32>
    %349 = math.tanh %343 : vector<2x128xf32>
    %350 = vector.shape_cast %13 : vector<1x128xi1> to vector<1x128xi1>
    %351 = vector.broadcast %350 : vector<1x128xi1> to vector<2x128xi1>
    %352 = arith.select %351, %349, %348 : vector<2x128xi1>, vector<2x128xf32>
    %353 = vector.extract_strided_slice %352 {offsets = [0, 0], sizes = [2, 32], strides = [1, 1]} : vector<2x128xf32> to vector<2x32xf32>
    %354 = vector.extract_strided_slice %352 {offsets = [0, 32], sizes = [2, 32], strides = [1, 1]} : vector<2x128xf32> to vector<2x32xf32>
    %355 = vector.extract_strided_slice %352 {offsets = [0, 64], sizes = [2, 32], strides = [1, 1]} : vector<2x128xf32> to vector<2x32xf32>
    %356 = vector.extract_strided_slice %352 {offsets = [0, 96], sizes = [2, 32], strides = [1, 1]} : vector<2x128xf32> to vector<2x32xf32>
    %357 = arith.mulf %354, %315 : vector<2x32xf32>
    %358 = arith.mulf %353, %355 : vector<2x32xf32>
    %359 = arith.addf %357, %358 : vector<2x32xf32>
    %360 = math.tanh %359 : vector<2x32xf32>
    %361 = arith.mulf %356, %360 : vector<2x32xf32>
    %362 = vector.extract_strided_slice %31 {offsets = [0, 0], sizes = [2, 128], strides = [1, 1]} : vector<16x128xf32> to vector<2x128xf32>
    %cst_73 = arith.constant dense<0.000000e+00> : vector<2x128xf32>
    %363 = tpu.matmul %338, %17, %cst_73 {dimension_numbers = #tpu.dot_dimension_numbers<[1], [0], [0], [1], [0, 0, 1, 1], [], []>} : vector<2x32xf32>, vector<32x128xf32>, vector<2x128xf32> -> vector<2x128xf32>
    %364 = arith.addf %362, %363 : vector<2x128xf32>
    %365 = arith.negf %364 : vector<2x128xf32>
    %366 = math.exp %365 : vector<2x128xf32>
    %cst_74 = arith.constant 1.000000e+00 : f32
    %367 = vector.broadcast %cst_74 : f32 to vector<2x128xf32>
    %368 = arith.addf %367, %366 : vector<2x128xf32>
    %369 = arith.divf %367, %368 : vector<2x128xf32>
    %370 = math.tanh %364 : vector<2x128xf32>
    %371 = vector.shape_cast %13 : vector<1x128xi1> to vector<1x128xi1>
    %372 = vector.broadcast %371 : vector<1x128xi1> to vector<2x128xi1>
    %373 = arith.select %372, %370, %369 : vector<2x128xi1>, vector<2x128xf32>
    %374 = vector.extract_strided_slice %373 {offsets = [0, 0], sizes = [2, 32], strides = [1, 1]} : vector<2x128xf32> to vector<2x32xf32>
    %375 = vector.extract_strided_slice %373 {offsets = [0, 32], sizes = [2, 32], strides = [1, 1]} : vector<2x128xf32> to vector<2x32xf32>
    %376 = vector.extract_strided_slice %373 {offsets = [0, 64], sizes = [2, 32], strides = [1, 1]} : vector<2x128xf32> to vector<2x32xf32>
    %377 = vector.extract_strided_slice %373 {offsets = [0, 96], sizes = [2, 32], strides = [1, 1]} : vector<2x128xf32> to vector<2x32xf32>
    %378 = arith.mulf %375, %336 : vector<2x32xf32>
    %379 = arith.mulf %374, %376 : vector<2x32xf32>
    %380 = arith.addf %378, %379 : vector<2x32xf32>
    %381 = math.tanh %380 : vector<2x32xf32>
    %382 = arith.mulf %377, %381 : vector<2x32xf32>
    %c14_75 = arith.constant 14 : index
    %c0_76 = arith.constant 0 : index
    %383 = vector.load %arg11[%c14_75, %c0_76] : memref<16x64xf32, #tpu.memory_space<vmem>>, vector<2x32xf32>
    tpu.vector_store %arg11[%c14_75, %c0_76], %361 {strides = array<i32>} : memref<16x64xf32, #tpu.memory_space<vmem>>, vector<2x32xf32>,
    %c0_77 = arith.constant 0 : index
    %c32_78 = arith.constant 32 : index
    %384 = vector.load %arg11[%c0_77, %c32_78] : memref<16x64xf32, #tpu.memory_space<vmem>>, vector<2x32xf32>
    tpu.vector_store %arg11[%c0_77, %c32_78], %382 {strides = array<i32>} : memref<16x64xf32, #tpu.memory_space<vmem>>, vector<2x32xf32>,
    %c0_79 = arith.constant 0 : index
    %c0_80 = arith.constant 0 : index
    %385 = vector.load %arg11[%c0_79, %c0_80] : memref<16x64xf32, #tpu.memory_space<vmem>>, vector<16x64xf32>
    %c0_81 = arith.constant 0 : index
    %c0_82 = arith.constant 0 : index
    %c0_83 = arith.constant 0 : index
    %386 = vector.load %arg6[%c0_81, %c0_82, %c0_83] : memref<2x32x128xf32, #tpu.memory_space<vmem>>, vector<1x32x128xf32>
    %387 = vector.shape_cast %386 : vector<1x32x128xf32> to vector<32x128xf32>
    %c1_84 = arith.constant 1 : index
    %c0_85 = arith.constant 0 : index
    %c0_86 = arith.constant 0 : index
    %388 = vector.load %arg6[%c1_84, %c0_85, %c0_86] : memref<2x32x128xf32, #tpu.memory_space<vmem>>, vector<1x32x128xf32>
    %389 = vector.shape_cast %388 : vector<1x32x128xf32> to vector<32x128xf32>
    %c0_87 = arith.constant 0 : index
    %c0_88 = arith.constant 0 : index
    %c0_89 = arith.constant 0 : index
    %390 = vector.load %arg5[%c0_87, %c0_88, %c0_89] : memref<2x64x128xf32, #tpu.memory_space<vmem>>, vector<1x64x128xf32>
    %391 = vector.shape_cast %390 : vector<1x64x128xf32> to vector<64x128xf32>
    %cst_90 = arith.constant dense<0.000000e+00> : vector<16x128xf32>
    %392 = tpu.matmul %385, %391, %cst_90 {dimension_numbers = #tpu.dot_dimension_numbers<[1], [0], [0], [1], [0, 0, 1, 1], [], []>} : vector<16x64xf32>, vector<64x128xf32>, vector<16x128xf32> -> vector<16x128xf32>
    %c0_91 = arith.constant 0 : index
    %c0_92 = arith.constant 0 : index
    %c0_93 = arith.constant 0 : index
    %393 = vector.load %arg7[%c0_91, %c0_92, %c0_93] : memref<2x1x128xf32, #tpu.memory_space<vmem>>, vector<1x1x128xf32>
    %394 = vector.shape_cast %393 : vector<1x1x128xf32> to vector<1x128xf32>
    %395 = vector.broadcast %394 : vector<1x128xf32> to vector<16x128xf32>
    %396 = arith.addf %392, %395 : vector<16x128xf32>
    %c1_94 = arith.constant 1 : index
    %c0_95 = arith.constant 0 : index
    %c0_96 = arith.constant 0 : index
    %397 = vector.load %arg5[%c1_94, %c0_95, %c0_96] : memref<2x64x128xf32, #tpu.memory_space<vmem>>, vector<1x64x128xf32>
    %398 = vector.shape_cast %397 : vector<1x64x128xf32> to vector<64x128xf32>
    %cst_97 = arith.constant dense<0.000000e+00> : vector<16x128xf32>
    %399 = tpu.matmul %385, %398, %cst_97 {dimension_numbers = #tpu.dot_dimension_numbers<[1], [0], [0], [1], [0, 0, 1, 1], [], []>} : vector<16x64xf32>, vector<64x128xf32>, vector<16x128xf32> -> vector<16x128xf32>
    %c1_98 = arith.constant 1 : index
    %c0_99 = arith.constant 0 : index
    %c0_100 = arith.constant 0 : index
    %400 = vector.load %arg7[%c1_98, %c0_99, %c0_100] : memref<2x1x128xf32, #tpu.memory_space<vmem>>, vector<1x1x128xf32>
    %401 = vector.shape_cast %400 : vector<1x1x128xf32> to vector<1x128xf32>
    %402 = vector.broadcast %401 : vector<1x128xf32> to vector<16x128xf32>
    %403 = arith.addf %399, %402 : vector<16x128xf32>
    %cst_101 = arith.constant 0.000000e+00 : f32
    %404 = vector.broadcast %cst_101 : f32 to vector<2x32xf32>
    %405 = vector.extract_strided_slice %396 {offsets = [0, 0], sizes = [2, 128], strides = [1, 1]} : vector<16x128xf32> to vector<2x128xf32>
    %cst_102 = arith.constant dense<0.000000e+00> : vector<2x128xf32>
    %406 = tpu.matmul %404, %387, %cst_102 {dimension_numbers = #tpu.dot_dimension_numbers<[1], [0], [0], [1], [0, 0, 1, 1], [], []>} : vector<2x32xf32>, vector<32x128xf32>, vector<2x128xf32> -> vector<2x128xf32>
    %407 = arith.addf %405, %406 : vector<2x128xf32>
    %408 = arith.negf %407 : vector<2x128xf32>
    %409 = math.exp %408 : vector<2x128xf32>
    %cst_103 = arith.constant 1.000000e+00 : f32
    %410 = vector.broadcast %cst_103 : f32 to vector<2x128xf32>
    %411 = arith.addf %410, %409 : vector<2x128xf32>
    %412 = arith.divf %410, %411 : vector<2x128xf32>
    %413 = math.tanh %407 : vector<2x128xf32>
    %414 = vector.shape_cast %13 : vector<1x128xi1> to vector<1x128xi1>
    %415 = vector.broadcast %414 : vector<1x128xi1> to vector<2x128xi1>
    %416 = arith.select %415, %413, %412 : vector<2x128xi1>, vector<2x128xf32>
    %417 = vector.extract_strided_slice %416 {offsets = [0, 0], sizes = [2, 32], strides = [1, 1]} : vector<2x128xf32> to vector<2x32xf32>
    %418 = vector.extract_strided_slice %416 {offsets = [0, 32], sizes = [2, 32], strides = [1, 1]} : vector<2x128xf32> to vector<2x32xf32>
    %419 = vector.extract_strided_slice %416 {offsets = [0, 64], sizes = [2, 32], strides = [1, 1]} : vector<2x128xf32> to vector<2x32xf32>
    %420 = vector.extract_strided_slice %416 {offsets = [0, 96], sizes = [2, 32], strides = [1, 1]} : vector<2x128xf32> to vector<2x32xf32>
    %421 = arith.mulf %418, %404 : vector<2x32xf32>
    %422 = arith.mulf %417, %419 : vector<2x32xf32>
    %423 = arith.addf %421, %422 : vector<2x32xf32>
    %424 = math.tanh %423 : vector<2x32xf32>
    %425 = arith.mulf %420, %424 : vector<2x32xf32>
    %426 = vector.extract_strided_slice %403 {offsets = [14, 0], sizes = [2, 128], strides = [1, 1]} : vector<16x128xf32> to vector<2x128xf32>
    %cst_104 = arith.constant dense<0.000000e+00> : vector<2x128xf32>
    %427 = tpu.matmul %404, %389, %cst_104 {dimension_numbers = #tpu.dot_dimension_numbers<[1], [0], [0], [1], [0, 0, 1, 1], [], []>} : vector<2x32xf32>, vector<32x128xf32>, vector<2x128xf32> -> vector<2x128xf32>
    %428 = arith.addf %426, %427 : vector<2x128xf32>
    %429 = arith.negf %428 : vector<2x128xf32>
    %430 = math.exp %429 : vector<2x128xf32>
    %cst_105 = arith.constant 1.000000e+00 : f32
    %431 = vector.broadcast %cst_105 : f32 to vector<2x128xf32>
    %432 = arith.addf %431, %430 : vector<2x128xf32>
    %433 = arith.divf %431, %432 : vector<2x128xf32>
    %434 = math.tanh %428 : vector<2x128xf32>
    %435 = vector.shape_cast %13 : vector<1x128xi1> to vector<1x128xi1>
    %436 = vector.broadcast %435 : vector<1x128xi1> to vector<2x128xi1>
    %437 = arith.select %436, %434, %433 : vector<2x128xi1>, vector<2x128xf32>
    %438 = vector.extract_strided_slice %437 {offsets = [0, 0], sizes = [2, 32], strides = [1, 1]} : vector<2x128xf32> to vector<2x32xf32>
    %439 = vector.extract_strided_slice %437 {offsets = [0, 32], sizes = [2, 32], strides = [1, 1]} : vector<2x128xf32> to vector<2x32xf32>
    %440 = vector.extract_strided_slice %437 {offsets = [0, 64], sizes = [2, 32], strides = [1, 1]} : vector<2x128xf32> to vector<2x32xf32>
    %441 = vector.extract_strided_slice %437 {offsets = [0, 96], sizes = [2, 32], strides = [1, 1]} : vector<2x128xf32> to vector<2x32xf32>
    %442 = arith.mulf %439, %404 : vector<2x32xf32>
    %443 = arith.mulf %438, %440 : vector<2x32xf32>
    %444 = arith.addf %442, %443 : vector<2x32xf32>
    %445 = math.tanh %444 : vector<2x32xf32>
    %446 = arith.mulf %441, %445 : vector<2x32xf32>
    %c0_106 = arith.constant 0 : index
    %c0_107 = arith.constant 0 : index
    %447 = vector.load %arg12[%c0_106, %c0_107] : memref<16x64xf32, #tpu.memory_space<vmem>>, vector<2x32xf32>
    tpu.vector_store %arg12[%c0_106, %c0_107], %425 {strides = array<i32>} : memref<16x64xf32, #tpu.memory_space<vmem>>, vector<2x32xf32>,
    %c14_108 = arith.constant 14 : index
    %c32_109 = arith.constant 32 : index
    %448 = vector.load %arg12[%c14_108, %c32_109] : memref<16x64xf32, #tpu.memory_space<vmem>>, vector<2x32xf32>
    tpu.vector_store %arg12[%c14_108, %c32_109], %446 {strides = array<i32>} : memref<16x64xf32, #tpu.memory_space<vmem>>, vector<2x32xf32>,
    %449 = vector.extract_strided_slice %396 {offsets = [2, 0], sizes = [2, 128], strides = [1, 1]} : vector<16x128xf32> to vector<2x128xf32>
    %cst_110 = arith.constant dense<0.000000e+00> : vector<2x128xf32>
    %450 = tpu.matmul %425, %387, %cst_110 {dimension_numbers = #tpu.dot_dimension_numbers<[1], [0], [0], [1], [0, 0, 1, 1], [], []>} : vector<2x32xf32>, vector<32x128xf32>, vector<2x128xf32> -> vector<2x128xf32>
    %451 = arith.addf %449, %450 : vector<2x128xf32>
    %452 = arith.negf %451 : vector<2x128xf32>
    %453 = math.exp %452 : vector<2x128xf32>
    %cst_111 = arith.constant 1.000000e+00 : f32
    %454 = vector.broadcast %cst_111 : f32 to vector<2x128xf32>
    %455 = arith.addf %454, %453 : vector<2x128xf32>
    %456 = arith.divf %454, %455 : vector<2x128xf32>
    %457 = math.tanh %451 : vector<2x128xf32>
    %458 = vector.shape_cast %13 : vector<1x128xi1> to vector<1x128xi1>
    %459 = vector.broadcast %458 : vector<1x128xi1> to vector<2x128xi1>
    %460 = arith.select %459, %457, %456 : vector<2x128xi1>, vector<2x128xf32>
    %461 = vector.extract_strided_slice %460 {offsets = [0, 0], sizes = [2, 32], strides = [1, 1]} : vector<2x128xf32> to vector<2x32xf32>
    %462 = vector.extract_strided_slice %460 {offsets = [0, 32], sizes = [2, 32], strides = [1, 1]} : vector<2x128xf32> to vector<2x32xf32>
    %463 = vector.extract_strided_slice %460 {offsets = [0, 64], sizes = [2, 32], strides = [1, 1]} : vector<2x128xf32> to vector<2x32xf32>
    %464 = vector.extract_strided_slice %460 {offsets = [0, 96], sizes = [2, 32], strides = [1, 1]} : vector<2x128xf32> to vector<2x32xf32>
    %465 = arith.mulf %462, %423 : vector<2x32xf32>
    %466 = arith.mulf %461, %463 : vector<2x32xf32>
    %467 = arith.addf %465, %466 : vector<2x32xf32>
    %468 = math.tanh %467 : vector<2x32xf32>
    %469 = arith.mulf %464, %468 : vector<2x32xf32>
    %470 = vector.extract_strided_slice %403 {offsets = [12, 0], sizes = [2, 128], strides = [1, 1]} : vector<16x128xf32> to vector<2x128xf32>
    %cst_112 = arith.constant dense<0.000000e+00> : vector<2x128xf32>
    %471 = tpu.matmul %446, %389, %cst_112 {dimension_numbers = #tpu.dot_dimension_numbers<[1], [0], [0], [1], [0, 0, 1, 1], [], []>} : vector<2x32xf32>, vector<32x128xf32>, vector<2x128xf32> -> vector<2x128xf32>
    %472 = arith.addf %470, %471 : vector<2x128xf32>
    %473 = arith.negf %472 : vector<2x128xf32>
    %474 = math.exp %473 : vector<2x128xf32>
    %cst_113 = arith.constant 1.000000e+00 : f32
    %475 = vector.broadcast %cst_113 : f32 to vector<2x128xf32>
    %476 = arith.addf %475, %474 : vector<2x128xf32>
    %477 = arith.divf %475, %476 : vector<2x128xf32>
    %478 = math.tanh %472 : vector<2x128xf32>
    %479 = vector.shape_cast %13 : vector<1x128xi1> to vector<1x128xi1>
    %480 = vector.broadcast %479 : vector<1x128xi1> to vector<2x128xi1>
    %481 = arith.select %480, %478, %477 : vector<2x128xi1>, vector<2x128xf32>
    %482 = vector.extract_strided_slice %481 {offsets = [0, 0], sizes = [2, 32], strides = [1, 1]} : vector<2x128xf32> to vector<2x32xf32>
    %483 = vector.extract_strided_slice %481 {offsets = [0, 32], sizes = [2, 32], strides = [1, 1]} : vector<2x128xf32> to vector<2x32xf32>
    %484 = vector.extract_strided_slice %481 {offsets = [0, 64], sizes = [2, 32], strides = [1, 1]} : vector<2x128xf32> to vector<2x32xf32>
    %485 = vector.extract_strided_slice %481 {offsets = [0, 96], sizes = [2, 32], strides = [1, 1]} : vector<2x128xf32> to vector<2x32xf32>
    %486 = arith.mulf %483, %444 : vector<2x32xf32>
    %487 = arith.mulf %482, %484 : vector<2x32xf32>
    %488 = arith.addf %486, %487 : vector<2x32xf32>
    %489 = math.tanh %488 : vector<2x32xf32>
    %490 = arith.mulf %485, %489 : vector<2x32xf32>
    %c2_114 = arith.constant 2 : index
    %c0_115 = arith.constant 0 : index
    %491 = vector.load %arg12[%c2_114, %c0_115] : memref<16x64xf32, #tpu.memory_space<vmem>>, vector<2x32xf32>
    tpu.vector_store %arg12[%c2_114, %c0_115], %469 {strides = array<i32>} : memref<16x64xf32, #tpu.memory_space<vmem>>, vector<2x32xf32>,
    %c12_116 = arith.constant 12 : index
    %c32_117 = arith.constant 32 : index
    %492 = vector.load %arg12[%c12_116, %c32_117] : memref<16x64xf32, #tpu.memory_space<vmem>>, vector<2x32xf32>
    tpu.vector_store %arg12[%c12_116, %c32_117], %490 {strides = array<i32>} : memref<16x64xf32, #tpu.memory_space<vmem>>, vector<2x32xf32>,
    %493 = vector.extract_strided_slice %396 {offsets = [4, 0], sizes = [2, 128], strides = [1, 1]} : vector<16x128xf32> to vector<2x128xf32>
    %cst_118 = arith.constant dense<0.000000e+00> : vector<2x128xf32>
    %494 = tpu.matmul %469, %387, %cst_118 {dimension_numbers = #tpu.dot_dimension_numbers<[1], [0], [0], [1], [0, 0, 1, 1], [], []>} : vector<2x32xf32>, vector<32x128xf32>, vector<2x128xf32> -> vector<2x128xf32>
    %495 = arith.addf %493, %494 : vector<2x128xf32>
    %496 = arith.negf %495 : vector<2x128xf32>
    %497 = math.exp %496 : vector<2x128xf32>
    %cst_119 = arith.constant 1.000000e+00 : f32
    %498 = vector.broadcast %cst_119 : f32 to vector<2x128xf32>
    %499 = arith.addf %498, %497 : vector<2x128xf32>
    %500 = arith.divf %498, %499 : vector<2x128xf32>
    %501 = math.tanh %495 : vector<2x128xf32>
    %502 = vector.shape_cast %13 : vector<1x128xi1> to vector<1x128xi1>
    %503 = vector.broadcast %502 : vector<1x128xi1> to vector<2x128xi1>
    %504 = arith.select %503, %501, %500 : vector<2x128xi1>, vector<2x128xf32>
    %505 = vector.extract_strided_slice %504 {offsets = [0, 0], sizes = [2, 32], strides = [1, 1]} : vector<2x128xf32> to vector<2x32xf32>
    %506 = vector.extract_strided_slice %504 {offsets = [0, 32], sizes = [2, 32], strides = [1, 1]} : vector<2x128xf32> to vector<2x32xf32>
    %507 = vector.extract_strided_slice %504 {offsets = [0, 64], sizes = [2, 32], strides = [1, 1]} : vector<2x128xf32> to vector<2x32xf32>
    %508 = vector.extract_strided_slice %504 {offsets = [0, 96], sizes = [2, 32], strides = [1, 1]} : vector<2x128xf32> to vector<2x32xf32>
    %509 = arith.mulf %506, %467 : vector<2x32xf32>
    %510 = arith.mulf %505, %507 : vector<2x32xf32>
    %511 = arith.addf %509, %510 : vector<2x32xf32>
    %512 = math.tanh %511 : vector<2x32xf32>
    %513 = arith.mulf %508, %512 : vector<2x32xf32>
    %514 = vector.extract_strided_slice %403 {offsets = [10, 0], sizes = [2, 128], strides = [1, 1]} : vector<16x128xf32> to vector<2x128xf32>
    %cst_120 = arith.constant dense<0.000000e+00> : vector<2x128xf32>
    %515 = tpu.matmul %490, %389, %cst_120 {dimension_numbers = #tpu.dot_dimension_numbers<[1], [0], [0], [1], [0, 0, 1, 1], [], []>} : vector<2x32xf32>, vector<32x128xf32>, vector<2x128xf32> -> vector<2x128xf32>
    %516 = arith.addf %514, %515 : vector<2x128xf32>
    %517 = arith.negf %516 : vector<2x128xf32>
    %518 = math.exp %517 : vector<2x128xf32>
    %cst_121 = arith.constant 1.000000e+00 : f32
    %519 = vector.broadcast %cst_121 : f32 to vector<2x128xf32>
    %520 = arith.addf %519, %518 : vector<2x128xf32>
    %521 = arith.divf %519, %520 : vector<2x128xf32>
    %522 = math.tanh %516 : vector<2x128xf32>
    %523 = vector.shape_cast %13 : vector<1x128xi1> to vector<1x128xi1>
    %524 = vector.broadcast %523 : vector<1x128xi1> to vector<2x128xi1>
    %525 = arith.select %524, %522, %521 : vector<2x128xi1>, vector<2x128xf32>
    %526 = vector.extract_strided_slice %525 {offsets = [0, 0], sizes = [2, 32], strides = [1, 1]} : vector<2x128xf32> to vector<2x32xf32>
    %527 = vector.extract_strided_slice %525 {offsets = [0, 32], sizes = [2, 32], strides = [1, 1]} : vector<2x128xf32> to vector<2x32xf32>
    %528 = vector.extract_strided_slice %525 {offsets = [0, 64], sizes = [2, 32], strides = [1, 1]} : vector<2x128xf32> to vector<2x32xf32>
    %529 = vector.extract_strided_slice %525 {offsets = [0, 96], sizes = [2, 32], strides = [1, 1]} : vector<2x128xf32> to vector<2x32xf32>
    %530 = arith.mulf %527, %488 : vector<2x32xf32>
    %531 = arith.mulf %526, %528 : vector<2x32xf32>
    %532 = arith.addf %530, %531 : vector<2x32xf32>
    %533 = math.tanh %532 : vector<2x32xf32>
    %534 = arith.mulf %529, %533 : vector<2x32xf32>
    %c4_122 = arith.constant 4 : index
    %c0_123 = arith.constant 0 : index
    %535 = vector.load %arg12[%c4_122, %c0_123] : memref<16x64xf32, #tpu.memory_space<vmem>>, vector<2x32xf32>
    tpu.vector_store %arg12[%c4_122, %c0_123], %513 {strides = array<i32>} : memref<16x64xf32, #tpu.memory_space<vmem>>, vector<2x32xf32>,
    %c10_124 = arith.constant 10 : index
    %c32_125 = arith.constant 32 : index
    %536 = vector.load %arg12[%c10_124, %c32_125] : memref<16x64xf32, #tpu.memory_space<vmem>>, vector<2x32xf32>
    tpu.vector_store %arg12[%c10_124, %c32_125], %534 {strides = array<i32>} : memref<16x64xf32, #tpu.memory_space<vmem>>, vector<2x32xf32>,
    %537 = vector.extract_strided_slice %396 {offsets = [6, 0], sizes = [2, 128], strides = [1, 1]} : vector<16x128xf32> to vector<2x128xf32>
    %cst_126 = arith.constant dense<0.000000e+00> : vector<2x128xf32>
    %538 = tpu.matmul %513, %387, %cst_126 {dimension_numbers = #tpu.dot_dimension_numbers<[1], [0], [0], [1], [0, 0, 1, 1], [], []>} : vector<2x32xf32>, vector<32x128xf32>, vector<2x128xf32> -> vector<2x128xf32>
    %539 = arith.addf %537, %538 : vector<2x128xf32>
    %540 = arith.negf %539 : vector<2x128xf32>
    %541 = math.exp %540 : vector<2x128xf32>
    %cst_127 = arith.constant 1.000000e+00 : f32
    %542 = vector.broadcast %cst_127 : f32 to vector<2x128xf32>
    %543 = arith.addf %542, %541 : vector<2x128xf32>
    %544 = arith.divf %542, %543 : vector<2x128xf32>
    %545 = math.tanh %539 : vector<2x128xf32>
    %546 = vector.shape_cast %13 : vector<1x128xi1> to vector<1x128xi1>
    %547 = vector.broadcast %546 : vector<1x128xi1> to vector<2x128xi1>
    %548 = arith.select %547, %545, %544 : vector<2x128xi1>, vector<2x128xf32>
    %549 = vector.extract_strided_slice %548 {offsets = [0, 0], sizes = [2, 32], strides = [1, 1]} : vector<2x128xf32> to vector<2x32xf32>
    %550 = vector.extract_strided_slice %548 {offsets = [0, 32], sizes = [2, 32], strides = [1, 1]} : vector<2x128xf32> to vector<2x32xf32>
    %551 = vector.extract_strided_slice %548 {offsets = [0, 64], sizes = [2, 32], strides = [1, 1]} : vector<2x128xf32> to vector<2x32xf32>
    %552 = vector.extract_strided_slice %548 {offsets = [0, 96], sizes = [2, 32], strides = [1, 1]} : vector<2x128xf32> to vector<2x32xf32>
    %553 = arith.mulf %550, %511 : vector<2x32xf32>
    %554 = arith.mulf %549, %551 : vector<2x32xf32>
    %555 = arith.addf %553, %554 : vector<2x32xf32>
    %556 = math.tanh %555 : vector<2x32xf32>
    %557 = arith.mulf %552, %556 : vector<2x32xf32>
    %558 = vector.extract_strided_slice %403 {offsets = [8, 0], sizes = [2, 128], strides = [1, 1]} : vector<16x128xf32> to vector<2x128xf32>
    %cst_128 = arith.constant dense<0.000000e+00> : vector<2x128xf32>
    %559 = tpu.matmul %534, %389, %cst_128 {dimension_numbers = #tpu.dot_dimension_numbers<[1], [0], [0], [1], [0, 0, 1, 1], [], []>} : vector<2x32xf32>, vector<32x128xf32>, vector<2x128xf32> -> vector<2x128xf32>
    %560 = arith.addf %558, %559 : vector<2x128xf32>
    %561 = arith.negf %560 : vector<2x128xf32>
    %562 = math.exp %561 : vector<2x128xf32>
    %cst_129 = arith.constant 1.000000e+00 : f32
    %563 = vector.broadcast %cst_129 : f32 to vector<2x128xf32>
    %564 = arith.addf %563, %562 : vector<2x128xf32>
    %565 = arith.divf %563, %564 : vector<2x128xf32>
    %566 = math.tanh %560 : vector<2x128xf32>
    %567 = vector.shape_cast %13 : vector<1x128xi1> to vector<1x128xi1>
    %568 = vector.broadcast %567 : vector<1x128xi1> to vector<2x128xi1>
    %569 = arith.select %568, %566, %565 : vector<2x128xi1>, vector<2x128xf32>
    %570 = vector.extract_strided_slice %569 {offsets = [0, 0], sizes = [2, 32], strides = [1, 1]} : vector<2x128xf32> to vector<2x32xf32>
    %571 = vector.extract_strided_slice %569 {offsets = [0, 32], sizes = [2, 32], strides = [1, 1]} : vector<2x128xf32> to vector<2x32xf32>
    %572 = vector.extract_strided_slice %569 {offsets = [0, 64], sizes = [2, 32], strides = [1, 1]} : vector<2x128xf32> to vector<2x32xf32>
    %573 = vector.extract_strided_slice %569 {offsets = [0, 96], sizes = [2, 32], strides = [1, 1]} : vector<2x128xf32> to vector<2x32xf32>
    %574 = arith.mulf %571, %532 : vector<2x32xf32>
    %575 = arith.mulf %570, %572 : vector<2x32xf32>
    %576 = arith.addf %574, %575 : vector<2x32xf32>
    %577 = math.tanh %576 : vector<2x32xf32>
    %578 = arith.mulf %573, %577 : vector<2x32xf32>
    %c6_130 = arith.constant 6 : index
    %c0_131 = arith.constant 0 : index
    %579 = vector.load %arg12[%c6_130, %c0_131] : memref<16x64xf32, #tpu.memory_space<vmem>>, vector<2x32xf32>
    tpu.vector_store %arg12[%c6_130, %c0_131], %557 {strides = array<i32>} : memref<16x64xf32, #tpu.memory_space<vmem>>, vector<2x32xf32>,
    %c8_132 = arith.constant 8 : index
    %c32_133 = arith.constant 32 : index
    %580 = vector.load %arg12[%c8_132, %c32_133] : memref<16x64xf32, #tpu.memory_space<vmem>>, vector<2x32xf32>
    tpu.vector_store %arg12[%c8_132, %c32_133], %578 {strides = array<i32>} : memref<16x64xf32, #tpu.memory_space<vmem>>, vector<2x32xf32>,
    %581 = vector.extract_strided_slice %396 {offsets = [8, 0], sizes = [2, 128], strides = [1, 1]} : vector<16x128xf32> to vector<2x128xf32>
    %cst_134 = arith.constant dense<0.000000e+00> : vector<2x128xf32>
    %582 = tpu.matmul %557, %387, %cst_134 {dimension_numbers = #tpu.dot_dimension_numbers<[1], [0], [0], [1], [0, 0, 1, 1], [], []>} : vector<2x32xf32>, vector<32x128xf32>, vector<2x128xf32> -> vector<2x128xf32>
    %583 = arith.addf %581, %582 : vector<2x128xf32>
    %584 = arith.negf %583 : vector<2x128xf32>
    %585 = math.exp %584 : vector<2x128xf32>
    %cst_135 = arith.constant 1.000000e+00 : f32
    %586 = vector.broadcast %cst_135 : f32 to vector<2x128xf32>
    %587 = arith.addf %586, %585 : vector<2x128xf32>
    %588 = arith.divf %586, %587 : vector<2x128xf32>
    %589 = math.tanh %583 : vector<2x128xf32>
    %590 = vector.shape_cast %13 : vector<1x128xi1> to vector<1x128xi1>
    %591 = vector.broadcast %590 : vector<1x128xi1> to vector<2x128xi1>
    %592 = arith.select %591, %589, %588 : vector<2x128xi1>, vector<2x128xf32>
    %593 = vector.extract_strided_slice %592 {offsets = [0, 0], sizes = [2, 32], strides = [1, 1]} : vector<2x128xf32> to vector<2x32xf32>
    %594 = vector.extract_strided_slice %592 {offsets = [0, 32], sizes = [2, 32], strides = [1, 1]} : vector<2x128xf32> to vector<2x32xf32>
    %595 = vector.extract_strided_slice %592 {offsets = [0, 64], sizes = [2, 32], strides = [1, 1]} : vector<2x128xf32> to vector<2x32xf32>
    %596 = vector.extract_strided_slice %592 {offsets = [0, 96], sizes = [2, 32], strides = [1, 1]} : vector<2x128xf32> to vector<2x32xf32>
    %597 = arith.mulf %594, %555 : vector<2x32xf32>
    %598 = arith.mulf %593, %595 : vector<2x32xf32>
    %599 = arith.addf %597, %598 : vector<2x32xf32>
    %600 = math.tanh %599 : vector<2x32xf32>
    %601 = arith.mulf %596, %600 : vector<2x32xf32>
    %602 = vector.extract_strided_slice %403 {offsets = [6, 0], sizes = [2, 128], strides = [1, 1]} : vector<16x128xf32> to vector<2x128xf32>
    %cst_136 = arith.constant dense<0.000000e+00> : vector<2x128xf32>
    %603 = tpu.matmul %578, %389, %cst_136 {dimension_numbers = #tpu.dot_dimension_numbers<[1], [0], [0], [1], [0, 0, 1, 1], [], []>} : vector<2x32xf32>, vector<32x128xf32>, vector<2x128xf32> -> vector<2x128xf32>
    %604 = arith.addf %602, %603 : vector<2x128xf32>
    %605 = arith.negf %604 : vector<2x128xf32>
    %606 = math.exp %605 : vector<2x128xf32>
    %cst_137 = arith.constant 1.000000e+00 : f32
    %607 = vector.broadcast %cst_137 : f32 to vector<2x128xf32>
    %608 = arith.addf %607, %606 : vector<2x128xf32>
    %609 = arith.divf %607, %608 : vector<2x128xf32>
    %610 = math.tanh %604 : vector<2x128xf32>
    %611 = vector.shape_cast %13 : vector<1x128xi1> to vector<1x128xi1>
    %612 = vector.broadcast %611 : vector<1x128xi1> to vector<2x128xi1>
    %613 = arith.select %612, %610, %609 : vector<2x128xi1>, vector<2x128xf32>
    %614 = vector.extract_strided_slice %613 {offsets = [0, 0], sizes = [2, 32], strides = [1, 1]} : vector<2x128xf32> to vector<2x32xf32>
    %615 = vector.extract_strided_slice %613 {offsets = [0, 32], sizes = [2, 32], strides = [1, 1]} : vector<2x128xf32> to vector<2x32xf32>
    %616 = vector.extract_strided_slice %613 {offsets = [0, 64], sizes = [2, 32], strides = [1, 1]} : vector<2x128xf32> to vector<2x32xf32>
    %617 = vector.extract_strided_slice %613 {offsets = [0, 96], sizes = [2, 32], strides = [1, 1]} : vector<2x128xf32> to vector<2x32xf32>
    %618 = arith.mulf %615, %576 : vector<2x32xf32>
    %619 = arith.mulf %614, %616 : vector<2x32xf32>
    %620 = arith.addf %618, %619 : vector<2x32xf32>
    %621 = math.tanh %620 : vector<2x32xf32>
    %622 = arith.mulf %617, %621 : vector<2x32xf32>
    %c8_138 = arith.constant 8 : index
    %c0_139 = arith.constant 0 : index
    %623 = vector.load %arg12[%c8_138, %c0_139] : memref<16x64xf32, #tpu.memory_space<vmem>>, vector<2x32xf32>
    tpu.vector_store %arg12[%c8_138, %c0_139], %601 {strides = array<i32>} : memref<16x64xf32, #tpu.memory_space<vmem>>, vector<2x32xf32>,
    %c6_140 = arith.constant 6 : index
    %c32_141 = arith.constant 32 : index
    %624 = vector.load %arg12[%c6_140, %c32_141] : memref<16x64xf32, #tpu.memory_space<vmem>>, vector<2x32xf32>
    tpu.vector_store %arg12[%c6_140, %c32_141], %622 {strides = array<i32>} : memref<16x64xf32, #tpu.memory_space<vmem>>, vector<2x32xf32>,
    %625 = vector.extract_strided_slice %396 {offsets = [10, 0], sizes = [2, 128], strides = [1, 1]} : vector<16x128xf32> to vector<2x128xf32>
    %cst_142 = arith.constant dense<0.000000e+00> : vector<2x128xf32>
    %626 = tpu.matmul %601, %387, %cst_142 {dimension_numbers = #tpu.dot_dimension_numbers<[1], [0], [0], [1], [0, 0, 1, 1], [], []>} : vector<2x32xf32>, vector<32x128xf32>, vector<2x128xf32> -> vector<2x128xf32>
    %627 = arith.addf %625, %626 : vector<2x128xf32>
    %628 = arith.negf %627 : vector<2x128xf32>
    %629 = math.exp %628 : vector<2x128xf32>
    %cst_143 = arith.constant 1.000000e+00 : f32
    %630 = vector.broadcast %cst_143 : f32 to vector<2x128xf32>
    %631 = arith.addf %630, %629 : vector<2x128xf32>
    %632 = arith.divf %630, %631 : vector<2x128xf32>
    %633 = math.tanh %627 : vector<2x128xf32>
    %634 = vector.shape_cast %13 : vector<1x128xi1> to vector<1x128xi1>
    %635 = vector.broadcast %634 : vector<1x128xi1> to vector<2x128xi1>
    %636 = arith.select %635, %633, %632 : vector<2x128xi1>, vector<2x128xf32>
    %637 = vector.extract_strided_slice %636 {offsets = [0, 0], sizes = [2, 32], strides = [1, 1]} : vector<2x128xf32> to vector<2x32xf32>
    %638 = vector.extract_strided_slice %636 {offsets = [0, 32], sizes = [2, 32], strides = [1, 1]} : vector<2x128xf32> to vector<2x32xf32>
    %639 = vector.extract_strided_slice %636 {offsets = [0, 64], sizes = [2, 32], strides = [1, 1]} : vector<2x128xf32> to vector<2x32xf32>
    %640 = vector.extract_strided_slice %636 {offsets = [0, 96], sizes = [2, 32], strides = [1, 1]} : vector<2x128xf32> to vector<2x32xf32>
    %641 = arith.mulf %638, %599 : vector<2x32xf32>
    %642 = arith.mulf %637, %639 : vector<2x32xf32>
    %643 = arith.addf %641, %642 : vector<2x32xf32>
    %644 = math.tanh %643 : vector<2x32xf32>
    %645 = arith.mulf %640, %644 : vector<2x32xf32>
    %646 = vector.extract_strided_slice %403 {offsets = [4, 0], sizes = [2, 128], strides = [1, 1]} : vector<16x128xf32> to vector<2x128xf32>
    %cst_144 = arith.constant dense<0.000000e+00> : vector<2x128xf32>
    %647 = tpu.matmul %622, %389, %cst_144 {dimension_numbers = #tpu.dot_dimension_numbers<[1], [0], [0], [1], [0, 0, 1, 1], [], []>} : vector<2x32xf32>, vector<32x128xf32>, vector<2x128xf32> -> vector<2x128xf32>
    %648 = arith.addf %646, %647 : vector<2x128xf32>
    %649 = arith.negf %648 : vector<2x128xf32>
    %650 = math.exp %649 : vector<2x128xf32>
    %cst_145 = arith.constant 1.000000e+00 : f32
    %651 = vector.broadcast %cst_145 : f32 to vector<2x128xf32>
    %652 = arith.addf %651, %650 : vector<2x128xf32>
    %653 = arith.divf %651, %652 : vector<2x128xf32>
    %654 = math.tanh %648 : vector<2x128xf32>
    %655 = vector.shape_cast %13 : vector<1x128xi1> to vector<1x128xi1>
    %656 = vector.broadcast %655 : vector<1x128xi1> to vector<2x128xi1>
    %657 = arith.select %656, %654, %653 : vector<2x128xi1>, vector<2x128xf32>
    %658 = vector.extract_strided_slice %657 {offsets = [0, 0], sizes = [2, 32], strides = [1, 1]} : vector<2x128xf32> to vector<2x32xf32>
    %659 = vector.extract_strided_slice %657 {offsets = [0, 32], sizes = [2, 32], strides = [1, 1]} : vector<2x128xf32> to vector<2x32xf32>
    %660 = vector.extract_strided_slice %657 {offsets = [0, 64], sizes = [2, 32], strides = [1, 1]} : vector<2x128xf32> to vector<2x32xf32>
    %661 = vector.extract_strided_slice %657 {offsets = [0, 96], sizes = [2, 32], strides = [1, 1]} : vector<2x128xf32> to vector<2x32xf32>
    %662 = arith.mulf %659, %620 : vector<2x32xf32>
    %663 = arith.mulf %658, %660 : vector<2x32xf32>
    %664 = arith.addf %662, %663 : vector<2x32xf32>
    %665 = math.tanh %664 : vector<2x32xf32>
    %666 = arith.mulf %661, %665 : vector<2x32xf32>
    %c10_146 = arith.constant 10 : index
    %c0_147 = arith.constant 0 : index
    %667 = vector.load %arg12[%c10_146, %c0_147] : memref<16x64xf32, #tpu.memory_space<vmem>>, vector<2x32xf32>
    tpu.vector_store %arg12[%c10_146, %c0_147], %645 {strides = array<i32>} : memref<16x64xf32, #tpu.memory_space<vmem>>, vector<2x32xf32>,
    %c4_148 = arith.constant 4 : index
    %c32_149 = arith.constant 32 : index
    %668 = vector.load %arg12[%c4_148, %c32_149] : memref<16x64xf32, #tpu.memory_space<vmem>>, vector<2x32xf32>
    tpu.vector_store %arg12[%c4_148, %c32_149], %666 {strides = array<i32>} : memref<16x64xf32, #tpu.memory_space<vmem>>, vector<2x32xf32>,
    %669 = vector.extract_strided_slice %396 {offsets = [12, 0], sizes = [2, 128], strides = [1, 1]} : vector<16x128xf32> to vector<2x128xf32>
    %cst_150 = arith.constant dense<0.000000e+00> : vector<2x128xf32>
    %670 = tpu.matmul %645, %387, %cst_150 {dimension_numbers = #tpu.dot_dimension_numbers<[1], [0], [0], [1], [0, 0, 1, 1], [], []>} : vector<2x32xf32>, vector<32x128xf32>, vector<2x128xf32> -> vector<2x128xf32>
    %671 = arith.addf %669, %670 : vector<2x128xf32>
    %672 = arith.negf %671 : vector<2x128xf32>
    %673 = math.exp %672 : vector<2x128xf32>
    %cst_151 = arith.constant 1.000000e+00 : f32
    %674 = vector.broadcast %cst_151 : f32 to vector<2x128xf32>
    %675 = arith.addf %674, %673 : vector<2x128xf32>
    %676 = arith.divf %674, %675 : vector<2x128xf32>
    %677 = math.tanh %671 : vector<2x128xf32>
    %678 = vector.shape_cast %13 : vector<1x128xi1> to vector<1x128xi1>
    %679 = vector.broadcast %678 : vector<1x128xi1> to vector<2x128xi1>
    %680 = arith.select %679, %677, %676 : vector<2x128xi1>, vector<2x128xf32>
    %681 = vector.extract_strided_slice %680 {offsets = [0, 0], sizes = [2, 32], strides = [1, 1]} : vector<2x128xf32> to vector<2x32xf32>
    %682 = vector.extract_strided_slice %680 {offsets = [0, 32], sizes = [2, 32], strides = [1, 1]} : vector<2x128xf32> to vector<2x32xf32>
    %683 = vector.extract_strided_slice %680 {offsets = [0, 64], sizes = [2, 32], strides = [1, 1]} : vector<2x128xf32> to vector<2x32xf32>
    %684 = vector.extract_strided_slice %680 {offsets = [0, 96], sizes = [2, 32], strides = [1, 1]} : vector<2x128xf32> to vector<2x32xf32>
    %685 = arith.mulf %682, %643 : vector<2x32xf32>
    %686 = arith.mulf %681, %683 : vector<2x32xf32>
    %687 = arith.addf %685, %686 : vector<2x32xf32>
    %688 = math.tanh %687 : vector<2x32xf32>
    %689 = arith.mulf %684, %688 : vector<2x32xf32>
    %690 = vector.extract_strided_slice %403 {offsets = [2, 0], sizes = [2, 128], strides = [1, 1]} : vector<16x128xf32> to vector<2x128xf32>
    %cst_152 = arith.constant dense<0.000000e+00> : vector<2x128xf32>
    %691 = tpu.matmul %666, %389, %cst_152 {dimension_numbers = #tpu.dot_dimension_numbers<[1], [0], [0], [1], [0, 0, 1, 1], [], []>} : vector<2x32xf32>, vector<32x128xf32>, vector<2x128xf32> -> vector<2x128xf32>
    %692 = arith.addf %690, %691 : vector<2x128xf32>
    %693 = arith.negf %692 : vector<2x128xf32>
    %694 = math.exp %693 : vector<2x128xf32>
    %cst_153 = arith.constant 1.000000e+00 : f32
    %695 = vector.broadcast %cst_153 : f32 to vector<2x128xf32>
    %696 = arith.addf %695, %694 : vector<2x128xf32>
    %697 = arith.divf %695, %696 : vector<2x128xf32>
    %698 = math.tanh %692 : vector<2x128xf32>
    %699 = vector.shape_cast %13 : vector<1x128xi1> to vector<1x128xi1>
    %700 = vector.broadcast %699 : vector<1x128xi1> to vector<2x128xi1>
    %701 = arith.select %700, %698, %697 : vector<2x128xi1>, vector<2x128xf32>
    %702 = vector.extract_strided_slice %701 {offsets = [0, 0], sizes = [2, 32], strides = [1, 1]} : vector<2x128xf32> to vector<2x32xf32>
    %703 = vector.extract_strided_slice %701 {offsets = [0, 32], sizes = [2, 32], strides = [1, 1]} : vector<2x128xf32> to vector<2x32xf32>
    %704 = vector.extract_strided_slice %701 {offsets = [0, 64], sizes = [2, 32], strides = [1, 1]} : vector<2x128xf32> to vector<2x32xf32>
    %705 = vector.extract_strided_slice %701 {offsets = [0, 96], sizes = [2, 32], strides = [1, 1]} : vector<2x128xf32> to vector<2x32xf32>
    %706 = arith.mulf %703, %664 : vector<2x32xf32>
    %707 = arith.mulf %702, %704 : vector<2x32xf32>
    %708 = arith.addf %706, %707 : vector<2x32xf32>
    %709 = math.tanh %708 : vector<2x32xf32>
    %710 = arith.mulf %705, %709 : vector<2x32xf32>
    %c12_154 = arith.constant 12 : index
    %c0_155 = arith.constant 0 : index
    %711 = vector.load %arg12[%c12_154, %c0_155] : memref<16x64xf32, #tpu.memory_space<vmem>>, vector<2x32xf32>
    tpu.vector_store %arg12[%c12_154, %c0_155], %689 {strides = array<i32>} : memref<16x64xf32, #tpu.memory_space<vmem>>, vector<2x32xf32>,
    %c2_156 = arith.constant 2 : index
    %c32_157 = arith.constant 32 : index
    %712 = vector.load %arg12[%c2_156, %c32_157] : memref<16x64xf32, #tpu.memory_space<vmem>>, vector<2x32xf32>
    tpu.vector_store %arg12[%c2_156, %c32_157], %710 {strides = array<i32>} : memref<16x64xf32, #tpu.memory_space<vmem>>, vector<2x32xf32>,
    %713 = vector.extract_strided_slice %396 {offsets = [14, 0], sizes = [2, 128], strides = [1, 1]} : vector<16x128xf32> to vector<2x128xf32>
    %cst_158 = arith.constant dense<0.000000e+00> : vector<2x128xf32>
    %714 = tpu.matmul %689, %387, %cst_158 {dimension_numbers = #tpu.dot_dimension_numbers<[1], [0], [0], [1], [0, 0, 1, 1], [], []>} : vector<2x32xf32>, vector<32x128xf32>, vector<2x128xf32> -> vector<2x128xf32>
    %715 = arith.addf %713, %714 : vector<2x128xf32>
    %716 = arith.negf %715 : vector<2x128xf32>
    %717 = math.exp %716 : vector<2x128xf32>
    %cst_159 = arith.constant 1.000000e+00 : f32
    %718 = vector.broadcast %cst_159 : f32 to vector<2x128xf32>
    %719 = arith.addf %718, %717 : vector<2x128xf32>
    %720 = arith.divf %718, %719 : vector<2x128xf32>
    %721 = math.tanh %715 : vector<2x128xf32>
    %722 = vector.shape_cast %13 : vector<1x128xi1> to vector<1x128xi1>
    %723 = vector.broadcast %722 : vector<1x128xi1> to vector<2x128xi1>
    %724 = arith.select %723, %721, %720 : vector<2x128xi1>, vector<2x128xf32>
    %725 = vector.extract_strided_slice %724 {offsets = [0, 0], sizes = [2, 32], strides = [1, 1]} : vector<2x128xf32> to vector<2x32xf32>
    %726 = vector.extract_strided_slice %724 {offsets = [0, 32], sizes = [2, 32], strides = [1, 1]} : vector<2x128xf32> to vector<2x32xf32>
    %727 = vector.extract_strided_slice %724 {offsets = [0, 64], sizes = [2, 32], strides = [1, 1]} : vector<2x128xf32> to vector<2x32xf32>
    %728 = vector.extract_strided_slice %724 {offsets = [0, 96], sizes = [2, 32], strides = [1, 1]} : vector<2x128xf32> to vector<2x32xf32>
    %729 = arith.mulf %726, %687 : vector<2x32xf32>
    %730 = arith.mulf %725, %727 : vector<2x32xf32>
    %731 = arith.addf %729, %730 : vector<2x32xf32>
    %732 = math.tanh %731 : vector<2x32xf32>
    %733 = arith.mulf %728, %732 : vector<2x32xf32>
    %734 = vector.extract_strided_slice %403 {offsets = [0, 0], sizes = [2, 128], strides = [1, 1]} : vector<16x128xf32> to vector<2x128xf32>
    %cst_160 = arith.constant dense<0.000000e+00> : vector<2x128xf32>
    %735 = tpu.matmul %710, %389, %cst_160 {dimension_numbers = #tpu.dot_dimension_numbers<[1], [0], [0], [1], [0, 0, 1, 1], [], []>} : vector<2x32xf32>, vector<32x128xf32>, vector<2x128xf32> -> vector<2x128xf32>
    %736 = arith.addf %734, %735 : vector<2x128xf32>
    %737 = arith.negf %736 : vector<2x128xf32>
    %738 = math.exp %737 : vector<2x128xf32>
    %cst_161 = arith.constant 1.000000e+00 : f32
    %739 = vector.broadcast %cst_161 : f32 to vector<2x128xf32>
    %740 = arith.addf %739, %738 : vector<2x128xf32>
    %741 = arith.divf %739, %740 : vector<2x128xf32>
    %742 = math.tanh %736 : vector<2x128xf32>
    %743 = vector.shape_cast %13 : vector<1x128xi1> to vector<1x128xi1>
    %744 = vector.broadcast %743 : vector<1x128xi1> to vector<2x128xi1>
    %745 = arith.select %744, %742, %741 : vector<2x128xi1>, vector<2x128xf32>
    %746 = vector.extract_strided_slice %745 {offsets = [0, 0], sizes = [2, 32], strides = [1, 1]} : vector<2x128xf32> to vector<2x32xf32>
    %747 = vector.extract_strided_slice %745 {offsets = [0, 32], sizes = [2, 32], strides = [1, 1]} : vector<2x128xf32> to vector<2x32xf32>
    %748 = vector.extract_strided_slice %745 {offsets = [0, 64], sizes = [2, 32], strides = [1, 1]} : vector<2x128xf32> to vector<2x32xf32>
    %749 = vector.extract_strided_slice %745 {offsets = [0, 96], sizes = [2, 32], strides = [1, 1]} : vector<2x128xf32> to vector<2x32xf32>
    %750 = arith.mulf %747, %708 : vector<2x32xf32>
    %751 = arith.mulf %746, %748 : vector<2x32xf32>
    %752 = arith.addf %750, %751 : vector<2x32xf32>
    %753 = math.tanh %752 : vector<2x32xf32>
    %754 = arith.mulf %749, %753 : vector<2x32xf32>
    %c14_162 = arith.constant 14 : index
    %c0_163 = arith.constant 0 : index
    %755 = vector.load %arg12[%c14_162, %c0_163] : memref<16x64xf32, #tpu.memory_space<vmem>>, vector<2x32xf32>
    tpu.vector_store %arg12[%c14_162, %c0_163], %733 {strides = array<i32>} : memref<16x64xf32, #tpu.memory_space<vmem>>, vector<2x32xf32>,
    %c0_164 = arith.constant 0 : index
    %c32_165 = arith.constant 32 : index
    %756 = vector.load %arg12[%c0_164, %c32_165] : memref<16x64xf32, #tpu.memory_space<vmem>>, vector<2x32xf32>
    tpu.vector_store %arg12[%c0_164, %c32_165], %754 {strides = array<i32>} : memref<16x64xf32, #tpu.memory_space<vmem>>, vector<2x32xf32>,
    %c0_166 = arith.constant 0 : index
    %c0_167 = arith.constant 0 : index
    %757 = vector.load %arg12[%c0_166, %c0_167] : memref<16x64xf32, #tpu.memory_space<vmem>>, vector<16x64xf32>
    %c0_168 = arith.constant 0 : index
    %c0_169 = arith.constant 0 : index
    %758 = vector.load %arg8[%c0_168, %c0_169] : memref<64x5xf32, #tpu.memory_space<vmem>>, vector<64x5xf32>
    %cst_170 = arith.constant dense<0.000000e+00> : vector<16x5xf32>
    %759 = tpu.matmul %757, %758, %cst_170 {dimension_numbers = #tpu.dot_dimension_numbers<[1], [0], [0], [1], [0, 0, 1, 1], [], []>} : vector<16x64xf32>, vector<64x5xf32>, vector<16x5xf32> -> vector<16x5xf32>
    %c0_171 = arith.constant 0 : index
    %c0_172 = arith.constant 0 : index
    %760 = vector.load %arg9[%c0_171, %c0_172] : memref<1x5xf32, #tpu.memory_space<vmem>>, vector<1x5xf32>
    %761 = vector.broadcast %760 : vector<1x5xf32> to vector<16x5xf32>
    %762 = arith.addf %759, %761 : vector<16x5xf32>
    %c0_173 = arith.constant 0 : index
    %c0_174 = arith.constant 0 : index
    %763 = vector.load %arg10[%c0_173, %c0_174] : memref<16x5xf32, #tpu.memory_space<vmem>>, vector<16x5xf32>
    tpu.vector_store %arg10[%c0_173, %c0_174], %762 {strides = array<i32>} : memref<16x5xf32, #tpu.memory_space<vmem>>, vector<16x5xf32>,
    return
  }
}

</mosaic_0001>

<llo_original>
// kernel: forward.1
$region0: #{forward.1}
  #allocation0 [shape = 'u32[]', space=smem, size = 0x4, offset = 0x4, fixed_abs, tag = 'smem constant byte address 0x4 - core index']
  #allocation1 [shape = 'u32[144,128]{1,0:T(1,128)}', space=vmem, size = 0x12000, scoped, tag = 'internal scratch']
  #allocation2 [shape = 'f32[16,64]{1,0:T(8,128)}', space=vmem, size = 0x2000, scoped, tag = 'scratch operand']
  #allocation3 [shape = 'f32[16,64]{1,0:T(8,128)}', space=vmem, size = 0x2000, scoped, tag = 'scratch operand']
  %s0 = inlined_call_operand.vmem [shape: s32[16,1], index: 0, kind: input, shape index: {}]
  %s1 = inlined_call_operand.vmem [shape: f32[32,16], index: 1, kind: input, shape index: {}]
  %s2 = inlined_call_operand.vmem [shape: f32[2,16,128], index: 2, kind: input, shape index: {}]
  %s3 = inlined_call_operand.hbm [shape: f32[2,32,128], index: 3, kind: input, shape index: {}]
  %s4 = inlined_call_operand.hbm [shape: f32[2,1,128], index: 4, kind: input, shape index: {}]
  %s5 = inlined_call_operand.vmem [shape: f32[2,64,128], index: 5, kind: input, shape index: {}]
  %s6 = inlined_call_operand.hbm [shape: f32[2,32,128], index: 6, kind: input, shape index: {}]
  %s7 = inlined_call_operand.hbm [shape: f32[2,1,128], index: 7, kind: input, shape index: {}]
  %s8 = inlined_call_operand.vmem [shape: f32[64,5], index: 8, kind: input, shape index: {}]
  %s9 = inlined_call_operand.hbm [shape: f32[1,5], index: 9, kind: input, shape index: {}]
  %s10 = inlined_call_operand.vmem [shape: f32[16,5], index: 10, kind: output, shape index: {}]
  %s11 = sld [smem:[#allocation0]]
  $region70: #{forward.1} parent=0
    _
  %s13 = ssub.s32 1, %s11
  %s14 = scalar_select 0, %s13, %s11
  $region1: #{forward.1} parent=0
    #allocation4 [shape = 'u8[32768]{0}', space=vmem, size = 0x8000, scoped, tag = 'input window, operand 3, single buffered']
    #allocation5 [shape = 's32[1]{0}', space=sflag, size = 0x4, scoped, tag = 'scoped memory for forward.1']
    #allocation6 [shape = 'u8[1024]{0}', space=vmem, size = 0x400, scoped, tag = 'input window, operand 4, single buffered']
    #allocation7 [shape = 's32[1]{0}', space=sflag, size = 0x4, scoped, tag = 'scoped memory for forward.1']
    #allocation8 [shape = 'u8[32768]{0}', space=vmem, size = 0x8000, scoped, tag = 'input window, operand 6, single buffered']
    #allocation9 [shape = 'u8[1024]{0}', space=vmem, size = 0x400, scoped, tag = 'input window, operand 7, single buffered']
    #allocation10 [shape = 's32[1]{0}', space=sflag, size = 0x4, scoped, tag = 'scoped memory for forward.1']
    #allocation11 [shape = 'u8[512]{0}', space=vmem, size = 0x400, scoped, tag = 'input window, operand 9, single buffered']
    %15 = vsyncpa [#allocation5], 0
    %16 = vsyncpa [#allocation7], 0
    %17 = vsyncpa [#allocation10], 0
    // Predicated region
    $region2: #{forward.1} parent=1 // pred_check
      _
    $region3: #{forward.1} parent=1 // pred_check_branch
      %19 = sbr.rel (0) target = $region5
    $region4: #{forward.1} parent=1 // pred_region
      _
    $region5: #{forward.1} parent=1 // pred_fallthru
      _
    // Predicated region
    $region6: #{forward.1} parent=1 // pred_check
      _
    $region7: #{forward.1} parent=1 // pred_check_branch
      %21 = sbr.rel (0) target = $region9
    $region8: #{forward.1} parent=1 // pred_region
      _
    $region9: #{forward.1} parent=1 // pred_fallthru
      _
    // Predicated region
    $region10: #{forward.1} parent=1 // pred_check
      _
    $region11: #{forward.1} parent=1 // pred_check_branch
      %23 = sbr.rel (0) target = $region13
    $region12: #{forward.1} parent=1 // pred_region
      _
    $region13: #{forward.1} parent=1 // pred_fallthru
      _
    // Predicated region
    $region14: #{forward.1} parent=1 // pred_check
      _
    $region15: #{forward.1} parent=1 // pred_check_branch
      %25 = sbr.rel (0) target = $region17
    $region16: #{forward.1} parent=1 // pred_region
      %s27 = ssub.s32 1024, 1024
      %28 = vsyncadd [#allocation5], %s27
      %s29 = sshll.u32 [#allocation4], 4
      %s30 = int_to_ptr.vmem [resolvable:$true] %s29
      %35 = dma.hbm_to_vmem [thread:$0]  %s3, 1024, %s30, [#allocation5], 128, 128, 8
    $region17: #{forward.1} parent=1 // pred_fallthru
      _
    // Predicated region
    $region18: #{forward.1} parent=1 // pred_check
      _
    $region19: #{forward.1} parent=1 // pred_check_branch
      %37 = sbr.rel (0) target = $region21
    $region20: #{forward.1} parent=1 // pred_region
      %s39 = ssub.s32 32, 32
      %40 = vsyncadd [#allocation7], %s39
      %s41 = sshll.u32 [#allocation6], 4
      %s42 = int_to_ptr.vmem [resolvable:$true] %s41
      %47 = dma.hbm_to_vmem [thread:$0]  %s4, 32, %s42, [#allocation7], 16, 16, 1
    $region21: #{forward.1} parent=1 // pred_fallthru
      _
    // Predicated region
    $region22: #{forward.1} parent=1 // pred_check
      _
    $region23: #{forward.1} parent=1 // pred_check_branch
      %49 = sbr.rel (0) target = $region25
    $region24: #{forward.1} parent=1 // pred_region
      _
    $region25: #{forward.1} parent=1 // pred_fallthru
      _
    // Predicated region
    $region26: #{forward.1} parent=1 // pred_check
      _
    $region27: #{forward.1} parent=1 // pred_check_branch
      %51 = sbr.rel (0) target = $region29
    $region28: #{forward.1} parent=1 // pred_region
      %s53 = ssub.s32 1024, 1024
      %54 = vsyncadd [#allocation7], %s53
      %s55 = sshll.u32 [#allocation8], 4
      %s56 = int_to_ptr.vmem [resolvable:$true] %s55
      %61 = dma.hbm_to_vmem [thread:$0]  %s6, 1024, %s56, [#allocation7], 128, 128, 8
    $region29: #{forward.1} parent=1 // pred_fallthru
      _
    // Predicated region
    $region30: #{forward.1} parent=1 // pred_check
      _
    $region31: #{forward.1} parent=1 // pred_check_branch
      %63 = sbr.rel (0) target = $region33
    $region32: #{forward.1} parent=1 // pred_region
      %s65 = ssub.s32 32, 32
      %66 = vsyncadd [#allocation10], %s65
      %s67 = sshll.u32 [#allocation9], 4
      %s68 = int_to_ptr.vmem [resolvable:$true] %s67
      %73 = dma.hbm_to_vmem [thread:$0]  %s7, 32, %s68, [#allocation10], 16, 16, 1
    $region33: #{forward.1} parent=1 // pred_fallthru
      _
    // Predicated region
    $region34: #{forward.1} parent=1 // pred_check
      _
    $region35: #{forward.1} parent=1 // pred_check_branch
      %75 = sbr.rel (0) target = $region37
    $region36: #{forward.1} parent=1 // pred_region
      _
    $region37: #{forward.1} parent=1 // pred_fallthru
      _
    // Predicated region
    $region38: #{forward.1} parent=1 // pred_check
      _
    $region39: #{forward.1} parent=1 // pred_check_branch
      %77 = sbr.rel (0) target = $region41
    $region40: #{forward.1} parent=1 // pred_region
      %s79 = ssub.s32 16, 16
      %80 = vsyncadd [#allocation10], %s79
      %s82 = sshll.u32 [#allocation11], 4
      %s83 = int_to_ptr.vmem [resolvable:$true] %s82
      %85 = dma.hbm_to_vmem [thread:$0]  %s9, 16, %s83, [#allocation10]
    $region41: #{forward.1} parent=1 // pred_fallthru
      _
    // Predicated region
    $region42: #{forward.1} parent=1 // pred_check
      _
    $region43: #{forward.1} parent=1 // pred_check_branch
      %87 = sbr.rel (0) target = $region45
    $region44: #{forward.1} parent=1 // pred_region
      %88 = dma.done [#allocation5], 1024
    $region45: #{forward.1} parent=1 // pred_fallthru
      _
    // Predicated region
    $region46: #{forward.1} parent=1 // pred_check
      _
    $region47: #{forward.1} parent=1 // pred_check_branch
      %90 = sbr.rel (0) target = $region49
    $region48: #{forward.1} parent=1 // pred_region
      %91 = dma.done [#allocation7], 32
    $region49: #{forward.1} parent=1 // pred_fallthru
      _
    // Predicated region
    $region50: #{forward.1} parent=1 // pred_check
      _
    $region51: #{forward.1} parent=1 // pred_check_branch
      %93 = sbr.rel (0) target = $region53
    $region52: #{forward.1} parent=1 // pred_region
      %94 = dma.done [#allocation7], 1024
    $region53: #{forward.1} parent=1 // pred_fallthru
      _
    // Predicated region
    $region54: #{forward.1} parent=1 // pred_check
      _
    $region55: #{forward.1} parent=1 // pred_check_branch
      %96 = sbr.rel (0) target = $region57
    $region56: #{forward.1} parent=1 // pred_region
      %97 = dma.done [#allocation10], 32
    $region57: #{forward.1} parent=1 // pred_fallthru
      _
    // Predicated region
    $region58: #{forward.1} parent=1 // pred_check
      _
    $region59: #{forward.1} parent=1 // pred_check_branch
      %99 = sbr.rel (0) target = $region61
    $region60: #{forward.1} parent=1 // pred_region
      %100 = dma.done [#allocation10], 16
    $region61: #{forward.1} parent=1 // pred_fallthru
      _
    %v101 = vlaneseq
    %v102 = vand.u32 %v101, 127
    %v103 = vld [vmem:[%s0] sm:$0xff]
    %v104 = vld [vmem:[%s0 + $0x8] sm:$0xff]
    %105 = vset.pattern.permute.xlu0 0
    %106 = vperm.xlu0 %105, %v103
    %v107 = vpop.permute.xlu0 %106
    %108 = vset.pattern.permute.xlu0 0
    %109 = vperm.xlu0 %108, %v104
    %v110 = vpop.permute.xlu0 %109
    %vm111 = vcmp.eq.s32.totalorder %v107, %v102
    %vm112 = vcmp.eq.s32.totalorder %v110, %v102
    %v113 = vsel %vm111, 1, 0
    %v114 = vsel %vm112, 1, 0
    %v115 = vcvt.s32.f32 %v113
    %v116 = vcvt.s32.f32 %v114
    %v117 = vld [vmem:[%s1] sm:$0xff]
    %v118 = vld [vmem:[%s1 + $0x8] sm:$0xff]
    %v119 = vld [vmem:[%s1 + $0x10] sm:$0xff]
    %v120 = vld [vmem:[%s1 + $0x18] sm:$0xff]
    %vm121 = vcmask 261120
    %v123 = vsel %vm121, %v115, 0
    %v126 = vsel %vm121, %v116, 0
    %128 = vmatprep.subr.mxu0 0.0
    %129 = vmatpush1.msra.mxu0 0.0
    %130 = vmatprep.subr.mxu0 0.0
    %131 = vmatpush1.msra.mxu0 0.0
    %132 = vmatprep.subr.mxu0 0.0
    %133 = vmatpush1.msra.mxu0 0.0
    %134 = vmatprep.subr.mxu0 0.0
    %135 = vmatpush1.msra.mxu0 0.0
    %136 = vmatprep.subr.mxu0 0.0
    %137 = vmatpush1.msra.mxu0 0.0
    %138 = vmatprep.subr.mxu0 0.0
    %139 = vmatpush1.msra.mxu0 0.0
    %140 = vmatprep.subr.mxu0 0.0
    %141 = vmatpush1.msra.mxu0 0.0
    %142 = vmatprep.subr.mxu0 0.0
    %143 = vmatpush1.msra.mxu0 0.0
    %144 = vmatprep.subr.mxu0 0.0
    %145 = vmatpush1.msra.mxu0 0.0
    %146 = vmatprep.subr.mxu0 0.0
    %147 = vmatpush1.msra.mxu0 0.0
    %148 = vmatprep.subr.mxu0 0.0
    %149 = vmatpush1.msra.mxu0 0.0
    %150 = vmatprep.subr.mxu0 0.0
    %151 = vmatpush1.msra.mxu0 0.0
    %152 = vmatprep.subr.mxu0 0.0
    %153 = vmatpush1.msra.mxu0 %v120
    %154 = vmatprep.subr.mxu0 0.0
    %155 = vmatpush1.msra.mxu0 %v119
    %156 = vmatprep.subr.mxu0 0.0
    %157 = vmatpush1.msra.mxu0 %v118
    %158 = vmatprep.subr.mxu0 0.0
    %159 = vmatpush1.msra.mxu0 %v117
    %160 = vmatprep.subr.mxu0 0.0
    %161 = vmatpush2.msra.mxu0 0.0
    %162 = vmatprep.subr.mxu0 0.0
    %163 = vmatpush2.msra.mxu0 0.0
    %164 = vmatprep.subr.mxu0 0.0
    %165 = vmatpush2.msra.mxu0 0.0
    %166 = vmatprep.subr.mxu0 0.0
    %167 = vmatpush2.msra.mxu0 0.0
    %168 = vmatprep.subr.mxu0 0.0
    %169 = vmatpush2.msra.mxu0 0.0
    %170 = vmatprep.subr.mxu0 0.0
    %171 = vmatpush2.msra.mxu0 0.0
    %172 = vmatprep.subr.mxu0 0.0
    %173 = vmatpush2.msra.mxu0 0.0
    %174 = vmatprep.subr.mxu0 0.0
    %175 = vmatpush2.msra.mxu0 0.0
    %176 = vmatprep.subr.mxu0 0.0
    %177 = vmatpush2.msra.mxu0 0.0
    %178 = vmatprep.subr.mxu0 0.0
    %179 = vmatpush2.msra.mxu0 0.0
    %180 = vmatprep.subr.mxu0 0.0
    %181 = vmatpush2.msra.mxu0 0.0
    %182 = vmatprep.subr.mxu0 0.0
    %183 = vmatpush2.msra.mxu0 0.0
    %184 = vmatprep.subr.mxu0 0.0
    %185 = vmatpush2.msra.mxu0 0.0
    %186 = vmatprep.subr.mxu0 0.0
    %187 = vmatpush2.msra.mxu0 0.0
    %188 = vmatprep.subr.mxu0 0.0
    %189 = vmatpush2.msra.mxu0 0.0
    %190 = vmatprep.subr.mxu0 0.0
    %191 = vmatpush2.msra.mxu0 0.0
    %192 = vmatprep.mubr.f32.mxu0 0.0
    %193 = vmatmul.mubr.f32.gmra.mxu0 %v123
    %v194 = vpop.f32.mrf.mxu0
    %v195 = vadd.f32 0.0, %v194
    %v196 = vpop.f32.mrf.mxu0
    %197 = vmatprep.mubr.f32.mxu0 0.0
    %198 = vmatmul.mubr.f32.gmra.mxu0 %v126
    %v199 = vpop.f32.mrf.mxu0
    %v200 = vadd.f32 0.0, %v199
    %v201 = vpop.f32.mrf.mxu0
    %202 = vdwg.mxu0
    %vm203 = vcmp.ge.s32.totalorder %v102, 64
    %vm204 = vcmp.lt.s32.totalorder %v102, 96
    %vm205 = vmand %vm203, %vm204
    %v206 = vld [vmem:[#allocation4] sm:$0xff]
    %v207 = vld [vmem:[#allocation4 + $0x8] sm:$0xff]
    %v208 = vld [vmem:[#allocation4 + $0x10] sm:$0xff]
    %v209 = vld [vmem:[#allocation4 + $0x18] sm:$0xff]
    %s210 = scalar_lea.vmem [#allocation4], 32
    %v211 = vld [vmem:[%s210] sm:$0xff]
    %v212 = vld [vmem:[%s210 + $0x8] sm:$0xff]
    %v213 = vld [vmem:[%s210 + $0x10] sm:$0xff]
    %v214 = vld [vmem:[%s210 + $0x18] sm:$0xff]
    %v215 = vld [vmem:[%s2] sm:$0xff]
    %v216 = vld [vmem:[%s2 + $0x8] sm:$0xff]
    %v217 = vld [vmem:[#allocation6] sm:$0x1]
    %v219 = vlaneseq
    %v220 = vshrl.u32 %v219, 7
    %v221 = vsub.s32 0, %v220
    %v222 = vrot.slane %v217, %v221
    %vm224 = vcmask 130048
    %v226 = vsel %vm224, %v195, 0
    %v229 = vsel %vm224, %v200, 0
    %231 = vmatprep.subr.mxu0 0.0
    %232 = vmatpush1.msra.mxu0 0.0
    %233 = vmatprep.subr.mxu0 0.0
    %234 = vmatpush1.msra.mxu0 0.0
    %235 = vmatprep.subr.mxu0 0.0
    %236 = vmatpush1.msra.mxu0 0.0
    %237 = vmatprep.subr.mxu0 0.0
    %238 = vmatpush1.msra.mxu0 0.0
    %239 = vmatprep.subr.mxu0 0.0
    %240 = vmatpush1.msra.mxu0 0.0
    %241 = vmatprep.subr.mxu0 0.0
    %242 = vmatpush1.msra.mxu0 0.0
    %243 = vmatprep.subr.mxu0 0.0
    %244 = vmatpush1.msra.mxu0 0.0
    %245 = vmatprep.subr.mxu0 0.0
    %246 = vmatpush1.msra.mxu0 0.0
    %247 = vmatprep.subr.mxu0 0.0
    %248 = vmatpush1.msra.mxu0 0.0
    %249 = vmatprep.subr.mxu0 0.0
    %250 = vmatpush1.msra.mxu0 0.0
    %251 = vmatprep.subr.mxu0 0.0
    %252 = vmatpush1.msra.mxu0 0.0
    %253 = vmatprep.subr.mxu0 0.0
    %254 = vmatpush1.msra.mxu0 0.0
    %255 = vmatprep.subr.mxu0 0.0
    %256 = vmatpush1.msra.mxu0 0.0
    %257 = vmatprep.subr.mxu0 0.0
    %258 = vmatpush1.msra.mxu0 0.0
    %259 = vmatprep.subr.mxu0 0.0
    %260 = vmatpush1.msra.mxu0 %v216
    %261 = vmatprep.subr.mxu0 0.0
    %262 = vmatpush1.msra.mxu0 %v215
    %263 = vmatprep.subr.mxu0 0.0
    %264 = vmatpush2.msra.mxu0 0.0
    %265 = vmatprep.subr.mxu0 0.0
    %266 = vmatpush2.msra.mxu0 0.0
    %267 = vmatprep.subr.mxu0 0.0
    %268 = vmatpush2.msra.mxu0 0.0
    %269 = vmatprep.subr.mxu0 0.0
    %270 = vmatpush2.msra.mxu0 0.0
    %271 = vmatprep.subr.mxu0 0.0
    %272 = vmatpush2.msra.mxu0 0.0
    %273 = vmatprep.subr.mxu0 0.0
    %274 = vmatpush2.msra.mxu0 0.0
    %275 = vmatprep.subr.mxu0 0.0
    %276 = vmatpush2.msra.mxu0 0.0
    %277 = vmatprep.subr.mxu0 0.0
    %278 = vmatpush2.msra.mxu0 0.0
    %279 = vmatprep.subr.mxu0 0.0
    %280 = vmatpush2.msra.mxu0 0.0
    %281 = vmatprep.subr.mxu0 0.0
    %282 = vmatpush2.msra.mxu0 0.0
    %283 = vmatprep.subr.mxu0 0.0
    %284 = vmatpush2.msra.mxu0 0.0
    %285 = vmatprep.subr.mxu0 0.0
    %286 = vmatpush2.msra.mxu0 0.0
    %287 = vmatprep.subr.mxu0 0.0
    %288 = vmatpush2.msra.mxu0 0.0
    %289 = vmatprep.subr.mxu0 0.0
    %290 = vmatpush2.msra.mxu0 0.0
    %291 = vmatprep.subr.mxu0 0.0
    %292 = vmatpush2.msra.mxu0 0.0
    %293 = vmatprep.subr.mxu0 0.0
    %294 = vmatpush2.msra.mxu0 0.0
    %295 = vmatprep.mubr.f32.mxu0 0.0
    %296 = vmatmul.mubr.f32.gmra.mxu0 %v226
    %v297 = vpop.f32.mrf.mxu0
    %v298 = vadd.f32 %v222, %v297
    %v299 = vpop.f32.mrf.mxu0
    %300 = vmatprep.mubr.f32.mxu0 0.0
    %301 = vmatmul.mubr.f32.gmra.mxu0 %v229
    %v302 = vpop.f32.mrf.mxu0
    %v303 = vadd.f32 %v222, %v302
    %v304 = vpop.f32.mrf.mxu0
    %305 = vdwg.mxu0
    %s306 = scalar_lea.vmem %s2, 16
    %v307 = vld [vmem:[%s306] sm:$0xff]
    %v308 = vld [vmem:[%s306 + $0x8] sm:$0xff]
    %s309 = scalar_lea.vmem [#allocation6], 1
    %v310 = vld [vmem:[%s309] sm:$0x1]
    %v312 = vlaneseq
    %v313 = vshrl.u32 %v312, 7
    %v314 = vsub.s32 0, %v313
    %v315 = vrot.slane %v310, %v314
    %317 = vmatprep.subr.mxu0 0.0
    %318 = vmatpush1.msra.mxu0 0.0
    %319 = vmatprep.subr.mxu0 0.0
    %320 = vmatpush1.msra.mxu0 0.0
    %321 = vmatprep.subr.mxu0 0.0
    %322 = vmatpush1.msra.mxu0 0.0
    %323 = vmatprep.subr.mxu0 0.0
    %324 = vmatpush1.msra.mxu0 0.0
    %325 = vmatprep.subr.mxu0 0.0
    %326 = vmatpush1.msra.mxu0 0.0
    %327 = vmatprep.subr.mxu0 0.0
    %328 = vmatpush1.msra.mxu0 0.0
    %329 = vmatprep.subr.mxu0 0.0
    %330 = vmatpush1.msra.mxu0 0.0
    %331 = vmatprep.subr.mxu0 0.0
    %332 = vmatpush1.msra.mxu0 0.0
    %333 = vmatprep.subr.mxu0 0.0
    %334 = vmatpush1.msra.mxu0 0.0
    %335 = vmatprep.subr.mxu0 0.0
    %336 = vmatpush1.msra.mxu0 0.0
    %337 = vmatprep.subr.mxu0 0.0
    %338 = vmatpush1.msra.mxu0 0.0
    %339 = vmatprep.subr.mxu0 0.0
    %340 = vmatpush1.msra.mxu0 0.0
    %341 = vmatprep.subr.mxu0 0.0
    %342 = vmatpush1.msra.mxu0 0.0
    %343 = vmatprep.subr.mxu0 0.0
    %344 = vmatpush1.msra.mxu0 0.0
    %345 = vmatprep.subr.mxu0 0.0
    %346 = vmatpush1.msra.mxu0 %v308
    %347 = vmatprep.subr.mxu0 0.0
    %348 = vmatpush1.msra.mxu0 %v307
    %349 = vmatprep.subr.mxu0 0.0
    %350 = vmatpush2.msra.mxu0 0.0
    %351 = vmatprep.subr.mxu0 0.0
    %352 = vmatpush2.msra.mxu0 0.0
    %353 = vmatprep.subr.mxu0 0.0
    %354 = vmatpush2.msra.mxu0 0.0
    %355 = vmatprep.subr.mxu0 0.0
    %356 = vmatpush2.msra.mxu0 0.0
    %357 = vmatprep.subr.mxu0 0.0
    %358 = vmatpush2.msra.mxu0 0.0
    %359 = vmatprep.subr.mxu0 0.0
    %360 = vmatpush2.msra.mxu0 0.0
    %361 = vmatprep.subr.mxu0 0.0
    %362 = vmatpush2.msra.mxu0 0.0
    %363 = vmatprep.subr.mxu0 0.0
    %364 = vmatpush2.msra.mxu0 0.0
    %365 = vmatprep.subr.mxu0 0.0
    %366 = vmatpush2.msra.mxu0 0.0
    %367 = vmatprep.subr.mxu0 0.0
    %368 = vmatpush2.msra.mxu0 0.0
    %369 = vmatprep.subr.mxu0 0.0
    %370 = vmatpush2.msra.mxu0 0.0
    %371 = vmatprep.subr.mxu0 0.0
    %372 = vmatpush2.msra.mxu0 0.0
    %373 = vmatprep.subr.mxu0 0.0
    %374 = vmatpush2.msra.mxu0 0.0
    %375 = vmatprep.subr.mxu0 0.0
    %376 = vmatpush2.msra.mxu0 0.0
    %377 = vmatprep.subr.mxu0 0.0
    %378 = vmatpush2.msra.mxu0 0.0
    %379 = vmatprep.subr.mxu0 0.0
    %380 = vmatpush2.msra.mxu0 0.0
    %381 = vmatprep.mubr.f32.mxu0 0.0
    %382 = vmatmul.mubr.f32.gmra.mxu0 %v226
    %v383 = vpop.f32.mrf.mxu0
    %v384 = vadd.f32 %v315, %v383
    %v385 = vpop.f32.mrf.mxu0
    %386 = vmatprep.mubr.f32.mxu0 0.0
    %387 = vmatmul.mubr.f32.gmra.mxu0 %v229
    %v388 = vpop.f32.mrf.mxu0
    %v389 = vadd.f32 %v315, %v388
    %v390 = vpop.f32.mrf.mxu0
    %391 = vdwg.mxu0
    %v393 = vsel %vm121, 0.0, 0
    %395 = vmatprep.subr.mxu0 0.0
    %396 = vmatpush1.msra.mxu0 0.0
    %397 = vmatprep.subr.mxu0 0.0
    %398 = vmatpush1.msra.mxu0 0.0
    %399 = vmatprep.subr.mxu0 0.0
    %400 = vmatpush1.msra.mxu0 0.0
    %401 = vmatprep.subr.mxu0 0.0
    %402 = vmatpush1.msra.mxu0 0.0
    %403 = vmatprep.subr.mxu0 0.0
    %404 = vmatpush1.msra.mxu0 0.0
    %405 = vmatprep.subr.mxu0 0.0
    %406 = vmatpush1.msra.mxu0 0.0
    %407 = vmatprep.subr.mxu0 0.0
    %408 = vmatpush1.msra.mxu0 0.0
    %409 = vmatprep.subr.mxu0 0.0
    %410 = vmatpush1.msra.mxu0 0.0
    %411 = vmatprep.subr.mxu0 0.0
    %412 = vmatpush1.msra.mxu0 0.0
    %413 = vmatprep.subr.mxu0 0.0
    %414 = vmatpush1.msra.mxu0 0.0
    %415 = vmatprep.subr.mxu0 0.0
    %416 = vmatpush1.msra.mxu0 0.0
    %417 = vmatprep.subr.mxu0 0.0
    %418 = vmatpush1.msra.mxu0 0.0
    %419 = vmatprep.subr.mxu0 0.0
    %420 = vmatpush1.msra.mxu0 %v209
    %421 = vmatprep.subr.mxu0 0.0
    %422 = vmatpush1.msra.mxu0 %v208
    %423 = vmatprep.subr.mxu0 0.0
    %424 = vmatpush1.msra.mxu0 %v207
    %425 = vmatprep.subr.mxu0 0.0
    %426 = vmatpush1.msra.mxu0 %v206
    %427 = vmatprep.subr.mxu0 0.0
    %428 = vmatpush2.msra.mxu0 0.0
    %429 = vmatprep.subr.mxu0 0.0
    %430 = vmatpush2.msra.mxu0 0.0
    %431 = vmatprep.subr.mxu0 0.0
    %432 = vmatpush2.msra.mxu0 0.0
    %433 = vmatprep.subr.mxu0 0.0
    %434 = vmatpush2.msra.mxu0 0.0
    %435 = vmatprep.subr.mxu0 0.0
    %436 = vmatpush2.msra.mxu0 0.0
    %437 = vmatprep.subr.mxu0 0.0
    %438 = vmatpush2.msra.mxu0 0.0
    %439 = vmatprep.subr.mxu0 0.0
    %440 = vmatpush2.msra.mxu0 0.0
    %441 = vmatprep.subr.mxu0 0.0
    %442 = vmatpush2.msra.mxu0 0.0
    %443 = vmatprep.subr.mxu0 0.0
    %444 = vmatpush2.msra.mxu0 0.0
    %445 = vmatprep.subr.mxu0 0.0
    %446 = vmatpush2.msra.mxu0 0.0
    %447 = vmatprep.subr.mxu0 0.0
    %448 = vmatpush2.msra.mxu0 0.0
    %449 = vmatprep.subr.mxu0 0.0
    %450 = vmatpush2.msra.mxu0 0.0
    %451 = vmatprep.subr.mxu0 0.0
    %452 = vmatpush2.msra.mxu0 0.0
    %453 = vmatprep.subr.mxu0 0.0
    %454 = vmatpush2.msra.mxu0 0.0
    %455 = vmatprep.subr.mxu0 0.0
    %456 = vmatpush2.msra.mxu0 0.0
    %457 = vmatprep.subr.mxu0 0.0
    %458 = vmatpush2.msra.mxu0 0.0
    %459 = vmatprep.mubr.f32.mxu0 0.0
    %460 = vmatmul.mubr.f32.gmra.mxu0 %v393
    %v461 = vpop.f32.mrf.mxu0
    %v462 = vadd.f32 0.0, %v461
    %v463 = vpop.f32.mrf.mxu0
    %464 = vdwg.mxu0
    %v465 = vadd.f32 %v298, %v462
    %v466 = vxor.u32 %v465, 2147483648
    %v467 = vmul.f32 %v466, 1.442695
    %v468 = vpow.pop %v467
    %v469 = vadd.f32 %v468, 1.0
    %v470 = vrcp.pop %v469
    %v471 = vmul.f32 1.0, %v470
    %v472 = vtanh.pop %v465
    %v473 = vsel %vm205, 1, 0
    %vm474 = vcmp.eq.s32.totalorder %v473, 1
    %v475 = vsel %vm474, %v472, %v471
    %v476 = vmul.f32 %v475, 0.0
    %478 = vrot.lane.b32.xlu0 %v475, 64
    %v479 = vpop.permute.xlu0 %478
    %v481 = vmul.f32 %v475, %v479
    %483 = vrot.lane.b32.xlu0 %v481, 32
    %v484 = vpop.permute.xlu0 %483
    %v486 = vadd.f32 %v476, %v484
    %v487 = vtanh.pop %v486
    %489 = vrot.lane.b32.xlu0 %v487, 64
    %v490 = vpop.permute.xlu0 %489
    %v492 = vmul.f32 %v475, %v490
    %493 = vmatprep.subr.mxu0 0.0
    %494 = vmatpush1.msra.mxu0 0.0
    %495 = vmatprep.subr.mxu0 0.0
    %496 = vmatpush1.msra.mxu0 0.0
    %497 = vmatprep.subr.mxu0 0.0
    %498 = vmatpush1.msra.mxu0 0.0
    %499 = vmatprep.subr.mxu0 0.0
    %500 = vmatpush1.msra.mxu0 0.0
    %501 = vmatprep.subr.mxu0 0.0
    %502 = vmatpush1.msra.mxu0 0.0
    %503 = vmatprep.subr.mxu0 0.0
    %504 = vmatpush1.msra.mxu0 0.0
    %505 = vmatprep.subr.mxu0 0.0
    %506 = vmatpush1.msra.mxu0 0.0
    %507 = vmatprep.subr.mxu0 0.0
    %508 = vmatpush1.msra.mxu0 0.0
    %509 = vmatprep.subr.mxu0 0.0
    %510 = vmatpush1.msra.mxu0 0.0
    %511 = vmatprep.subr.mxu0 0.0
    %512 = vmatpush1.msra.mxu0 0.0
    %513 = vmatprep.subr.mxu0 0.0
    %514 = vmatpush1.msra.mxu0 0.0
    %515 = vmatprep.subr.mxu0 0.0
    %516 = vmatpush1.msra.mxu0 0.0
    %517 = vmatprep.subr.mxu0 0.0
    %518 = vmatpush1.msra.mxu0 %v214
    %519 = vmatprep.subr.mxu0 0.0
    %520 = vmatpush1.msra.mxu0 %v213
    %521 = vmatprep.subr.mxu0 0.0
    %522 = vmatpush1.msra.mxu0 %v212
    %523 = vmatprep.subr.mxu0 0.0
    %524 = vmatpush1.msra.mxu0 %v211
    %525 = vmatprep.subr.mxu0 0.0
    %526 = vmatpush2.msra.mxu0 0.0
    %527 = vmatprep.subr.mxu0 0.0
    %528 = vmatpush2.msra.mxu0 0.0
    %529 = vmatprep.subr.mxu0 0.0
    %530 = vmatpush2.msra.mxu0 0.0
    %531 = vmatprep.subr.mxu0 0.0
    %532 = vmatpush2.msra.mxu0 0.0
    %533 = vmatprep.subr.mxu0 0.0
    %534 = vmatpush2.msra.mxu0 0.0
    %535 = vmatprep.subr.mxu0 0.0
    %536 = vmatpush2.msra.mxu0 0.0
    %537 = vmatprep.subr.mxu0 0.0
    %538 = vmatpush2.msra.mxu0 0.0
    %539 = vmatprep.subr.mxu0 0.0
    %540 = vmatpush2.msra.mxu0 0.0
    %541 = vmatprep.subr.mxu0 0.0
    %542 = vmatpush2.msra.mxu0 0.0
    %543 = vmatprep.subr.mxu0 0.0
    %544 = vmatpush2.msra.mxu0 0.0
    %545 = vmatprep.subr.mxu0 0.0
    %546 = vmatpush2.msra.mxu0 0.0
    %547 = vmatprep.subr.mxu0 0.0
    %548 = vmatpush2.msra.mxu0 0.0
    %549 = vmatprep.subr.mxu0 0.0
    %550 = vmatpush2.msra.mxu0 0.0
    %551 = vmatprep.subr.mxu0 0.0
    %552 = vmatpush2.msra.mxu0 0.0
    %553 = vmatprep.subr.mxu0 0.0
    %554 = vmatpush2.msra.mxu0 0.0
    %555 = vmatprep.subr.mxu0 0.0
    %556 = vmatpush2.msra.mxu0 0.0
    %557 = vmatprep.mubr.f32.mxu0 0.0
    %558 = vmatmul.mubr.f32.gmra.mxu0 %v393
    %v559 = vpop.f32.mrf.mxu0
    %v560 = vadd.f32 0.0, %v559
    %v561 = vpop.f32.mrf.mxu0
    %562 = vdwg.mxu0
    %v564 = vrot.slane %v560, 2
    %v566 = vadd.f32 %v389, %v564
    %v567 = vxor.u32 %v566, 2147483648
    %v568 = vmul.f32 %v567, 1.442695
    %v569 = vpow.pop %v568
    %v570 = vadd.f32 %v569, 1.0
    %v571 = vrcp.pop %v570
    %v572 = vmul.f32 1.0, %v571
    %v573 = vtanh.pop %v566
    %v574 = vsel %vm474, %v573, %v572
    %v575 = vmul.f32 %v574, 0.0
    %577 = vrot.lane.b32.xlu0 %v574, 64
    %v578 = vpop.permute.xlu0 %577
    %v580 = vmul.f32 %v574, %v578
    %582 = vrot.lane.b32.xlu0 %v580, 32
    %v583 = vpop.permute.xlu0 %582
    %v585 = vadd.f32 %v575, %v583
    %v586 = vtanh.pop %v585
    %588 = vrot.lane.b32.xlu0 %v586, 64
    %v589 = vpop.permute.xlu0 %588
    %v591 = vmul.f32 %v574, %v589
    %593 = vrot.lane.b32.xlu0 %v492, 32
    %v594 = vpop.permute.xlu0 %593
    %vm596 = vcmask 254976
    %597 = vst.msk [vmem:[#allocation2] sm:$0x3] %vm596, %v594
    %599 = vrot.lane.b32.xlu0 %v591, 64
    %v600 = vpop.permute.xlu0 %599
    %vm602 = vcmask 523526
    %603 = vst.msk [vmem:[#allocation2 + $0x8] sm:$0xc0] %vm602, %v600
    %v604 = vsel %vm121, %v594, 0
    %606 = vmatprep.subr.mxu0 0.0
    %607 = vmatpush1.msra.mxu0 0.0
    %608 = vmatprep.subr.mxu0 0.0
    %609 = vmatpush1.msra.mxu0 0.0
    %610 = vmatprep.subr.mxu0 0.0
    %611 = vmatpush1.msra.mxu0 0.0
    %612 = vmatprep.subr.mxu0 0.0
    %613 = vmatpush1.msra.mxu0 0.0
    %614 = vmatprep.subr.mxu0 0.0
    %615 = vmatpush1.msra.mxu0 0.0
    %616 = vmatprep.subr.mxu0 0.0
    %617 = vmatpush1.msra.mxu0 0.0
    %618 = vmatprep.subr.mxu0 0.0
    %619 = vmatpush1.msra.mxu0 0.0
    %620 = vmatprep.subr.mxu0 0.0
    %621 = vmatpush1.msra.mxu0 0.0
    %622 = vmatprep.subr.mxu0 0.0
    %623 = vmatpush1.msra.mxu0 0.0
    %624 = vmatprep.subr.mxu0 0.0
    %625 = vmatpush1.msra.mxu0 0.0
    %626 = vmatprep.subr.mxu0 0.0
    %627 = vmatpush1.msra.mxu0 0.0
    %628 = vmatprep.subr.mxu0 0.0
    %629 = vmatpush1.msra.mxu0 0.0
    %630 = vmatprep.subr.mxu0 0.0
    %631 = vmatpush1.msra.mxu0 %v209
    %632 = vmatprep.subr.mxu0 0.0
    %633 = vmatpush1.msra.mxu0 %v208
    %634 = vmatprep.subr.mxu0 0.0
    %635 = vmatpush1.msra.mxu0 %v207
    %636 = vmatprep.subr.mxu0 0.0
    %637 = vmatpush1.msra.mxu0 %v206
    %638 = vmatprep.subr.mxu0 0.0
    %639 = vmatpush2.msra.mxu0 0.0
    %640 = vmatprep.subr.mxu0 0.0
    %641 = vmatpush2.msra.mxu0 0.0
    %642 = vmatprep.subr.mxu0 0.0
    %643 = vmatpush2.msra.mxu0 0.0
    %644 = vmatprep.subr.mxu0 0.0
    %645 = vmatpush2.msra.mxu0 0.0
    %646 = vmatprep.subr.mxu0 0.0
    %647 = vmatpush2.msra.mxu0 0.0
    %648 = vmatprep.subr.mxu0 0.0
    %649 = vmatpush2.msra.mxu0 0.0
    %650 = vmatprep.subr.mxu0 0.0
    %651 = vmatpush2.msra.mxu0 0.0
    %652 = vmatprep.subr.mxu0 0.0
    %653 = vmatpush2.msra.mxu0 0.0
    %654 = vmatprep.subr.mxu0 0.0
    %655 = vmatpush2.msra.mxu0 0.0
    %656 = vmatprep.subr.mxu0 0.0
    %657 = vmatpush2.msra.mxu0 0.0
    %658 = vmatprep.subr.mxu0 0.0
    %659 = vmatpush2.msra.mxu0 0.0
    %660 = vmatprep.subr.mxu0 0.0
    %661 = vmatpush2.msra.mxu0 0.0
    %662 = vmatprep.subr.mxu0 0.0
    %663 = vmatpush2.msra.mxu0 0.0
    %664 = vmatprep.subr.mxu0 0.0
    %665 = vmatpush2.msra.mxu0 0.0
    %666 = vmatprep.subr.mxu0 0.0
    %667 = vmatpush2.msra.mxu0 0.0
    %668 = vmatprep.subr.mxu0 0.0
    %669 = vmatpush2.msra.mxu0 0.0
    %670 = vmatprep.mubr.f32.mxu0 0.0
    %671 = vmatmul.mubr.f32.gmra.mxu0 %v604
    %v672 = vpop.f32.mrf.mxu0
    %v673 = vadd.f32 0.0, %v672
    %v674 = vpop.f32.mrf.mxu0
    %675 = vdwg.mxu0
    %v677 = vrot.slane %v673, 6
    %v679 = vadd.f32 %v298, %v677
    %v680 = vxor.u32 %v679, 2147483648
    %v681 = vmul.f32 %v680, 1.442695
    %v682 = vpow.pop %v681
    %v683 = vadd.f32 %v682, 1.0
    %v684 = vrcp.pop %v683
    %v685 = vmul.f32 1.0, %v684
    %v686 = vtanh.pop %v679
    %v687 = vsel %vm474, %v686, %v685
    %v689 = vrot.slane %v486, 6
    %v691 = vmul.f32 %v687, %v689
    %693 = vrot.lane.b32.xlu0 %v687, 64
    %v694 = vpop.permute.xlu0 %693
    %v696 = vmul.f32 %v687, %v694
    %698 = vrot.lane.b32.xlu0 %v696, 32
    %v699 = vpop.permute.xlu0 %698
    %v701 = vadd.f32 %v691, %v699
    %v702 = vtanh.pop %v701
    %704 = vrot.lane.b32.xlu0 %v702, 64
    %v705 = vpop.permute.xlu0 %704
    %v707 = vmul.f32 %v687, %v705
    %v708 = vrot.slane %v591, 6
    %709 = vrot.lane.b32.xlu0 %v708, 32
    %v710 = vpop.permute.xlu0 %709
    %v711 = vsel %vm121, %v710, 0
    %713 = vmatprep.subr.mxu0 0.0
    %714 = vmatpush1.msra.mxu0 0.0
    %715 = vmatprep.subr.mxu0 0.0
    %716 = vmatpush1.msra.mxu0 0.0
    %717 = vmatprep.subr.mxu0 0.0
    %718 = vmatpush1.msra.mxu0 0.0
    %719 = vmatprep.subr.mxu0 0.0
    %720 = vmatpush1.msra.mxu0 0.0
    %721 = vmatprep.subr.mxu0 0.0
    %722 = vmatpush1.msra.mxu0 0.0
    %723 = vmatprep.subr.mxu0 0.0
    %724 = vmatpush1.msra.mxu0 0.0
    %725 = vmatprep.subr.mxu0 0.0
    %726 = vmatpush1.msra.mxu0 0.0
    %727 = vmatprep.subr.mxu0 0.0
    %728 = vmatpush1.msra.mxu0 0.0
    %729 = vmatprep.subr.mxu0 0.0
    %730 = vmatpush1.msra.mxu0 0.0
    %731 = vmatprep.subr.mxu0 0.0
    %732 = vmatpush1.msra.mxu0 0.0
    %733 = vmatprep.subr.mxu0 0.0
    %734 = vmatpush1.msra.mxu0 0.0
    %735 = vmatprep.subr.mxu0 0.0
    %736 = vmatpush1.msra.mxu0 0.0
    %737 = vmatprep.subr.mxu0 0.0
    %738 = vmatpush1.msra.mxu0 %v214
    %739 = vmatprep.subr.mxu0 0.0
    %740 = vmatpush1.msra.mxu0 %v213
    %741 = vmatprep.subr.mxu0 0.0
    %742 = vmatpush1.msra.mxu0 %v212
    %743 = vmatprep.subr.mxu0 0.0
    %744 = vmatpush1.msra.mxu0 %v211
    %745 = vmatprep.subr.mxu0 0.0
    %746 = vmatpush2.msra.mxu0 0.0
    %747 = vmatprep.subr.mxu0 0.0
    %748 = vmatpush2.msra.mxu0 0.0
    %749 = vmatprep.subr.mxu0 0.0
    %750 = vmatpush2.msra.mxu0 0.0
    %751 = vmatprep.subr.mxu0 0.0
    %752 = vmatpush2.msra.mxu0 0.0
    %753 = vmatprep.subr.mxu0 0.0
    %754 = vmatpush2.msra.mxu0 0.0
    %755 = vmatprep.subr.mxu0 0.0
    %756 = vmatpush2.msra.mxu0 0.0
    %757 = vmatprep.subr.mxu0 0.0
    %758 = vmatpush2.msra.mxu0 0.0
    %759 = vmatprep.subr.mxu0 0.0
    %760 = vmatpush2.msra.mxu0 0.0
    %761 = vmatprep.subr.mxu0 0.0
    %762 = vmatpush2.msra.mxu0 0.0
    %763 = vmatprep.subr.mxu0 0.0
    %764 = vmatpush2.msra.mxu0 0.0
    %765 = vmatprep.subr.mxu0 0.0
    %766 = vmatpush2.msra.mxu0 0.0
    %767 = vmatprep.subr.mxu0 0.0
    %768 = vmatpush2.msra.mxu0 0.0
    %769 = vmatprep.subr.mxu0 0.0
    %770 = vmatpush2.msra.mxu0 0.0
    %771 = vmatprep.subr.mxu0 0.0
    %772 = vmatpush2.msra.mxu0 0.0
    %773 = vmatprep.subr.mxu0 0.0
    %774 = vmatpush2.msra.mxu0 0.0
    %775 = vmatprep.subr.mxu0 0.0
    %776 = vmatpush2.msra.mxu0 0.0
    %777 = vmatprep.mubr.f32.mxu0 0.0
    %778 = vmatmul.mubr.f32.gmra.mxu0 %v711
    %v779 = vpop.f32.mrf.mxu0
    %v780 = vadd.f32 0.0, %v779
    %v781 = vpop.f32.mrf.mxu0
    %782 = vdwg.mxu0
    %v784 = vrot.slane %v780, 4
    %v786 = vadd.f32 %v389, %v784
    %v787 = vxor.u32 %v786, 2147483648
    %v788 = vmul.f32 %v787, 1.442695
    %v789 = vpow.pop %v788
    %v790 = vadd.f32 %v789, 1.0
    %v791 = vrcp.pop %v790
    %v792 = vmul.f32 1.0, %v791
    %v793 = vtanh.pop %v786
    %v794 = vsel %vm474, %v793, %v792
    %v796 = vrot.slane %v585, 2
    %v798 = vmul.f32 %v794, %v796
    %800 = vrot.lane.b32.xlu0 %v794, 64
    %v801 = vpop.permute.xlu0 %800
    %v803 = vmul.f32 %v794, %v801
    %805 = vrot.lane.b32.xlu0 %v803, 32
    %v806 = vpop.permute.xlu0 %805
    %v808 = vadd.f32 %v798, %v806
    %v809 = vtanh.pop %v808
    %811 = vrot.lane.b32.xlu0 %v809, 64
    %v812 = vpop.permute.xlu0 %811
    %v814 = vmul.f32 %v794, %v812
    %816 = vrot.lane.b32.xlu0 %v707, 32
    %v817 = vpop.permute.xlu0 %816
    %vm819 = vcmask 257026
    %820 = vst.msk [vmem:[#allocation2] sm:$0xc] %vm819, %v817
    %822 = vrot.lane.b32.xlu0 %v814, 64
    %v823 = vpop.permute.xlu0 %822
    %vm825 = vcmask 521476
    %826 = vst.msk [vmem:[#allocation2 + $0x8] sm:$0x30] %vm825, %v823
    %v827 = vrot.slane %v707, 2
    %828 = vrot.lane.b32.xlu0 %v827, 32
    %v829 = vpop.permute.xlu0 %828
    %v830 = vsel %vm121, %v829, 0
    %832 = vmatprep.subr.mxu0 0.0
    %833 = vmatpush1.msra.mxu0 0.0
    %834 = vmatprep.subr.mxu0 0.0
    %835 = vmatpush1.msra.mxu0 0.0
    %836 = vmatprep.subr.mxu0 0.0
    %837 = vmatpush1.msra.mxu0 0.0
    %838 = vmatprep.subr.mxu0 0.0
    %839 = vmatpush1.msra.mxu0 0.0
    %840 = vmatprep.subr.mxu0 0.0
    %841 = vmatpush1.msra.mxu0 0.0
    %842 = vmatprep.subr.mxu0 0.0
    %843 = vmatpush1.msra.mxu0 0.0
    %844 = vmatprep.subr.mxu0 0.0
    %845 = vmatpush1.msra.mxu0 0.0
    %846 = vmatprep.subr.mxu0 0.0
    %847 = vmatpush1.msra.mxu0 0.0
    %848 = vmatprep.subr.mxu0 0.0
    %849 = vmatpush1.msra.mxu0 0.0
    %850 = vmatprep.subr.mxu0 0.0
    %851 = vmatpush1.msra.mxu0 0.0
    %852 = vmatprep.subr.mxu0 0.0
    %853 = vmatpush1.msra.mxu0 0.0
    %854 = vmatprep.subr.mxu0 0.0
    %855 = vmatpush1.msra.mxu0 0.0
    %856 = vmatprep.subr.mxu0 0.0
    %857 = vmatpush1.msra.mxu0 %v209
    %858 = vmatprep.subr.mxu0 0.0
    %859 = vmatpush1.msra.mxu0 %v208
    %860 = vmatprep.subr.mxu0 0.0
    %861 = vmatpush1.msra.mxu0 %v207
    %862 = vmatprep.subr.mxu0 0.0
    %863 = vmatpush1.msra.mxu0 %v206
    %864 = vmatprep.subr.mxu0 0.0
    %865 = vmatpush2.msra.mxu0 0.0
    %866 = vmatprep.subr.mxu0 0.0
    %867 = vmatpush2.msra.mxu0 0.0
    %868 = vmatprep.subr.mxu0 0.0
    %869 = vmatpush2.msra.mxu0 0.0
    %870 = vmatprep.subr.mxu0 0.0
    %871 = vmatpush2.msra.mxu0 0.0
    %872 = vmatprep.subr.mxu0 0.0
    %873 = vmatpush2.msra.mxu0 0.0
    %874 = vmatprep.subr.mxu0 0.0
    %875 = vmatpush2.msra.mxu0 0.0
    %876 = vmatprep.subr.mxu0 0.0
    %877 = vmatpush2.msra.mxu0 0.0
    %878 = vmatprep.subr.mxu0 0.0
    %879 = vmatpush2.msra.mxu0 0.0
    %880 = vmatprep.subr.mxu0 0.0
    %881 = vmatpush2.msra.mxu0 0.0
    %882 = vmatprep.subr.mxu0 0.0
    %883 = vmatpush2.msra.mxu0 0.0
    %884 = vmatprep.subr.mxu0 0.0
    %885 = vmatpush2.msra.mxu0 0.0
    %886 = vmatprep.subr.mxu0 0.0
    %887 = vmatpush2.msra.mxu0 0.0
    %888 = vmatprep.subr.mxu0 0.0
    %889 = vmatpush2.msra.mxu0 0.0
    %890 = vmatprep.subr.mxu0 0.0
    %891 = vmatpush2.msra.mxu0 0.0
    %892 = vmatprep.subr.mxu0 0.0
    %893 = vmatpush2.msra.mxu0 0.0
    %894 = vmatprep.subr.mxu0 0.0
    %895 = vmatpush2.msra.mxu0 0.0
    %896 = vmatprep.mubr.f32.mxu0 0.0
    %897 = vmatmul.mubr.f32.gmra.mxu0 %v830
    %v898 = vpop.f32.mrf.mxu0
    %v899 = vadd.f32 0.0, %v898
    %v900 = vpop.f32.mrf.mxu0
    %901 = vdwg.mxu0
    %v903 = vrot.slane %v899, 4
    %v905 = vadd.f32 %v298, %v903
    %v906 = vxor.u32 %v905, 2147483648
    %v907 = vmul.f32 %v906, 1.442695
    %v908 = vpow.pop %v907
    %v909 = vadd.f32 %v908, 1.0
    %v910 = vrcp.pop %v909
    %v911 = vmul.f32 1.0, %v910
    %v912 = vtanh.pop %v905
    %v913 = vsel %vm474, %v912, %v911
    %v915 = vrot.slane %v701, 6
    %v917 = vmul.f32 %v913, %v915
    %919 = vrot.lane.b32.xlu0 %v913, 64
    %v920 = vpop.permute.xlu0 %919
    %v922 = vmul.f32 %v913, %v920
    %924 = vrot.lane.b32.xlu0 %v922, 32
    %v925 = vpop.permute.xlu0 %924
    %v927 = vadd.f32 %v917, %v925
    %v928 = vtanh.pop %v927
    %930 = vrot.lane.b32.xlu0 %v928, 64
    %v931 = vpop.permute.xlu0 %930
    %v933 = vmul.f32 %v913, %v931
    %v934 = vrot.slane %v814, 4
    %935 = vrot.lane.b32.xlu0 %v934, 32
    %v936 = vpop.permute.xlu0 %935
    %v937 = vsel %vm121, %v936, 0
    %939 = vmatprep.subr.mxu0 0.0
    %940 = vmatpush1.msra.mxu0 0.0
    %941 = vmatprep.subr.mxu0 0.0
    %942 = vmatpush1.msra.mxu0 0.0
    %943 = vmatprep.subr.mxu0 0.0
    %944 = vmatpush1.msra.mxu0 0.0
    %945 = vmatprep.subr.mxu0 0.0
    %946 = vmatpush1.msra.mxu0 0.0
    %947 = vmatprep.subr.mxu0 0.0
    %948 = vmatpush1.msra.mxu0 0.0
    %949 = vmatprep.subr.mxu0 0.0
    %950 = vmatpush1.msra.mxu0 0.0
    %951 = vmatprep.subr.mxu0 0.0
    %952 = vmatpush1.msra.mxu0 0.0
    %953 = vmatprep.subr.mxu0 0.0
    %954 = vmatpush1.msra.mxu0 0.0
    %955 = vmatprep.subr.mxu0 0.0
    %956 = vmatpush1.msra.mxu0 0.0
    %957 = vmatprep.subr.mxu0 0.0
    %958 = vmatpush1.msra.mxu0 0.0
    %959 = vmatprep.subr.mxu0 0.0
    %960 = vmatpush1.msra.mxu0 0.0
    %961 = vmatprep.subr.mxu0 0.0
    %962 = vmatpush1.msra.mxu0 0.0
    %963 = vmatprep.subr.mxu0 0.0
    %964 = vmatpush1.msra.mxu0 %v214
    %965 = vmatprep.subr.mxu0 0.0
    %966 = vmatpush1.msra.mxu0 %v213
    %967 = vmatprep.subr.mxu0 0.0
    %968 = vmatpush1.msra.mxu0 %v212
    %969 = vmatprep.subr.mxu0 0.0
    %970 = vmatpush1.msra.mxu0 %v211
    %971 = vmatprep.subr.mxu0 0.0
    %972 = vmatpush2.msra.mxu0 0.0
    %973 = vmatprep.subr.mxu0 0.0
    %974 = vmatpush2.msra.mxu0 0.0
    %975 = vmatprep.subr.mxu0 0.0
    %976 = vmatpush2.msra.mxu0 0.0
    %977 = vmatprep.subr.mxu0 0.0
    %978 = vmatpush2.msra.mxu0 0.0
    %979 = vmatprep.subr.mxu0 0.0
    %980 = vmatpush2.msra.mxu0 0.0
    %981 = vmatprep.subr.mxu0 0.0
    %982 = vmatpush2.msra.mxu0 0.0
    %983 = vmatprep.subr.mxu0 0.0
    %984 = vmatpush2.msra.mxu0 0.0
    %985 = vmatprep.subr.mxu0 0.0
    %986 = vmatpush2.msra.mxu0 0.0
    %987 = vmatprep.subr.mxu0 0.0
    %988 = vmatpush2.msra.mxu0 0.0
    %989 = vmatprep.subr.mxu0 0.0
    %990 = vmatpush2.msra.mxu0 0.0
    %991 = vmatprep.subr.mxu0 0.0
    %992 = vmatpush2.msra.mxu0 0.0
    %993 = vmatprep.subr.mxu0 0.0
    %994 = vmatpush2.msra.mxu0 0.0
    %995 = vmatprep.subr.mxu0 0.0
    %996 = vmatpush2.msra.mxu0 0.0
    %997 = vmatprep.subr.mxu0 0.0
    %998 = vmatpush2.msra.mxu0 0.0
    %999 = vmatprep.subr.mxu0 0.0
    %1000 = vmatpush2.msra.mxu0 0.0
    %1001 = vmatprep.subr.mxu0 0.0
    %1002 = vmatpush2.msra.mxu0 0.0
    %1003 = vmatprep.mubr.f32.mxu0 0.0
    %1004 = vmatmul.mubr.f32.gmra.mxu0 %v937
    %v1005 = vpop.f32.mrf.mxu0
    %v1006 = vadd.f32 0.0, %v1005
    %v1007 = vpop.f32.mrf.mxu0
    %1008 = vdwg.mxu0
    %v1010 = vrot.slane %v1006, 6
    %v1012 = vadd.f32 %v389, %v1010
    %v1013 = vxor.u32 %v1012, 2147483648
    %v1014 = vmul.f32 %v1013, 1.442695
    %v1015 = vpow.pop %v1014
    %v1016 = vadd.f32 %v1015, 1.0
    %v1017 = vrcp.pop %v1016
    %v1018 = vmul.f32 1.0, %v1017
    %v1019 = vtanh.pop %v1012
    %v1020 = vsel %vm474, %v1019, %v1018
    %v1022 = vrot.slane %v808, 2
    %v1024 = vmul.f32 %v1020, %v1022
    %1026 = vrot.lane.b32.xlu0 %v1020, 64
    %v1027 = vpop.permute.xlu0 %1026
    %v1029 = vmul.f32 %v1020, %v1027
    %1031 = vrot.lane.b32.xlu0 %v1029, 32
    %v1032 = vpop.permute.xlu0 %1031
    %v1034 = vadd.f32 %v1024, %v1032
    %v1035 = vtanh.pop %v1034
    %1037 = vrot.lane.b32.xlu0 %v1035, 64
    %v1038 = vpop.permute.xlu0 %1037
    %v1040 = vmul.f32 %v1020, %v1038
    %1042 = vrot.lane.b32.xlu0 %v933, 32
    %v1043 = vpop.permute.xlu0 %1042
    %vm1045 = vcmask 259076
    %1046 = vst.msk [vmem:[#allocation2] sm:$0x30] %vm1045, %v1043
    %1048 = vrot.lane.b32.xlu0 %v1040, 64
    %v1049 = vpop.permute.xlu0 %1048
    %vm1051 = vcmask 519426
    %1052 = vst.msk [vmem:[#allocation2 + $0x8] sm:$0xc] %vm1051, %v1049
    %v1053 = vrot.slane %v933, 4
    %1054 = vrot.lane.b32.xlu0 %v1053, 32
    %v1055 = vpop.permute.xlu0 %1054
    %v1056 = vsel %vm121, %v1055, 0
    %1058 = vmatprep.subr.mxu0 0.0
    %1059 = vmatpush1.msra.mxu0 0.0
    %1060 = vmatprep.subr.mxu0 0.0
    %1061 = vmatpush1.msra.mxu0 0.0
    %1062 = vmatprep.subr.mxu0 0.0
    %1063 = vmatpush1.msra.mxu0 0.0
    %1064 = vmatprep.subr.mxu0 0.0
    %1065 = vmatpush1.msra.mxu0 0.0
    %1066 = vmatprep.subr.mxu0 0.0
    %1067 = vmatpush1.msra.mxu0 0.0
    %1068 = vmatprep.subr.mxu0 0.0
    %1069 = vmatpush1.msra.mxu0 0.0
    %1070 = vmatprep.subr.mxu0 0.0
    %1071 = vmatpush1.msra.mxu0 0.0
    %1072 = vmatprep.subr.mxu0 0.0
    %1073 = vmatpush1.msra.mxu0 0.0
    %1074 = vmatprep.subr.mxu0 0.0
    %1075 = vmatpush1.msra.mxu0 0.0
    %1076 = vmatprep.subr.mxu0 0.0
    %1077 = vmatpush1.msra.mxu0 0.0
    %1078 = vmatprep.subr.mxu0 0.0
    %1079 = vmatpush1.msra.mxu0 0.0
    %1080 = vmatprep.subr.mxu0 0.0
    %1081 = vmatpush1.msra.mxu0 0.0
    %1082 = vmatprep.subr.mxu0 0.0
    %1083 = vmatpush1.msra.mxu0 %v209
    %1084 = vmatprep.subr.mxu0 0.0
    %1085 = vmatpush1.msra.mxu0 %v208
    %1086 = vmatprep.subr.mxu0 0.0
    %1087 = vmatpush1.msra.mxu0 %v207
    %1088 = vmatprep.subr.mxu0 0.0
    %1089 = vmatpush1.msra.mxu0 %v206
    %1090 = vmatprep.subr.mxu0 0.0
    %1091 = vmatpush2.msra.mxu0 0.0
    %1092 = vmatprep.subr.mxu0 0.0
    %1093 = vmatpush2.msra.mxu0 0.0
    %1094 = vmatprep.subr.mxu0 0.0
    %1095 = vmatpush2.msra.mxu0 0.0
    %1096 = vmatprep.subr.mxu0 0.0
    %1097 = vmatpush2.msra.mxu0 0.0
    %1098 = vmatprep.subr.mxu0 0.0
    %1099 = vmatpush2.msra.mxu0 0.0
    %1100 = vmatprep.subr.mxu0 0.0
    %1101 = vmatpush2.msra.mxu0 0.0
    %1102 = vmatprep.subr.mxu0 0.0
    %1103 = vmatpush2.msra.mxu0 0.0
    %1104 = vmatprep.subr.mxu0 0.0
    %1105 = vmatpush2.msra.mxu0 0.0
    %1106 = vmatprep.subr.mxu0 0.0
    %1107 = vmatpush2.msra.mxu0 0.0
    %1108 = vmatprep.subr.mxu0 0.0
    %1109 = vmatpush2.msra.mxu0 0.0
    %1110 = vmatprep.subr.mxu0 0.0
    %1111 = vmatpush2.msra.mxu0 0.0
    %1112 = vmatprep.subr.mxu0 0.0
    %1113 = vmatpush2.msra.mxu0 0.0
    %1114 = vmatprep.subr.mxu0 0.0
    %1115 = vmatpush2.msra.mxu0 0.0
    %1116 = vmatprep.subr.mxu0 0.0
    %1117 = vmatpush2.msra.mxu0 0.0
    %1118 = vmatprep.subr.mxu0 0.0
    %1119 = vmatpush2.msra.mxu0 0.0
    %1120 = vmatprep.subr.mxu0 0.0
    %1121 = vmatpush2.msra.mxu0 0.0
    %1122 = vmatprep.mubr.f32.mxu0 0.0
    %1123 = vmatmul.mubr.f32.gmra.mxu0 %v1056
    %v1124 = vpop.f32.mrf.mxu0
    %v1125 = vadd.f32 0.0, %v1124
    %v1126 = vpop.f32.mrf.mxu0
    %1127 = vdwg.mxu0
    %v1129 = vrot.slane %v1125, 2
    %v1131 = vadd.f32 %v298, %v1129
    %v1132 = vxor.u32 %v1131, 2147483648
    %v1133 = vmul.f32 %v1132, 1.442695
    %v1134 = vpow.pop %v1133
    %v1135 = vadd.f32 %v1134, 1.0
    %v1136 = vrcp.pop %v1135
    %v1137 = vmul.f32 1.0, %v1136
    %v1138 = vtanh.pop %v1131
    %v1139 = vsel %vm474, %v1138, %v1137
    %v1141 = vrot.slane %v927, 6
    %v1143 = vmul.f32 %v1139, %v1141
    %1145 = vrot.lane.b32.xlu0 %v1139, 64
    %v1146 = vpop.permute.xlu0 %1145
    %v1148 = vmul.f32 %v1139, %v1146
    %1150 = vrot.lane.b32.xlu0 %v1148, 32
    %v1151 = vpop.permute.xlu0 %1150
    %v1153 = vadd.f32 %v1143, %v1151
    %v1154 = vtanh.pop %v1153
    %1156 = vrot.lane.b32.xlu0 %v1154, 64
    %v1157 = vpop.permute.xlu0 %1156
    %v1159 = vmul.f32 %v1139, %v1157
    %v1160 = vrot.slane %v1040, 2
    %1161 = vrot.lane.b32.xlu0 %v1160, 32
    %v1162 = vpop.permute.xlu0 %1161
    %v1163 = vsel %vm121, %v1162, 0
    %1165 = vmatprep.subr.mxu0 0.0
    %1166 = vmatpush1.msra.mxu0 0.0
    %1167 = vmatprep.subr.mxu0 0.0
    %1168 = vmatpush1.msra.mxu0 0.0
    %1169 = vmatprep.subr.mxu0 0.0
    %1170 = vmatpush1.msra.mxu0 0.0
    %1171 = vmatprep.subr.mxu0 0.0
    %1172 = vmatpush1.msra.mxu0 0.0
    %1173 = vmatprep.subr.mxu0 0.0
    %1174 = vmatpush1.msra.mxu0 0.0
    %1175 = vmatprep.subr.mxu0 0.0
    %1176 = vmatpush1.msra.mxu0 0.0
    %1177 = vmatprep.subr.mxu0 0.0
    %1178 = vmatpush1.msra.mxu0 0.0
    %1179 = vmatprep.subr.mxu0 0.0
    %1180 = vmatpush1.msra.mxu0 0.0
    %1181 = vmatprep.subr.mxu0 0.0
    %1182 = vmatpush1.msra.mxu0 0.0
    %1183 = vmatprep.subr.mxu0 0.0
    %1184 = vmatpush1.msra.mxu0 0.0
    %1185 = vmatprep.subr.mxu0 0.0
    %1186 = vmatpush1.msra.mxu0 0.0
    %1187 = vmatprep.subr.mxu0 0.0
    %1188 = vmatpush1.msra.mxu0 0.0
    %1189 = vmatprep.subr.mxu0 0.0
    %1190 = vmatpush1.msra.mxu0 %v214
    %1191 = vmatprep.subr.mxu0 0.0
    %1192 = vmatpush1.msra.mxu0 %v213
    %1193 = vmatprep.subr.mxu0 0.0
    %1194 = vmatpush1.msra.mxu0 %v212
    %1195 = vmatprep.subr.mxu0 0.0
    %1196 = vmatpush1.msra.mxu0 %v211
    %1197 = vmatprep.subr.mxu0 0.0
    %1198 = vmatpush2.msra.mxu0 0.0
    %1199 = vmatprep.subr.mxu0 0.0
    %1200 = vmatpush2.msra.mxu0 0.0
    %1201 = vmatprep.subr.mxu0 0.0
    %1202 = vmatpush2.msra.mxu0 0.0
    %1203 = vmatprep.subr.mxu0 0.0
    %1204 = vmatpush2.msra.mxu0 0.0
    %1205 = vmatprep.subr.mxu0 0.0
    %1206 = vmatpush2.msra.mxu0 0.0
    %1207 = vmatprep.subr.mxu0 0.0
    %1208 = vmatpush2.msra.mxu0 0.0
    %1209 = vmatprep.subr.mxu0 0.0
    %1210 = vmatpush2.msra.mxu0 0.0
    %1211 = vmatprep.subr.mxu0 0.0
    %1212 = vmatpush2.msra.mxu0 0.0
    %1213 = vmatprep.subr.mxu0 0.0
    %1214 = vmatpush2.msra.mxu0 0.0
    %1215 = vmatprep.subr.mxu0 0.0
    %1216 = vmatpush2.msra.mxu0 0.0
    %1217 = vmatprep.subr.mxu0 0.0
    %1218 = vmatpush2.msra.mxu0 0.0
    %1219 = vmatprep.subr.mxu0 0.0
    %1220 = vmatpush2.msra.mxu0 0.0
    %1221 = vmatprep.subr.mxu0 0.0
    %1222 = vmatpush2.msra.mxu0 0.0
    %1223 = vmatprep.subr.mxu0 0.0
    %1224 = vmatpush2.msra.mxu0 0.0
    %1225 = vmatprep.subr.mxu0 0.0
    %1226 = vmatpush2.msra.mxu0 0.0
    %1227 = vmatprep.subr.mxu0 0.0
    %1228 = vmatpush2.msra.mxu0 0.0
    %1229 = vmatprep.mubr.f32.mxu0 0.0
    %1230 = vmatmul.mubr.f32.gmra.mxu0 %v1163
    %v1231 = vpop.f32.mrf.mxu0
    %v1232 = vadd.f32 0.0, %v1231
    %v1233 = vpop.f32.mrf.mxu0
    %1234 = vdwg.mxu0
    %v1235 = vadd.f32 %v389, %v1232
    %v1236 = vxor.u32 %v1235, 2147483648
    %v1237 = vmul.f32 %v1236, 1.442695
    %v1238 = vpow.pop %v1237
    %v1239 = vadd.f32 %v1238, 1.0
    %v1240 = vrcp.pop %v1239
    %v1241 = vmul.f32 1.0, %v1240
    %v1242 = vtanh.pop %v1235
    %v1243 = vsel %vm474, %v1242, %v1241
    %v1245 = vrot.slane %v1034, 2
    %v1247 = vmul.f32 %v1243, %v1245
    %1249 = vrot.lane.b32.xlu0 %v1243, 64
    %v1250 = vpop.permute.xlu0 %1249
    %v1252 = vmul.f32 %v1243, %v1250
    %1254 = vrot.lane.b32.xlu0 %v1252, 32
    %v1255 = vpop.permute.xlu0 %1254
    %v1257 = vadd.f32 %v1247, %v1255
    %v1258 = vtanh.pop %v1257
    %1260 = vrot.lane.b32.xlu0 %v1258, 64
    %v1261 = vpop.permute.xlu0 %1260
    %v1263 = vmul.f32 %v1243, %v1261
    %1265 = vrot.lane.b32.xlu0 %v1159, 32
    %v1266 = vpop.permute.xlu0 %1265
    %vm1268 = vcmask 261126
    %1269 = vst.msk [vmem:[#allocation2] sm:$0xc0] %vm1268, %v1266
    %1271 = vrot.lane.b32.xlu0 %v1263, 64
    %v1272 = vpop.permute.xlu0 %1271
    %vm1274 = vcmask 517376
    %1275 = vst.msk [vmem:[#allocation2 + $0x8] sm:$0x3] %vm1274, %v1272
    %v1276 = vrot.slane %v1159, 6
    %1277 = vrot.lane.b32.xlu0 %v1276, 32
    %v1278 = vpop.permute.xlu0 %1277
    %v1279 = vsel %vm121, %v1278, 0
    %1281 = vmatprep.subr.mxu0 0.0
    %1282 = vmatpush1.msra.mxu0 0.0
    %1283 = vmatprep.subr.mxu0 0.0
    %1284 = vmatpush1.msra.mxu0 0.0
    %1285 = vmatprep.subr.mxu0 0.0
    %1286 = vmatpush1.msra.mxu0 0.0
    %1287 = vmatprep.subr.mxu0 0.0
    %1288 = vmatpush1.msra.mxu0 0.0
    %1289 = vmatprep.subr.mxu0 0.0
    %1290 = vmatpush1.msra.mxu0 0.0
    %1291 = vmatprep.subr.mxu0 0.0
    %1292 = vmatpush1.msra.mxu0 0.0
    %1293 = vmatprep.subr.mxu0 0.0
    %1294 = vmatpush1.msra.mxu0 0.0
    %1295 = vmatprep.subr.mxu0 0.0
    %1296 = vmatpush1.msra.mxu0 0.0
    %1297 = vmatprep.subr.mxu0 0.0
    %1298 = vmatpush1.msra.mxu0 0.0
    %1299 = vmatprep.subr.mxu0 0.0
    %1300 = vmatpush1.msra.mxu0 0.0
    %1301 = vmatprep.subr.mxu0 0.0
    %1302 = vmatpush1.msra.mxu0 0.0
    %1303 = vmatprep.subr.mxu0 0.0
    %1304 = vmatpush1.msra.mxu0 0.0
    %1305 = vmatprep.subr.mxu0 0.0
    %1306 = vmatpush1.msra.mxu0 %v209
    %1307 = vmatprep.subr.mxu0 0.0
    %1308 = vmatpush1.msra.mxu0 %v208
    %1309 = vmatprep.subr.mxu0 0.0
    %1310 = vmatpush1.msra.mxu0 %v207
    %1311 = vmatprep.subr.mxu0 0.0
    %1312 = vmatpush1.msra.mxu0 %v206
    %1313 = vmatprep.subr.mxu0 0.0
    %1314 = vmatpush2.msra.mxu0 0.0
    %1315 = vmatprep.subr.mxu0 0.0
    %1316 = vmatpush2.msra.mxu0 0.0
    %1317 = vmatprep.subr.mxu0 0.0
    %1318 = vmatpush2.msra.mxu0 0.0
    %1319 = vmatprep.subr.mxu0 0.0
    %1320 = vmatpush2.msra.mxu0 0.0
    %1321 = vmatprep.subr.mxu0 0.0
    %1322 = vmatpush2.msra.mxu0 0.0
    %1323 = vmatprep.subr.mxu0 0.0
    %1324 = vmatpush2.msra.mxu0 0.0
    %1325 = vmatprep.subr.mxu0 0.0
    %1326 = vmatpush2.msra.mxu0 0.0
    %1327 = vmatprep.subr.mxu0 0.0
    %1328 = vmatpush2.msra.mxu0 0.0
    %1329 = vmatprep.subr.mxu0 0.0
    %1330 = vmatpush2.msra.mxu0 0.0
    %1331 = vmatprep.subr.mxu0 0.0
    %1332 = vmatpush2.msra.mxu0 0.0
    %1333 = vmatprep.subr.mxu0 0.0
    %1334 = vmatpush2.msra.mxu0 0.0
    %1335 = vmatprep.subr.mxu0 0.0
    %1336 = vmatpush2.msra.mxu0 0.0
    %1337 = vmatprep.subr.mxu0 0.0
    %1338 = vmatpush2.msra.mxu0 0.0
    %1339 = vmatprep.subr.mxu0 0.0
    %1340 = vmatpush2.msra.mxu0 0.0
    %1341 = vmatprep.subr.mxu0 0.0
    %1342 = vmatpush2.msra.mxu0 0.0
    %1343 = vmatprep.subr.mxu0 0.0
    %1344 = vmatpush2.msra.mxu0 0.0
    %1345 = vmatprep.mubr.f32.mxu0 0.0
    %1346 = vmatmul.mubr.f32.gmra.mxu0 %v1279
    %v1347 = vpop.f32.mrf.mxu0
    %v1348 = vadd.f32 0.0, %v1347
    %v1349 = vpop.f32.mrf.mxu0
    %1350 = vdwg.mxu0
    %v1351 = vadd.f32 %v303, %v1348
    %v1352 = vxor.u32 %v1351, 2147483648
    %v1353 = vmul.f32 %v1352, 1.442695
    %v1354 = vpow.pop %v1353
    %v1355 = vadd.f32 %v1354, 1.0
    %v1356 = vrcp.pop %v1355
    %v1357 = vmul.f32 1.0, %v1356
    %v1358 = vtanh.pop %v1351
    %v1359 = vsel %vm474, %v1358, %v1357
    %v1361 = vrot.slane %v1153, 6
    %v1363 = vmul.f32 %v1359, %v1361
    %1365 = vrot.lane.b32.xlu0 %v1359, 64
    %v1366 = vpop.permute.xlu0 %1365
    %v1368 = vmul.f32 %v1359, %v1366
    %1370 = vrot.lane.b32.xlu0 %v1368, 32
    %v1371 = vpop.permute.xlu0 %1370
    %v1373 = vadd.f32 %v1363, %v1371
    %v1374 = vtanh.pop %v1373
    %1376 = vrot.lane.b32.xlu0 %v1374, 64
    %v1377 = vpop.permute.xlu0 %1376
    %v1379 = vmul.f32 %v1359, %v1377
    %1380 = vrot.lane.b32.xlu0 %v1263, 32
    %v1381 = vpop.permute.xlu0 %1380
    %v1382 = vsel %vm121, %v1381, 0
    %1384 = vmatprep.subr.mxu0 0.0
    %1385 = vmatpush1.msra.mxu0 0.0
    %1386 = vmatprep.subr.mxu0 0.0
    %1387 = vmatpush1.msra.mxu0 0.0
    %1388 = vmatprep.subr.mxu0 0.0
    %1389 = vmatpush1.msra.mxu0 0.0
    %1390 = vmatprep.subr.mxu0 0.0
    %1391 = vmatpush1.msra.mxu0 0.0
    %1392 = vmatprep.subr.mxu0 0.0
    %1393 = vmatpush1.msra.mxu0 0.0
    %1394 = vmatprep.subr.mxu0 0.0
    %1395 = vmatpush1.msra.mxu0 0.0
    %1396 = vmatprep.subr.mxu0 0.0
    %1397 = vmatpush1.msra.mxu0 0.0
    %1398 = vmatprep.subr.mxu0 0.0
    %1399 = vmatpush1.msra.mxu0 0.0
    %1400 = vmatprep.subr.mxu0 0.0
    %1401 = vmatpush1.msra.mxu0 0.0
    %1402 = vmatprep.subr.mxu0 0.0
    %1403 = vmatpush1.msra.mxu0 0.0
    %1404 = vmatprep.subr.mxu0 0.0
    %1405 = vmatpush1.msra.mxu0 0.0
    %1406 = vmatprep.subr.mxu0 0.0
    %1407 = vmatpush1.msra.mxu0 0.0
    %1408 = vmatprep.subr.mxu0 0.0
    %1409 = vmatpush1.msra.mxu0 %v214
    %1410 = vmatprep.subr.mxu0 0.0
    %1411 = vmatpush1.msra.mxu0 %v213
    %1412 = vmatprep.subr.mxu0 0.0
    %1413 = vmatpush1.msra.mxu0 %v212
    %1414 = vmatprep.subr.mxu0 0.0
    %1415 = vmatpush1.msra.mxu0 %v211
    %1416 = vmatprep.subr.mxu0 0.0
    %1417 = vmatpush2.msra.mxu0 0.0
    %1418 = vmatprep.subr.mxu0 0.0
    %1419 = vmatpush2.msra.mxu0 0.0
    %1420 = vmatprep.subr.mxu0 0.0
    %1421 = vmatpush2.msra.mxu0 0.0
    %1422 = vmatprep.subr.mxu0 0.0
    %1423 = vmatpush2.msra.mxu0 0.0
    %1424 = vmatprep.subr.mxu0 0.0
    %1425 = vmatpush2.msra.mxu0 0.0
    %1426 = vmatprep.subr.mxu0 0.0
    %1427 = vmatpush2.msra.mxu0 0.0
    %1428 = vmatprep.subr.mxu0 0.0
    %1429 = vmatpush2.msra.mxu0 0.0
    %1430 = vmatprep.subr.mxu0 0.0
    %1431 = vmatpush2.msra.mxu0 0.0
    %1432 = vmatprep.subr.mxu0 0.0
    %1433 = vmatpush2.msra.mxu0 0.0
    %1434 = vmatprep.subr.mxu0 0.0
    %1435 = vmatpush2.msra.mxu0 0.0
    %1436 = vmatprep.subr.mxu0 0.0
    %1437 = vmatpush2.msra.mxu0 0.0
    %1438 = vmatprep.subr.mxu0 0.0
    %1439 = vmatpush2.msra.mxu0 0.0
    %1440 = vmatprep.subr.mxu0 0.0
    %1441 = vmatpush2.msra.mxu0 0.0
    %1442 = vmatprep.subr.mxu0 0.0
    %1443 = vmatpush2.msra.mxu0 0.0
    %1444 = vmatprep.subr.mxu0 0.0
    %1445 = vmatpush2.msra.mxu0 0.0
    %1446 = vmatprep.subr.mxu0 0.0
    %1447 = vmatpush2.msra.mxu0 0.0
    %1448 = vmatprep.mubr.f32.mxu0 0.0
    %1449 = vmatmul.mubr.f32.gmra.mxu0 %v1382
    %v1450 = vpop.f32.mrf.mxu0
    %v1451 = vadd.f32 0.0, %v1450
    %v1452 = vpop.f32.mrf.mxu0
    %1453 = vdwg.mxu0
    %v1455 = vrot.slane %v1451, 2
    %v1457 = vadd.f32 %v384, %v1455
    %v1458 = vxor.u32 %v1457, 2147483648
    %v1459 = vmul.f32 %v1458, 1.442695
    %v1460 = vpow.pop %v1459
    %v1461 = vadd.f32 %v1460, 1.0
    %v1462 = vrcp.pop %v1461
    %v1463 = vmul.f32 1.0, %v1462
    %v1464 = vtanh.pop %v1457
    %v1465 = vsel %vm474, %v1464, %v1463
    %v1467 = vrot.slane %v1257, 2
    %v1469 = vmul.f32 %v1465, %v1467
    %1471 = vrot.lane.b32.xlu0 %v1465, 64
    %v1472 = vpop.permute.xlu0 %1471
    %v1474 = vmul.f32 %v1465, %v1472
    %1476 = vrot.lane.b32.xlu0 %v1474, 32
    %v1477 = vpop.permute.xlu0 %1476
    %v1479 = vadd.f32 %v1469, %v1477
    %v1480 = vtanh.pop %v1479
    %1482 = vrot.lane.b32.xlu0 %v1480, 64
    %v1483 = vpop.permute.xlu0 %1482
    %v1485 = vmul.f32 %v1465, %v1483
    %1487 = vrot.lane.b32.xlu0 %v1379, 32
    %v1488 = vpop.permute.xlu0 %1487
    %1490 = vst.msk [vmem:[#allocation2 + $0x8] sm:$0x3] %vm596, %v1488
    %1492 = vrot.lane.b32.xlu0 %v1485, 64
    %v1493 = vpop.permute.xlu0 %1492
    %1495 = vst.msk [vmem:[#allocation2] sm:$0xc0] %vm602, %v1493
    %v1496 = vsel %vm121, %v1488, 0
    %1498 = vmatprep.subr.mxu0 0.0
    %1499 = vmatpush1.msra.mxu0 0.0
    %1500 = vmatprep.subr.mxu0 0.0
    %1501 = vmatpush1.msra.mxu0 0.0
    %1502 = vmatprep.subr.mxu0 0.0
    %1503 = vmatpush1.msra.mxu0 0.0
    %1504 = vmatprep.subr.mxu0 0.0
    %1505 = vmatpush1.msra.mxu0 0.0
    %1506 = vmatprep.subr.mxu0 0.0
    %1507 = vmatpush1.msra.mxu0 0.0
    %1508 = vmatprep.subr.mxu0 0.0
    %1509 = vmatpush1.msra.mxu0 0.0
    %1510 = vmatprep.subr.mxu0 0.0
    %1511 = vmatpush1.msra.mxu0 0.0
    %1512 = vmatprep.subr.mxu0 0.0
    %1513 = vmatpush1.msra.mxu0 0.0
    %1514 = vmatprep.subr.mxu0 0.0
    %1515 = vmatpush1.msra.mxu0 0.0
    %1516 = vmatprep.subr.mxu0 0.0
    %1517 = vmatpush1.msra.mxu0 0.0
    %1518 = vmatprep.subr.mxu0 0.0
    %1519 = vmatpush1.msra.mxu0 0.0
    %1520 = vmatprep.subr.mxu0 0.0
    %1521 = vmatpush1.msra.mxu0 0.0
    %1522 = vmatprep.subr.mxu0 0.0
    %1523 = vmatpush1.msra.mxu0 %v209
    %1524 = vmatprep.subr.mxu0 0.0
    %1525 = vmatpush1.msra.mxu0 %v208
    %1526 = vmatprep.subr.mxu0 0.0
    %1527 = vmatpush1.msra.mxu0 %v207
    %1528 = vmatprep.subr.mxu0 0.0
    %1529 = vmatpush1.msra.mxu0 %v206
    %1530 = vmatprep.subr.mxu0 0.0
    %1531 = vmatpush2.msra.mxu0 0.0
    %1532 = vmatprep.subr.mxu0 0.0
    %1533 = vmatpush2.msra.mxu0 0.0
    %1534 = vmatprep.subr.mxu0 0.0
    %1535 = vmatpush2.msra.mxu0 0.0
    %1536 = vmatprep.subr.mxu0 0.0
    %1537 = vmatpush2.msra.mxu0 0.0
    %1538 = vmatprep.subr.mxu0 0.0
    %1539 = vmatpush2.msra.mxu0 0.0
    %1540 = vmatprep.subr.mxu0 0.0
    %1541 = vmatpush2.msra.mxu0 0.0
    %1542 = vmatprep.subr.mxu0 0.0
    %1543 = vmatpush2.msra.mxu0 0.0
    %1544 = vmatprep.subr.mxu0 0.0
    %1545 = vmatpush2.msra.mxu0 0.0
    %1546 = vmatprep.subr.mxu0 0.0
    %1547 = vmatpush2.msra.mxu0 0.0
    %1548 = vmatprep.subr.mxu0 0.0
    %1549 = vmatpush2.msra.mxu0 0.0
    %1550 = vmatprep.subr.mxu0 0.0
    %1551 = vmatpush2.msra.mxu0 0.0
    %1552 = vmatprep.subr.mxu0 0.0
    %1553 = vmatpush2.msra.mxu0 0.0
    %1554 = vmatprep.subr.mxu0 0.0
    %1555 = vmatpush2.msra.mxu0 0.0
    %1556 = vmatprep.subr.mxu0 0.0
    %1557 = vmatpush2.msra.mxu0 0.0
    %1558 = vmatprep.subr.mxu0 0.0
    %1559 = vmatpush2.msra.mxu0 0.0
    %1560 = vmatprep.subr.mxu0 0.0
    %1561 = vmatpush2.msra.mxu0 0.0
    %1562 = vmatprep.mubr.f32.mxu0 0.0
    %1563 = vmatmul.mubr.f32.gmra.mxu0 %v1496
    %v1564 = vpop.f32.mrf.mxu0
    %v1565 = vadd.f32 0.0, %v1564
    %v1566 = vpop.f32.mrf.mxu0
    %1567 = vdwg.mxu0
    %v1569 = vrot.slane %v1565, 6
    %v1571 = vadd.f32 %v303, %v1569
    %v1572 = vxor.u32 %v1571, 2147483648
    %v1573 = vmul.f32 %v1572, 1.442695
    %v1574 = vpow.pop %v1573
    %v1575 = vadd.f32 %v1574, 1.0
    %v1576 = vrcp.pop %v1575
    %v1577 = vmul.f32 1.0, %v1576
    %v1578 = vtanh.pop %v1571
    %v1579 = vsel %vm474, %v1578, %v1577
    %v1581 = vrot.slane %v1373, 6
    %v1583 = vmul.f32 %v1579, %v1581
    %1585 = vrot.lane.b32.xlu0 %v1579, 64
    %v1586 = vpop.permute.xlu0 %1585
    %v1588 = vmul.f32 %v1579, %v1586
    %1590 = vrot.lane.b32.xlu0 %v1588, 32
    %v1591 = vpop.permute.xlu0 %1590
    %v1593 = vadd.f32 %v1583, %v1591
    %v1594 = vtanh.pop %v1593
    %1596 = vrot.lane.b32.xlu0 %v1594, 64
    %v1597 = vpop.permute.xlu0 %1596
    %v1599 = vmul.f32 %v1579, %v1597
    %v1600 = vrot.slane %v1485, 6
    %1601 = vrot.lane.b32.xlu0 %v1600, 32
    %v1602 = vpop.permute.xlu0 %1601
    %v1603 = vsel %vm121, %v1602, 0
    %1605 = vmatprep.subr.mxu0 0.0
    %1606 = vmatpush1.msra.mxu0 0.0
    %1607 = vmatprep.subr.mxu0 0.0
    %1608 = vmatpush1.msra.mxu0 0.0
    %1609 = vmatprep.subr.mxu0 0.0
    %1610 = vmatpush1.msra.mxu0 0.0
    %1611 = vmatprep.subr.mxu0 0.0
    %1612 = vmatpush1.msra.mxu0 0.0
    %1613 = vmatprep.subr.mxu0 0.0
    %1614 = vmatpush1.msra.mxu0 0.0
    %1615 = vmatprep.subr.mxu0 0.0
    %1616 = vmatpush1.msra.mxu0 0.0
    %1617 = vmatprep.subr.mxu0 0.0
    %1618 = vmatpush1.msra.mxu0 0.0
    %1619 = vmatprep.subr.mxu0 0.0
    %1620 = vmatpush1.msra.mxu0 0.0
    %1621 = vmatprep.subr.mxu0 0.0
    %1622 = vmatpush1.msra.mxu0 0.0
    %1623 = vmatprep.subr.mxu0 0.0
    %1624 = vmatpush1.msra.mxu0 0.0
    %1625 = vmatprep.subr.mxu0 0.0
    %1626 = vmatpush1.msra.mxu0 0.0
    %1627 = vmatprep.subr.mxu0 0.0
    %1628 = vmatpush1.msra.mxu0 0.0
    %1629 = vmatprep.subr.mxu0 0.0
    %1630 = vmatpush1.msra.mxu0 %v214
    %1631 = vmatprep.subr.mxu0 0.0
    %1632 = vmatpush1.msra.mxu0 %v213
    %1633 = vmatprep.subr.mxu0 0.0
    %1634 = vmatpush1.msra.mxu0 %v212
    %1635 = vmatprep.subr.mxu0 0.0
    %1636 = vmatpush1.msra.mxu0 %v211
    %1637 = vmatprep.subr.mxu0 0.0
    %1638 = vmatpush2.msra.mxu0 0.0
    %1639 = vmatprep.subr.mxu0 0.0
    %1640 = vmatpush2.msra.mxu0 0.0
    %1641 = vmatprep.subr.mxu0 0.0
    %1642 = vmatpush2.msra.mxu0 0.0
    %1643 = vmatprep.subr.mxu0 0.0
    %1644 = vmatpush2.msra.mxu0 0.0
    %1645 = vmatprep.subr.mxu0 0.0
    %1646 = vmatpush2.msra.mxu0 0.0
    %1647 = vmatprep.subr.mxu0 0.0
    %1648 = vmatpush2.msra.mxu0 0.0
    %1649 = vmatprep.subr.mxu0 0.0
    %1650 = vmatpush2.msra.mxu0 0.0
    %1651 = vmatprep.subr.mxu0 0.0
    %1652 = vmatpush2.msra.mxu0 0.0
    %1653 = vmatprep.subr.mxu0 0.0
    %1654 = vmatpush2.msra.mxu0 0.0
    %1655 = vmatprep.subr.mxu0 0.0
    %1656 = vmatpush2.msra.mxu0 0.0
    %1657 = vmatprep.subr.mxu0 0.0
    %1658 = vmatpush2.msra.mxu0 0.0
    %1659 = vmatprep.subr.mxu0 0.0
    %1660 = vmatpush2.msra.mxu0 0.0
    %1661 = vmatprep.subr.mxu0 0.0
    %1662 = vmatpush2.msra.mxu0 0.0
    %1663 = vmatprep.subr.mxu0 0.0
    %1664 = vmatpush2.msra.mxu0 0.0
    %1665 = vmatprep.subr.mxu0 0.0
    %1666 = vmatpush2.msra.mxu0 0.0
    %1667 = vmatprep.subr.mxu0 0.0
    %1668 = vmatpush2.msra.mxu0 0.0
    %1669 = vmatprep.mubr.f32.mxu0 0.0
    %1670 = vmatmul.mubr.f32.gmra.mxu0 %v1603
    %v1671 = vpop.f32.mrf.mxu0
    %v1672 = vadd.f32 0.0, %v1671
    %v1673 = vpop.f32.mrf.mxu0
    %1674 = vdwg.mxu0
    %v1676 = vrot.slane %v1672, 4
    %v1678 = vadd.f32 %v384, %v1676
    %v1679 = vxor.u32 %v1678, 2147483648
    %v1680 = vmul.f32 %v1679, 1.442695
    %v1681 = vpow.pop %v1680
    %v1682 = vadd.f32 %v1681, 1.0
    %v1683 = vrcp.pop %v1682
    %v1684 = vmul.f32 1.0, %v1683
    %v1685 = vtanh.pop %v1678
    %v1686 = vsel %vm474, %v1685, %v1684
    %v1688 = vrot.slane %v1479, 2
    %v1690 = vmul.f32 %v1686, %v1688
    %1692 = vrot.lane.b32.xlu0 %v1686, 64
    %v1693 = vpop.permute.xlu0 %1692
    %v1695 = vmul.f32 %v1686, %v1693
    %1697 = vrot.lane.b32.xlu0 %v1695, 32
    %v1698 = vpop.permute.xlu0 %1697
    %v1700 = vadd.f32 %v1690, %v1698
    %v1701 = vtanh.pop %v1700
    %1703 = vrot.lane.b32.xlu0 %v1701, 64
    %v1704 = vpop.permute.xlu0 %1703
    %v1706 = vmul.f32 %v1686, %v1704
    %1708 = vrot.lane.b32.xlu0 %v1599, 32
    %v1709 = vpop.permute.xlu0 %1708
    %1711 = vst.msk [vmem:[#allocation2 + $0x8] sm:$0xc] %vm819, %v1709
    %1713 = vrot.lane.b32.xlu0 %v1706, 64
    %v1714 = vpop.permute.xlu0 %1713
    %1716 = vst.msk [vmem:[#allocation2] sm:$0x30] %vm825, %v1714
    %v1717 = vrot.slane %v1599, 2
    %1718 = vrot.lane.b32.xlu0 %v1717, 32
    %v1719 = vpop.permute.xlu0 %1718
    %v1720 = vsel %vm121, %v1719, 0
    %1722 = vmatprep.subr.mxu0 0.0
    %1723 = vmatpush1.msra.mxu0 0.0
    %1724 = vmatprep.subr.mxu0 0.0
    %1725 = vmatpush1.msra.mxu0 0.0
    %1726 = vmatprep.subr.mxu0 0.0
    %1727 = vmatpush1.msra.mxu0 0.0
    %1728 = vmatprep.subr.mxu0 0.0
    %1729 = vmatpush1.msra.mxu0 0.0
    %1730 = vmatprep.subr.mxu0 0.0
    %1731 = vmatpush1.msra.mxu0 0.0
    %1732 = vmatprep.subr.mxu0 0.0
    %1733 = vmatpush1.msra.mxu0 0.0
    %1734 = vmatprep.subr.mxu0 0.0
    %1735 = vmatpush1.msra.mxu0 0.0
    %1736 = vmatprep.subr.mxu0 0.0
    %1737 = vmatpush1.msra.mxu0 0.0
    %1738 = vmatprep.subr.mxu0 0.0
    %1739 = vmatpush1.msra.mxu0 0.0
    %1740 = vmatprep.subr.mxu0 0.0
    %1741 = vmatpush1.msra.mxu0 0.0
    %1742 = vmatprep.subr.mxu0 0.0
    %1743 = vmatpush1.msra.mxu0 0.0
    %1744 = vmatprep.subr.mxu0 0.0
    %1745 = vmatpush1.msra.mxu0 0.0
    %1746 = vmatprep.subr.mxu0 0.0
    %1747 = vmatpush1.msra.mxu0 %v209
    %1748 = vmatprep.subr.mxu0 0.0
    %1749 = vmatpush1.msra.mxu0 %v208
    %1750 = vmatprep.subr.mxu0 0.0
    %1751 = vmatpush1.msra.mxu0 %v207
    %1752 = vmatprep.subr.mxu0 0.0
    %1753 = vmatpush1.msra.mxu0 %v206
    %1754 = vmatprep.subr.mxu0 0.0
    %1755 = vmatpush2.msra.mxu0 0.0
    %1756 = vmatprep.subr.mxu0 0.0
    %1757 = vmatpush2.msra.mxu0 0.0
    %1758 = vmatprep.subr.mxu0 0.0
    %1759 = vmatpush2.msra.mxu0 0.0
    %1760 = vmatprep.subr.mxu0 0.0
    %1761 = vmatpush2.msra.mxu0 0.0
    %1762 = vmatprep.subr.mxu0 0.0
    %1763 = vmatpush2.msra.mxu0 0.0
    %1764 = vmatprep.subr.mxu0 0.0
    %1765 = vmatpush2.msra.mxu0 0.0
    %1766 = vmatprep.subr.mxu0 0.0
    %1767 = vmatpush2.msra.mxu0 0.0
    %1768 = vmatprep.subr.mxu0 0.0
    %1769 = vmatpush2.msra.mxu0 0.0
    %1770 = vmatprep.subr.mxu0 0.0
    %1771 = vmatpush2.msra.mxu0 0.0
    %1772 = vmatprep.subr.mxu0 0.0
    %1773 = vmatpush2.msra.mxu0 0.0
    %1774 = vmatprep.subr.mxu0 0.0
    %1775 = vmatpush2.msra.mxu0 0.0
    %1776 = vmatprep.subr.mxu0 0.0
    %1777 = vmatpush2.msra.mxu0 0.0
    %1778 = vmatprep.subr.mxu0 0.0
    %1779 = vmatpush2.msra.mxu0 0.0
    %1780 = vmatprep.subr.mxu0 0.0
    %1781 = vmatpush2.msra.mxu0 0.0
    %1782 = vmatprep.subr.mxu0 0.0
    %1783 = vmatpush2.msra.mxu0 0.0
    %1784 = vmatprep.subr.mxu0 0.0
    %1785 = vmatpush2.msra.mxu0 0.0
    %1786 = vmatprep.mubr.f32.mxu0 0.0
    %1787 = vmatmul.mubr.f32.gmra.mxu0 %v1720
    %v1788 = vpop.f32.mrf.mxu0
    %v1789 = vadd.f32 0.0, %v1788
    %v1790 = vpop.f32.mrf.mxu0
    %1791 = vdwg.mxu0
    %v1793 = vrot.slane %v1789, 4
    %v1795 = vadd.f32 %v303, %v1793
    %v1796 = vxor.u32 %v1795, 2147483648
    %v1797 = vmul.f32 %v1796, 1.442695
    %v1798 = vpow.pop %v1797
    %v1799 = vadd.f32 %v1798, 1.0
    %v1800 = vrcp.pop %v1799
    %v1801 = vmul.f32 1.0, %v1800
    %v1802 = vtanh.pop %v1795
    %v1803 = vsel %vm474, %v1802, %v1801
    %v1805 = vrot.slane %v1593, 6
    %v1807 = vmul.f32 %v1803, %v1805
    %1809 = vrot.lane.b32.xlu0 %v1803, 64
    %v1810 = vpop.permute.xlu0 %1809
    %v1812 = vmul.f32 %v1803, %v1810
    %1814 = vrot.lane.b32.xlu0 %v1812, 32
    %v1815 = vpop.permute.xlu0 %1814
    %v1817 = vadd.f32 %v1807, %v1815
    %v1818 = vtanh.pop %v1817
    %1820 = vrot.lane.b32.xlu0 %v1818, 64
    %v1821 = vpop.permute.xlu0 %1820
    %v1823 = vmul.f32 %v1803, %v1821
    %v1824 = vrot.slane %v1706, 4
    %1825 = vrot.lane.b32.xlu0 %v1824, 32
    %v1826 = vpop.permute.xlu0 %1825
    %v1827 = vsel %vm121, %v1826, 0
    %1829 = vmatprep.subr.mxu0 0.0
    %1830 = vmatpush1.msra.mxu0 0.0
    %1831 = vmatprep.subr.mxu0 0.0
    %1832 = vmatpush1.msra.mxu0 0.0
    %1833 = vmatprep.subr.mxu0 0.0
    %1834 = vmatpush1.msra.mxu0 0.0
    %1835 = vmatprep.subr.mxu0 0.0
    %1836 = vmatpush1.msra.mxu0 0.0
    %1837 = vmatprep.subr.mxu0 0.0
    %1838 = vmatpush1.msra.mxu0 0.0
    %1839 = vmatprep.subr.mxu0 0.0
    %1840 = vmatpush1.msra.mxu0 0.0
    %1841 = vmatprep.subr.mxu0 0.0
    %1842 = vmatpush1.msra.mxu0 0.0
    %1843 = vmatprep.subr.mxu0 0.0
    %1844 = vmatpush1.msra.mxu0 0.0
    %1845 = vmatprep.subr.mxu0 0.0
    %1846 = vmatpush1.msra.mxu0 0.0
    %1847 = vmatprep.subr.mxu0 0.0
    %1848 = vmatpush1.msra.mxu0 0.0
    %1849 = vmatprep.subr.mxu0 0.0
    %1850 = vmatpush1.msra.mxu0 0.0
    %1851 = vmatprep.subr.mxu0 0.0
    %1852 = vmatpush1.msra.mxu0 0.0
    %1853 = vmatprep.subr.mxu0 0.0
    %1854 = vmatpush1.msra.mxu0 %v214
    %1855 = vmatprep.subr.mxu0 0.0
    %1856 = vmatpush1.msra.mxu0 %v213
    %1857 = vmatprep.subr.mxu0 0.0
    %1858 = vmatpush1.msra.mxu0 %v212
    %1859 = vmatprep.subr.mxu0 0.0
    %1860 = vmatpush1.msra.mxu0 %v211
    %1861 = vmatprep.subr.mxu0 0.0
    %1862 = vmatpush2.msra.mxu0 0.0
    %1863 = vmatprep.subr.mxu0 0.0
    %1864 = vmatpush2.msra.mxu0 0.0
    %1865 = vmatprep.subr.mxu0 0.0
    %1866 = vmatpush2.msra.mxu0 0.0
    %1867 = vmatprep.subr.mxu0 0.0
    %1868 = vmatpush2.msra.mxu0 0.0
    %1869 = vmatprep.subr.mxu0 0.0
    %1870 = vmatpush2.msra.mxu0 0.0
    %1871 = vmatprep.subr.mxu0 0.0
    %1872 = vmatpush2.msra.mxu0 0.0
    %1873 = vmatprep.subr.mxu0 0.0
    %1874 = vmatpush2.msra.mxu0 0.0
    %1875 = vmatprep.subr.mxu0 0.0
    %1876 = vmatpush2.msra.mxu0 0.0
    %1877 = vmatprep.subr.mxu0 0.0
    %1878 = vmatpush2.msra.mxu0 0.0
    %1879 = vmatprep.subr.mxu0 0.0
    %1880 = vmatpush2.msra.mxu0 0.0
    %1881 = vmatprep.subr.mxu0 0.0
    %1882 = vmatpush2.msra.mxu0 0.0
    %1883 = vmatprep.subr.mxu0 0.0
    %1884 = vmatpush2.msra.mxu0 0.0
    %1885 = vmatprep.subr.mxu0 0.0
    %1886 = vmatpush2.msra.mxu0 0.0
    %1887 = vmatprep.subr.mxu0 0.0
    %1888 = vmatpush2.msra.mxu0 0.0
    %1889 = vmatprep.subr.mxu0 0.0
    %1890 = vmatpush2.msra.mxu0 0.0
    %1891 = vmatprep.subr.mxu0 0.0
    %1892 = vmatpush2.msra.mxu0 0.0
    %1893 = vmatprep.mubr.f32.mxu0 0.0
    %1894 = vmatmul.mubr.f32.gmra.mxu0 %v1827
    %v1895 = vpop.f32.mrf.mxu0
    %v1896 = vadd.f32 0.0, %v1895
    %v1897 = vpop.f32.mrf.mxu0
    %1898 = vdwg.mxu0
    %v1900 = vrot.slane %v1896, 6
    %v1902 = vadd.f32 %v384, %v1900
    %v1903 = vxor.u32 %v1902, 2147483648
    %v1904 = vmul.f32 %v1903, 1.442695
    %v1905 = vpow.pop %v1904
    %v1906 = vadd.f32 %v1905, 1.0
    %v1907 = vrcp.pop %v1906
    %v1908 = vmul.f32 1.0, %v1907
    %v1909 = vtanh.pop %v1902
    %v1910 = vsel %vm474, %v1909, %v1908
    %v1912 = vrot.slane %v1700, 2
    %v1914 = vmul.f32 %v1910, %v1912
    %1916 = vrot.lane.b32.xlu0 %v1910, 64
    %v1917 = vpop.permute.xlu0 %1916
    %v1919 = vmul.f32 %v1910, %v1917
    %1921 = vrot.lane.b32.xlu0 %v1919, 32
    %v1922 = vpop.permute.xlu0 %1921
    %v1924 = vadd.f32 %v1914, %v1922
    %v1925 = vtanh.pop %v1924
    %1927 = vrot.lane.b32.xlu0 %v1925, 64
    %v1928 = vpop.permute.xlu0 %1927
    %v1930 = vmul.f32 %v1910, %v1928
    %1932 = vrot.lane.b32.xlu0 %v1823, 32
    %v1933 = vpop.permute.xlu0 %1932
    %1935 = vst.msk [vmem:[#allocation2 + $0x8] sm:$0x30] %vm1045, %v1933
    %1937 = vrot.lane.b32.xlu0 %v1930, 64
    %v1938 = vpop.permute.xlu0 %1937
    %1940 = vst.msk [vmem:[#allocation2] sm:$0xc] %vm1051, %v1938
    %v1941 = vrot.slane %v1823, 4
    %1942 = vrot.lane.b32.xlu0 %v1941, 32
    %v1943 = vpop.permute.xlu0 %1942
    %v1944 = vsel %vm121, %v1943, 0
    %1946 = vmatprep.subr.mxu0 0.0
    %1947 = vmatpush1.msra.mxu0 0.0
    %1948 = vmatprep.subr.mxu0 0.0
    %1949 = vmatpush1.msra.mxu0 0.0
    %1950 = vmatprep.subr.mxu0 0.0
    %1951 = vmatpush1.msra.mxu0 0.0
    %1952 = vmatprep.subr.mxu0 0.0
    %1953 = vmatpush1.msra.mxu0 0.0
    %1954 = vmatprep.subr.mxu0 0.0
    %1955 = vmatpush1.msra.mxu0 0.0
    %1956 = vmatprep.subr.mxu0 0.0
    %1957 = vmatpush1.msra.mxu0 0.0
    %1958 = vmatprep.subr.mxu0 0.0
    %1959 = vmatpush1.msra.mxu0 0.0
    %1960 = vmatprep.subr.mxu0 0.0
    %1961 = vmatpush1.msra.mxu0 0.0
    %1962 = vmatprep.subr.mxu0 0.0
    %1963 = vmatpush1.msra.mxu0 0.0
    %1964 = vmatprep.subr.mxu0 0.0
    %1965 = vmatpush1.msra.mxu0 0.0
    %1966 = vmatprep.subr.mxu0 0.0
    %1967 = vmatpush1.msra.mxu0 0.0
    %1968 = vmatprep.subr.mxu0 0.0
    %1969 = vmatpush1.msra.mxu0 0.0
    %1970 = vmatprep.subr.mxu0 0.0
    %1971 = vmatpush1.msra.mxu0 %v209
    %1972 = vmatprep.subr.mxu0 0.0
    %1973 = vmatpush1.msra.mxu0 %v208
    %1974 = vmatprep.subr.mxu0 0.0
    %1975 = vmatpush1.msra.mxu0 %v207
    %1976 = vmatprep.subr.mxu0 0.0
    %1977 = vmatpush1.msra.mxu0 %v206
    %1978 = vmatprep.subr.mxu0 0.0
    %1979 = vmatpush2.msra.mxu0 0.0
    %1980 = vmatprep.subr.mxu0 0.0
    %1981 = vmatpush2.msra.mxu0 0.0
    %1982 = vmatprep.subr.mxu0 0.0
    %1983 = vmatpush2.msra.mxu0 0.0
    %1984 = vmatprep.subr.mxu0 0.0
    %1985 = vmatpush2.msra.mxu0 0.0
    %1986 = vmatprep.subr.mxu0 0.0
    %1987 = vmatpush2.msra.mxu0 0.0
    %1988 = vmatprep.subr.mxu0 0.0
    %1989 = vmatpush2.msra.mxu0 0.0
    %1990 = vmatprep.subr.mxu0 0.0
    %1991 = vmatpush2.msra.mxu0 0.0
    %1992 = vmatprep.subr.mxu0 0.0
    %1993 = vmatpush2.msra.mxu0 0.0
    %1994 = vmatprep.subr.mxu0 0.0
    %1995 = vmatpush2.msra.mxu0 0.0
    %1996 = vmatprep.subr.mxu0 0.0
    %1997 = vmatpush2.msra.mxu0 0.0
    %1998 = vmatprep.subr.mxu0 0.0
    %1999 = vmatpush2.msra.mxu0 0.0
    %2000 = vmatprep.subr.mxu0 0.0
    %2001 = vmatpush2.msra.mxu0 0.0
    %2002 = vmatprep.subr.mxu0 0.0
    %2003 = vmatpush2.msra.mxu0 0.0
    %2004 = vmatprep.subr.mxu0 0.0
    %2005 = vmatpush2.msra.mxu0 0.0
    %2006 = vmatprep.subr.mxu0 0.0
    %2007 = vmatpush2.msra.mxu0 0.0
    %2008 = vmatprep.subr.mxu0 0.0
    %2009 = vmatpush2.msra.mxu0 0.0
    %2010 = vmatprep.mubr.f32.mxu0 0.0
    %2011 = vmatmul.mubr.f32.gmra.mxu0 %v1944
    %v2012 = vpop.f32.mrf.mxu0
    %v2013 = vadd.f32 0.0, %v2012
    %v2014 = vpop.f32.mrf.mxu0
    %2015 = vdwg.mxu0
    %v2017 = vrot.slane %v2013, 2
    %v2019 = vadd.f32 %v303, %v2017
    %v2020 = vxor.u32 %v2019, 2147483648
    %v2021 = vmul.f32 %v2020, 1.442695
    %v2022 = vpow.pop %v2021
    %v2023 = vadd.f32 %v2022, 1.0
    %v2024 = vrcp.pop %v2023
    %v2025 = vmul.f32 1.0, %v2024
    %v2026 = vtanh.pop %v2019
    %v2027 = vsel %vm474, %v2026, %v2025
    %v2029 = vrot.slane %v1817, 6
    %v2031 = vmul.f32 %v2027, %v2029
    %2033 = vrot.lane.b32.xlu0 %v2027, 64
    %v2034 = vpop.permute.xlu0 %2033
    %v2036 = vmul.f32 %v2027, %v2034
    %2038 = vrot.lane.b32.xlu0 %v2036, 32
    %v2039 = vpop.permute.xlu0 %2038
    %v2041 = vadd.f32 %v2031, %v2039
    %v2042 = vtanh.pop %v2041
    %2044 = vrot.lane.b32.xlu0 %v2042, 64
    %v2045 = vpop.permute.xlu0 %2044
    %v2047 = vmul.f32 %v2027, %v2045
    %v2048 = vrot.slane %v1930, 2
    %2049 = vrot.lane.b32.xlu0 %v2048, 32
    %v2050 = vpop.permute.xlu0 %2049
    %v2051 = vsel %vm121, %v2050, 0
    %2053 = vmatprep.subr.mxu0 0.0
    %2054 = vmatpush1.msra.mxu0 0.0
    %2055 = vmatprep.subr.mxu0 0.0
    %2056 = vmatpush1.msra.mxu0 0.0
    %2057 = vmatprep.subr.mxu0 0.0
    %2058 = vmatpush1.msra.mxu0 0.0
    %2059 = vmatprep.subr.mxu0 0.0
    %2060 = vmatpush1.msra.mxu0 0.0
    %2061 = vmatprep.subr.mxu0 0.0
    %2062 = vmatpush1.msra.mxu0 0.0
    %2063 = vmatprep.subr.mxu0 0.0
    %2064 = vmatpush1.msra.mxu0 0.0
    %2065 = vmatprep.subr.mxu0 0.0
    %2066 = vmatpush1.msra.mxu0 0.0
    %2067 = vmatprep.subr.mxu0 0.0
    %2068 = vmatpush1.msra.mxu0 0.0
    %2069 = vmatprep.subr.mxu0 0.0
    %2070 = vmatpush1.msra.mxu0 0.0
    %2071 = vmatprep.subr.mxu0 0.0
    %2072 = vmatpush1.msra.mxu0 0.0
    %2073 = vmatprep.subr.mxu0 0.0
    %2074 = vmatpush1.msra.mxu0 0.0
    %2075 = vmatprep.subr.mxu0 0.0
    %2076 = vmatpush1.msra.mxu0 0.0
    %2077 = vmatprep.subr.mxu0 0.0
    %2078 = vmatpush1.msra.mxu0 %v214
    %2079 = vmatprep.subr.mxu0 0.0
    %2080 = vmatpush1.msra.mxu0 %v213
    %2081 = vmatprep.subr.mxu0 0.0
    %2082 = vmatpush1.msra.mxu0 %v212
    %2083 = vmatprep.subr.mxu0 0.0
    %2084 = vmatpush1.msra.mxu0 %v211
    %2085 = vmatprep.subr.mxu0 0.0
    %2086 = vmatpush2.msra.mxu0 0.0
    %2087 = vmatprep.subr.mxu0 0.0
    %2088 = vmatpush2.msra.mxu0 0.0
    %2089 = vmatprep.subr.mxu0 0.0
    %2090 = vmatpush2.msra.mxu0 0.0
    %2091 = vmatprep.subr.mxu0 0.0
    %2092 = vmatpush2.msra.mxu0 0.0
    %2093 = vmatprep.subr.mxu0 0.0
    %2094 = vmatpush2.msra.mxu0 0.0
    %2095 = vmatprep.subr.mxu0 0.0
    %2096 = vmatpush2.msra.mxu0 0.0
    %2097 = vmatprep.subr.mxu0 0.0
    %2098 = vmatpush2.msra.mxu0 0.0
    %2099 = vmatprep.subr.mxu0 0.0
    %2100 = vmatpush2.msra.mxu0 0.0
    %2101 = vmatprep.subr.mxu0 0.0
    %2102 = vmatpush2.msra.mxu0 0.0
    %2103 = vmatprep.subr.mxu0 0.0
    %2104 = vmatpush2.msra.mxu0 0.0
    %2105 = vmatprep.subr.mxu0 0.0
    %2106 = vmatpush2.msra.mxu0 0.0
    %2107 = vmatprep.subr.mxu0 0.0
    %2108 = vmatpush2.msra.mxu0 0.0
    %2109 = vmatprep.subr.mxu0 0.0
    %2110 = vmatpush2.msra.mxu0 0.0
    %2111 = vmatprep.subr.mxu0 0.0
    %2112 = vmatpush2.msra.mxu0 0.0
    %2113 = vmatprep.subr.mxu0 0.0
    %2114 = vmatpush2.msra.mxu0 0.0
    %2115 = vmatprep.subr.mxu0 0.0
    %2116 = vmatpush2.msra.mxu0 0.0
    %2117 = vmatprep.mubr.f32.mxu0 0.0
    %2118 = vmatmul.mubr.f32.gmra.mxu0 %v2051
    %v2119 = vpop.f32.mrf.mxu0
    %v2120 = vadd.f32 0.0, %v2119
    %v2121 = vpop.f32.mrf.mxu0
    %2122 = vdwg.mxu0
    %v2123 = vadd.f32 %v384, %v2120
    %v2124 = vxor.u32 %v2123, 2147483648
    %v2125 = vmul.f32 %v2124, 1.442695
    %v2126 = vpow.pop %v2125
    %v2127 = vadd.f32 %v2126, 1.0
    %v2128 = vrcp.pop %v2127
    %v2129 = vmul.f32 1.0, %v2128
    %v2130 = vtanh.pop %v2123
    %v2131 = vsel %vm474, %v2130, %v2129
    %v2133 = vrot.slane %v1924, 2
    %v2135 = vmul.f32 %v2131, %v2133
    %2137 = vrot.lane.b32.xlu0 %v2131, 64
    %v2138 = vpop.permute.xlu0 %2137
    %v2140 = vmul.f32 %v2131, %v2138
    %2142 = vrot.lane.b32.xlu0 %v2140, 32
    %v2143 = vpop.permute.xlu0 %2142
    %v2145 = vadd.f32 %v2135, %v2143
    %v2146 = vtanh.pop %v2145
    %2148 = vrot.lane.b32.xlu0 %v2146, 64
    %v2149 = vpop.permute.xlu0 %2148
    %v2151 = vmul.f32 %v2131, %v2149
    %2153 = vrot.lane.b32.xlu0 %v2047, 32
    %v2154 = vpop.permute.xlu0 %2153
    %2156 = vst.msk [vmem:[#allocation2 + $0x8] sm:$0xc0] %vm1268, %v2154
    %2158 = vrot.lane.b32.xlu0 %v2151, 64
    %v2159 = vpop.permute.xlu0 %2158
    %2161 = vst.msk [vmem:[#allocation2] sm:$0x3] %vm1274, %v2159
    %v2162 = vld [vmem:[#allocation2] sm:$0xff]
    %v2163 = vld [vmem:[#allocation2 + $0x8] sm:$0xff]
    %v2164 = vld [vmem:[#allocation8] sm:$0xff]
    %v2165 = vld [vmem:[#allocation8 + $0x8] sm:$0xff]
    %v2166 = vld [vmem:[#allocation8 + $0x10] sm:$0xff]
    %v2167 = vld [vmem:[#allocation8 + $0x18] sm:$0xff]
    %s2168 = scalar_lea.vmem [#allocation8], 32
    %v2169 = vld [vmem:[%s2168] sm:$0xff]
    %v2170 = vld [vmem:[%s2168 + $0x8] sm:$0xff]
    %v2171 = vld [vmem:[%s2168 + $0x10] sm:$0xff]
    %v2172 = vld [vmem:[%s2168 + $0x18] sm:$0xff]
    %v2173 = vld [vmem:[%s5] sm:$0xff]
    %v2174 = vld [vmem:[%s5 + $0x8] sm:$0xff]
    %v2175 = vld [vmem:[%s5 + $0x10] sm:$0xff]
    %v2176 = vld [vmem:[%s5 + $0x18] sm:$0xff]
    %v2177 = vld [vmem:[%s5 + $0x20] sm:$0xff]
    %v2178 = vld [vmem:[%s5 + $0x28] sm:$0xff]
    %v2179 = vld [vmem:[%s5 + $0x30] sm:$0xff]
    %v2180 = vld [vmem:[%s5 + $0x38] sm:$0xff]
    %v2181 = vld [vmem:[#allocation9] sm:$0x1]
    %v2183 = vlaneseq
    %v2184 = vshrl.u32 %v2183, 7
    %v2185 = vsub.s32 0, %v2184
    %v2186 = vrot.slane %v2181, %v2185
    %vm2188 = vcmask 523264
    %v2190 = vsel %vm2188, %v2162, 0
    %v2193 = vsel %vm2188, %v2163, 0
    %2195 = vmatprep.subr.mxu0 0.0
    %2196 = vmatpush1.msra.mxu0 0.0
    %2197 = vmatprep.subr.mxu0 0.0
    %2198 = vmatpush1.msra.mxu0 0.0
    %2199 = vmatprep.subr.mxu0 0.0
    %2200 = vmatpush1.msra.mxu0 0.0
    %2201 = vmatprep.subr.mxu0 0.0
    %2202 = vmatpush1.msra.mxu0 0.0
    %2203 = vmatprep.subr.mxu0 0.0
    %2204 = vmatpush1.msra.mxu0 0.0
    %2205 = vmatprep.subr.mxu0 0.0
    %2206 = vmatpush1.msra.mxu0 0.0
    %2207 = vmatprep.subr.mxu0 0.0
    %2208 = vmatpush1.msra.mxu0 0.0
    %2209 = vmatprep.subr.mxu0 0.0
    %2210 = vmatpush1.msra.mxu0 0.0
    %2211 = vmatprep.subr.mxu0 0.0
    %2212 = vmatpush1.msra.mxu0 %v2180
    %2213 = vmatprep.subr.mxu0 0.0
    %2214 = vmatpush1.msra.mxu0 %v2179
    %2215 = vmatprep.subr.mxu0 0.0
    %2216 = vmatpush1.msra.mxu0 %v2178
    %2217 = vmatprep.subr.mxu0 0.0
    %2218 = vmatpush1.msra.mxu0 %v2177
    %2219 = vmatprep.subr.mxu0 0.0
    %2220 = vmatpush1.msra.mxu0 %v2176
    %2221 = vmatprep.subr.mxu0 0.0
    %2222 = vmatpush1.msra.mxu0 %v2175
    %2223 = vmatprep.subr.mxu0 0.0
    %2224 = vmatpush1.msra.mxu0 %v2174
    %2225 = vmatprep.subr.mxu0 0.0
    %2226 = vmatpush1.msra.mxu0 %v2173
    %2227 = vmatprep.subr.mxu0 0.0
    %2228 = vmatpush2.msra.mxu0 0.0
    %2229 = vmatprep.subr.mxu0 0.0
    %2230 = vmatpush2.msra.mxu0 0.0
    %2231 = vmatprep.subr.mxu0 0.0
    %2232 = vmatpush2.msra.mxu0 0.0
    %2233 = vmatprep.subr.mxu0 0.0
    %2234 = vmatpush2.msra.mxu0 0.0
    %2235 = vmatprep.subr.mxu0 0.0
    %2236 = vmatpush2.msra.mxu0 0.0
    %2237 = vmatprep.subr.mxu0 0.0
    %2238 = vmatpush2.msra.mxu0 0.0
    %2239 = vmatprep.subr.mxu0 0.0
    %2240 = vmatpush2.msra.mxu0 0.0
    %2241 = vmatprep.subr.mxu0 0.0
    %2242 = vmatpush2.msra.mxu0 0.0
    %2243 = vmatprep.subr.mxu0 0.0
    %2244 = vmatpush2.msra.mxu0 0.0
    %2245 = vmatprep.subr.mxu0 0.0
    %2246 = vmatpush2.msra.mxu0 0.0
    %2247 = vmatprep.subr.mxu0 0.0
    %2248 = vmatpush2.msra.mxu0 0.0
    %2249 = vmatprep.subr.mxu0 0.0
    %2250 = vmatpush2.msra.mxu0 0.0
    %2251 = vmatprep.subr.mxu0 0.0
    %2252 = vmatpush2.msra.mxu0 0.0
    %2253 = vmatprep.subr.mxu0 0.0
    %2254 = vmatpush2.msra.mxu0 0.0
    %2255 = vmatprep.subr.mxu0 0.0
    %2256 = vmatpush2.msra.mxu0 0.0
    %2257 = vmatprep.subr.mxu0 0.0
    %2258 = vmatpush2.msra.mxu0 0.0
    %2259 = vmatprep.mubr.f32.mxu0 0.0
    %2260 = vmatmul.mubr.f32.gmra.mxu0 %v2190
    %v2261 = vpop.f32.mrf.mxu0
    %v2262 = vadd.f32 %v2186, %v2261
    %v2263 = vpop.f32.mrf.mxu0
    %2264 = vmatprep.mubr.f32.mxu0 0.0
    %2265 = vmatmul.mubr.f32.gmra.mxu0 %v2193
    %v2266 = vpop.f32.mrf.mxu0
    %v2267 = vadd.f32 %v2186, %v2266
    %v2268 = vpop.f32.mrf.mxu0
    %2269 = vdwg.mxu0
    %s2270 = scalar_lea.vmem %s5, 64
    %v2271 = vld [vmem:[%s2270] sm:$0xff]
    %v2272 = vld [vmem:[%s2270 + $0x8] sm:$0xff]
    %v2273 = vld [vmem:[%s2270 + $0x10] sm:$0xff]
    %v2274 = vld [vmem:[%s2270 + $0x18] sm:$0xff]
    %v2275 = vld [vmem:[%s2270 + $0x20] sm:$0xff]
    %v2276 = vld [vmem:[%s2270 + $0x28] sm:$0xff]
    %v2277 = vld [vmem:[%s2270 + $0x30] sm:$0xff]
    %v2278 = vld [vmem:[%s2270 + $0x38] sm:$0xff]
    %s2279 = scalar_lea.vmem [#allocation9], 1
    %v2280 = vld [vmem:[%s2279] sm:$0x1]
    %v2282 = vlaneseq
    %v2283 = vshrl.u32 %v2282, 7
    %v2284 = vsub.s32 0, %v2283
    %v2285 = vrot.slane %v2280, %v2284
    %2287 = vmatprep.subr.mxu0 0.0
    %2288 = vmatpush1.msra.mxu0 0.0
    %2289 = vmatprep.subr.mxu0 0.0
    %2290 = vmatpush1.msra.mxu0 0.0
    %2291 = vmatprep.subr.mxu0 0.0
    %2292 = vmatpush1.msra.mxu0 0.0
    %2293 = vmatprep.subr.mxu0 0.0
    %2294 = vmatpush1.msra.mxu0 0.0
    %2295 = vmatprep.subr.mxu0 0.0
    %2296 = vmatpush1.msra.mxu0 0.0
    %2297 = vmatprep.subr.mxu0 0.0
    %2298 = vmatpush1.msra.mxu0 0.0
    %2299 = vmatprep.subr.mxu0 0.0
    %2300 = vmatpush1.msra.mxu0 0.0
    %2301 = vmatprep.subr.mxu0 0.0
    %2302 = vmatpush1.msra.mxu0 0.0
    %2303 = vmatprep.subr.mxu0 0.0
    %2304 = vmatpush1.msra.mxu0 %v2278
    %2305 = vmatprep.subr.mxu0 0.0
    %2306 = vmatpush1.msra.mxu0 %v2277
    %2307 = vmatprep.subr.mxu0 0.0
    %2308 = vmatpush1.msra.mxu0 %v2276
    %2309 = vmatprep.subr.mxu0 0.0
    %2310 = vmatpush1.msra.mxu0 %v2275
    %2311 = vmatprep.subr.mxu0 0.0
    %2312 = vmatpush1.msra.mxu0 %v2274
    %2313 = vmatprep.subr.mxu0 0.0
    %2314 = vmatpush1.msra.mxu0 %v2273
    %2315 = vmatprep.subr.mxu0 0.0
    %2316 = vmatpush1.msra.mxu0 %v2272
    %2317 = vmatprep.subr.mxu0 0.0
    %2318 = vmatpush1.msra.mxu0 %v2271
    %2319 = vmatprep.subr.mxu0 0.0
    %2320 = vmatpush2.msra.mxu0 0.0
    %2321 = vmatprep.subr.mxu0 0.0
    %2322 = vmatpush2.msra.mxu0 0.0
    %2323 = vmatprep.subr.mxu0 0.0
    %2324 = vmatpush2.msra.mxu0 0.0
    %2325 = vmatprep.subr.mxu0 0.0
    %2326 = vmatpush2.msra.mxu0 0.0
    %2327 = vmatprep.subr.mxu0 0.0
    %2328 = vmatpush2.msra.mxu0 0.0
    %2329 = vmatprep.subr.mxu0 0.0
    %2330 = vmatpush2.msra.mxu0 0.0
    %2331 = vmatprep.subr.mxu0 0.0
    %2332 = vmatpush2.msra.mxu0 0.0
    %2333 = vmatprep.subr.mxu0 0.0
    %2334 = vmatpush2.msra.mxu0 0.0
    %2335 = vmatprep.subr.mxu0 0.0
    %2336 = vmatpush2.msra.mxu0 0.0
    %2337 = vmatprep.subr.mxu0 0.0
    %2338 = vmatpush2.msra.mxu0 0.0
    %2339 = vmatprep.subr.mxu0 0.0
    %2340 = vmatpush2.msra.mxu0 0.0
    %2341 = vmatprep.subr.mxu0 0.0
    %2342 = vmatpush2.msra.mxu0 0.0
    %2343 = vmatprep.subr.mxu0 0.0
    %2344 = vmatpush2.msra.mxu0 0.0
    %2345 = vmatprep.subr.mxu0 0.0
    %2346 = vmatpush2.msra.mxu0 0.0
    %2347 = vmatprep.subr.mxu0 0.0
    %2348 = vmatpush2.msra.mxu0 0.0
    %2349 = vmatprep.subr.mxu0 0.0
    %2350 = vmatpush2.msra.mxu0 0.0
    %2351 = vmatprep.mubr.f32.mxu0 0.0
    %2352 = vmatmul.mubr.f32.gmra.mxu0 %v2190
    %v2353 = vpop.f32.mrf.mxu0
    %v2354 = vadd.f32 %v2285, %v2353
    %v2355 = vpop.f32.mrf.mxu0
    %2356 = vmatprep.mubr.f32.mxu0 0.0
    %2357 = vmatmul.mubr.f32.gmra.mxu0 %v2193
    %v2358 = vpop.f32.mrf.mxu0
    %v2359 = vadd.f32 %v2285, %v2358
    %v2360 = vpop.f32.mrf.mxu0
    %2361 = vdwg.mxu0
    %2362 = vmatprep.subr.mxu0 0.0
    %2363 = vmatpush1.msra.mxu0 0.0
    %2364 = vmatprep.subr.mxu0 0.0
    %2365 = vmatpush1.msra.mxu0 0.0
    %2366 = vmatprep.subr.mxu0 0.0
    %2367 = vmatpush1.msra.mxu0 0.0
    %2368 = vmatprep.subr.mxu0 0.0
    %2369 = vmatpush1.msra.mxu0 0.0
    %2370 = vmatprep.subr.mxu0 0.0
    %2371 = vmatpush1.msra.mxu0 0.0
    %2372 = vmatprep.subr.mxu0 0.0
    %2373 = vmatpush1.msra.mxu0 0.0
    %2374 = vmatprep.subr.mxu0 0.0
    %2375 = vmatpush1.msra.mxu0 0.0
    %2376 = vmatprep.subr.mxu0 0.0
    %2377 = vmatpush1.msra.mxu0 0.0
    %2378 = vmatprep.subr.mxu0 0.0
    %2379 = vmatpush1.msra.mxu0 0.0
    %2380 = vmatprep.subr.mxu0 0.0
    %2381 = vmatpush1.msra.mxu0 0.0
    %2382 = vmatprep.subr.mxu0 0.0
    %2383 = vmatpush1.msra.mxu0 0.0
    %2384 = vmatprep.subr.mxu0 0.0
    %2385 = vmatpush1.msra.mxu0 0.0
    %2386 = vmatprep.subr.mxu0 0.0
    %2387 = vmatpush1.msra.mxu0 %v2167
    %2388 = vmatprep.subr.mxu0 0.0
    %2389 = vmatpush1.msra.mxu0 %v2166
    %2390 = vmatprep.subr.mxu0 0.0
    %2391 = vmatpush1.msra.mxu0 %v2165
    %2392 = vmatprep.subr.mxu0 0.0
    %2393 = vmatpush1.msra.mxu0 %v2164
    %2394 = vmatprep.subr.mxu0 0.0
    %2395 = vmatpush2.msra.mxu0 0.0
    %2396 = vmatprep.subr.mxu0 0.0
    %2397 = vmatpush2.msra.mxu0 0.0
    %2398 = vmatprep.subr.mxu0 0.0
    %2399 = vmatpush2.msra.mxu0 0.0
    %2400 = vmatprep.subr.mxu0 0.0
    %2401 = vmatpush2.msra.mxu0 0.0
    %2402 = vmatprep.subr.mxu0 0.0
    %2403 = vmatpush2.msra.mxu0 0.0
    %2404 = vmatprep.subr.mxu0 0.0
    %2405 = vmatpush2.msra.mxu0 0.0
    %2406 = vmatprep.subr.mxu0 0.0
    %2407 = vmatpush2.msra.mxu0 0.0
    %2408 = vmatprep.subr.mxu0 0.0
    %2409 = vmatpush2.msra.mxu0 0.0
    %2410 = vmatprep.subr.mxu0 0.0
    %2411 = vmatpush2.msra.mxu0 0.0
    %2412 = vmatprep.subr.mxu0 0.0
    %2413 = vmatpush2.msra.mxu0 0.0
    %2414 = vmatprep.subr.mxu0 0.0
    %2415 = vmatpush2.msra.mxu0 0.0
    %2416 = vmatprep.subr.mxu0 0.0
    %2417 = vmatpush2.msra.mxu0 0.0
    %2418 = vmatprep.subr.mxu0 0.0
    %2419 = vmatpush2.msra.mxu0 0.0
    %2420 = vmatprep.subr.mxu0 0.0
    %2421 = vmatpush2.msra.mxu0 0.0
    %2422 = vmatprep.subr.mxu0 0.0
    %2423 = vmatpush2.msra.mxu0 0.0
    %2424 = vmatprep.subr.mxu0 0.0
    %2425 = vmatpush2.msra.mxu0 0.0
    %2426 = vmatprep.mubr.f32.mxu0 0.0
    %2427 = vmatmul.mubr.f32.gmra.mxu0 %v393
    %v2428 = vpop.f32.mrf.mxu0
    %v2429 = vadd.f32 0.0, %v2428
    %v2430 = vpop.f32.mrf.mxu0
    %2431 = vdwg.mxu0
    %v2432 = vadd.f32 %v2262, %v2429
    %v2433 = vxor.u32 %v2432, 2147483648
    %v2434 = vmul.f32 %v2433, 1.442695
    %v2435 = vpow.pop %v2434
    %v2436 = vadd.f32 %v2435, 1.0
    %v2437 = vrcp.pop %v2436
    %v2438 = vmul.f32 1.0, %v2437
    %v2439 = vtanh.pop %v2432
    %v2440 = vsel %vm474, %v2439, %v2438
    %v2441 = vmul.f32 %v2440, 0.0
    %2443 = vrot.lane.b32.xlu0 %v2440, 64
    %v2444 = vpop.permute.xlu0 %2443
    %v2446 = vmul.f32 %v2440, %v2444
    %2448 = vrot.lane.b32.xlu0 %v2446, 32
    %v2449 = vpop.permute.xlu0 %2448
    %v2451 = vadd.f32 %v2441, %v2449
    %v2452 = vtanh.pop %v2451
    %2454 = vrot.lane.b32.xlu0 %v2452, 64
    %v2455 = vpop.permute.xlu0 %2454
    %v2457 = vmul.f32 %v2440, %v2455
    %2458 = vmatprep.subr.mxu0 0.0
    %2459 = vmatpush1.msra.mxu0 0.0
    %2460 = vmatprep.subr.mxu0 0.0
    %2461 = vmatpush1.msra.mxu0 0.0
    %2462 = vmatprep.subr.mxu0 0.0
    %2463 = vmatpush1.msra.mxu0 0.0
    %2464 = vmatprep.subr.mxu0 0.0
    %2465 = vmatpush1.msra.mxu0 0.0
    %2466 = vmatprep.subr.mxu0 0.0
    %2467 = vmatpush1.msra.mxu0 0.0
    %2468 = vmatprep.subr.mxu0 0.0
    %2469 = vmatpush1.msra.mxu0 0.0
    %2470 = vmatprep.subr.mxu0 0.0
    %2471 = vmatpush1.msra.mxu0 0.0
    %2472 = vmatprep.subr.mxu0 0.0
    %2473 = vmatpush1.msra.mxu0 0.0
    %2474 = vmatprep.subr.mxu0 0.0
    %2475 = vmatpush1.msra.mxu0 0.0
    %2476 = vmatprep.subr.mxu0 0.0
    %2477 = vmatpush1.msra.mxu0 0.0
    %2478 = vmatprep.subr.mxu0 0.0
    %2479 = vmatpush1.msra.mxu0 0.0
    %2480 = vmatprep.subr.mxu0 0.0
    %2481 = vmatpush1.msra.mxu0 0.0
    %2482 = vmatprep.subr.mxu0 0.0
    %2483 = vmatpush1.msra.mxu0 %v2172
    %2484 = vmatprep.subr.mxu0 0.0
    %2485 = vmatpush1.msra.mxu0 %v2171
    %2486 = vmatprep.subr.mxu0 0.0
    %2487 = vmatpush1.msra.mxu0 %v2170
    %2488 = vmatprep.subr.mxu0 0.0
    %2489 = vmatpush1.msra.mxu0 %v2169
    %2490 = vmatprep.subr.mxu0 0.0
    %2491 = vmatpush2.msra.mxu0 0.0
    %2492 = vmatprep.subr.mxu0 0.0
    %2493 = vmatpush2.msra.mxu0 0.0
    %2494 = vmatprep.subr.mxu0 0.0
    %2495 = vmatpush2.msra.mxu0 0.0
    %2496 = vmatprep.subr.mxu0 0.0
    %2497 = vmatpush2.msra.mxu0 0.0
    %2498 = vmatprep.subr.mxu0 0.0
    %2499 = vmatpush2.msra.mxu0 0.0
    %2500 = vmatprep.subr.mxu0 0.0
    %2501 = vmatpush2.msra.mxu0 0.0
    %2502 = vmatprep.subr.mxu0 0.0
    %2503 = vmatpush2.msra.mxu0 0.0
    %2504 = vmatprep.subr.mxu0 0.0
    %2505 = vmatpush2.msra.mxu0 0.0
    %2506 = vmatprep.subr.mxu0 0.0
    %2507 = vmatpush2.msra.mxu0 0.0
    %2508 = vmatprep.subr.mxu0 0.0
    %2509 = vmatpush2.msra.mxu0 0.0
    %2510 = vmatprep.subr.mxu0 0.0
    %2511 = vmatpush2.msra.mxu0 0.0
    %2512 = vmatprep.subr.mxu0 0.0
    %2513 = vmatpush2.msra.mxu0 0.0
    %2514 = vmatprep.subr.mxu0 0.0
    %2515 = vmatpush2.msra.mxu0 0.0
    %2516 = vmatprep.subr.mxu0 0.0
    %2517 = vmatpush2.msra.mxu0 0.0
    %2518 = vmatprep.subr.mxu0 0.0
    %2519 = vmatpush2.msra.mxu0 0.0
    %2520 = vmatprep.subr.mxu0 0.0
    %2521 = vmatpush2.msra.mxu0 0.0
    %2522 = vmatprep.mubr.f32.mxu0 0.0
    %2523 = vmatmul.mubr.f32.gmra.mxu0 %v393
    %v2524 = vpop.f32.mrf.mxu0
    %v2525 = vadd.f32 0.0, %v2524
    %v2526 = vpop.f32.mrf.mxu0
    %2527 = vdwg.mxu0
    %v2529 = vrot.slane %v2525, 2
    %v2531 = vadd.f32 %v2359, %v2529
    %v2532 = vxor.u32 %v2531, 2147483648
    %v2533 = vmul.f32 %v2532, 1.442695
    %v2534 = vpow.pop %v2533
    %v2535 = vadd.f32 %v2534, 1.0
    %v2536 = vrcp.pop %v2535
    %v2537 = vmul.f32 1.0, %v2536
    %v2538 = vtanh.pop %v2531
    %v2539 = vsel %vm474, %v2538, %v2537
    %v2540 = vmul.f32 %v2539, 0.0
    %2542 = vrot.lane.b32.xlu0 %v2539, 64
    %v2543 = vpop.permute.xlu0 %2542
    %v2545 = vmul.f32 %v2539, %v2543
    %2547 = vrot.lane.b32.xlu0 %v2545, 32
    %v2548 = vpop.permute.xlu0 %2547
    %v2550 = vadd.f32 %v2540, %v2548
    %v2551 = vtanh.pop %v2550
    %2553 = vrot.lane.b32.xlu0 %v2551, 64
    %v2554 = vpop.permute.xlu0 %2553
    %v2556 = vmul.f32 %v2539, %v2554
    %2558 = vrot.lane.b32.xlu0 %v2457, 32
    %v2559 = vpop.permute.xlu0 %2558
    %2561 = vst.msk [vmem:[#allocation3] sm:$0x3] %vm596, %v2559
    %2563 = vrot.lane.b32.xlu0 %v2556, 64
    %v2564 = vpop.permute.xlu0 %2563
    %2566 = vst.msk [vmem:[#allocation3 + $0x8] sm:$0xc0] %vm602, %v2564
    %v2567 = vsel %vm121, %v2559, 0
    %2569 = vmatprep.subr.mxu0 0.0
    %2570 = vmatpush1.msra.mxu0 0.0
    %2571 = vmatprep.subr.mxu0 0.0
    %2572 = vmatpush1.msra.mxu0 0.0
    %2573 = vmatprep.subr.mxu0 0.0
    %2574 = vmatpush1.msra.mxu0 0.0
    %2575 = vmatprep.subr.mxu0 0.0
    %2576 = vmatpush1.msra.mxu0 0.0
    %2577 = vmatprep.subr.mxu0 0.0
    %2578 = vmatpush1.msra.mxu0 0.0
    %2579 = vmatprep.subr.mxu0 0.0
    %2580 = vmatpush1.msra.mxu0 0.0
    %2581 = vmatprep.subr.mxu0 0.0
    %2582 = vmatpush1.msra.mxu0 0.0
    %2583 = vmatprep.subr.mxu0 0.0
    %2584 = vmatpush1.msra.mxu0 0.0
    %2585 = vmatprep.subr.mxu0 0.0
    %2586 = vmatpush1.msra.mxu0 0.0
    %2587 = vmatprep.subr.mxu0 0.0
    %2588 = vmatpush1.msra.mxu0 0.0
    %2589 = vmatprep.subr.mxu0 0.0
    %2590 = vmatpush1.msra.mxu0 0.0
    %2591 = vmatprep.subr.mxu0 0.0
    %2592 = vmatpush1.msra.mxu0 0.0
    %2593 = vmatprep.subr.mxu0 0.0
    %2594 = vmatpush1.msra.mxu0 %v2167
    %2595 = vmatprep.subr.mxu0 0.0
    %2596 = vmatpush1.msra.mxu0 %v2166
    %2597 = vmatprep.subr.mxu0 0.0
    %2598 = vmatpush1.msra.mxu0 %v2165
    %2599 = vmatprep.subr.mxu0 0.0
    %2600 = vmatpush1.msra.mxu0 %v2164
    %2601 = vmatprep.subr.mxu0 0.0
    %2602 = vmatpush2.msra.mxu0 0.0
    %2603 = vmatprep.subr.mxu0 0.0
    %2604 = vmatpush2.msra.mxu0 0.0
    %2605 = vmatprep.subr.mxu0 0.0
    %2606 = vmatpush2.msra.mxu0 0.0
    %2607 = vmatprep.subr.mxu0 0.0
    %2608 = vmatpush2.msra.mxu0 0.0
    %2609 = vmatprep.subr.mxu0 0.0
    %2610 = vmatpush2.msra.mxu0 0.0
    %2611 = vmatprep.subr.mxu0 0.0
    %2612 = vmatpush2.msra.mxu0 0.0
    %2613 = vmatprep.subr.mxu0 0.0
    %2614 = vmatpush2.msra.mxu0 0.0
    %2615 = vmatprep.subr.mxu0 0.0
    %2616 = vmatpush2.msra.mxu0 0.0
    %2617 = vmatprep.subr.mxu0 0.0
    %2618 = vmatpush2.msra.mxu0 0.0
    %2619 = vmatprep.subr.mxu0 0.0
    %2620 = vmatpush2.msra.mxu0 0.0
    %2621 = vmatprep.subr.mxu0 0.0
    %2622 = vmatpush2.msra.mxu0 0.0
    %2623 = vmatprep.subr.mxu0 0.0
    %2624 = vmatpush2.msra.mxu0 0.0
    %2625 = vmatprep.subr.mxu0 0.0
    %2626 = vmatpush2.msra.mxu0 0.0
    %2627 = vmatprep.subr.mxu0 0.0
    %2628 = vmatpush2.msra.mxu0 0.0
    %2629 = vmatprep.subr.mxu0 0.0
    %2630 = vmatpush2.msra.mxu0 0.0
    %2631 = vmatprep.subr.mxu0 0.0
    %2632 = vmatpush2.msra.mxu0 0.0
    %2633 = vmatprep.mubr.f32.mxu0 0.0
    %2634 = vmatmul.mubr.f32.gmra.mxu0 %v2567
    %v2635 = vpop.f32.mrf.mxu0
    %v2636 = vadd.f32 0.0, %v2635
    %v2637 = vpop.f32.mrf.mxu0
    %2638 = vdwg.mxu0
    %v2640 = vrot.slane %v2636, 6
    %v2642 = vadd.f32 %v2262, %v2640
    %v2643 = vxor.u32 %v2642, 2147483648
    %v2644 = vmul.f32 %v2643, 1.442695
    %v2645 = vpow.pop %v2644
    %v2646 = vadd.f32 %v2645, 1.0
    %v2647 = vrcp.pop %v2646
    %v2648 = vmul.f32 1.0, %v2647
    %v2649 = vtanh.pop %v2642
    %v2650 = vsel %vm474, %v2649, %v2648
    %v2652 = vrot.slane %v2451, 6
    %v2654 = vmul.f32 %v2650, %v2652
    %2656 = vrot.lane.b32.xlu0 %v2650, 64
    %v2657 = vpop.permute.xlu0 %2656
    %v2659 = vmul.f32 %v2650, %v2657
    %2661 = vrot.lane.b32.xlu0 %v2659, 32
    %v2662 = vpop.permute.xlu0 %2661
    %v2664 = vadd.f32 %v2654, %v2662
    %v2665 = vtanh.pop %v2664
    %2667 = vrot.lane.b32.xlu0 %v2665, 64
    %v2668 = vpop.permute.xlu0 %2667
    %v2670 = vmul.f32 %v2650, %v2668
    %v2671 = vrot.slane %v2556, 6
    %2672 = vrot.lane.b32.xlu0 %v2671, 32
    %v2673 = vpop.permute.xlu0 %2672
    %v2674 = vsel %vm121, %v2673, 0
    %2676 = vmatprep.subr.mxu0 0.0
    %2677 = vmatpush1.msra.mxu0 0.0
    %2678 = vmatprep.subr.mxu0 0.0
    %2679 = vmatpush1.msra.mxu0 0.0
    %2680 = vmatprep.subr.mxu0 0.0
    %2681 = vmatpush1.msra.mxu0 0.0
    %2682 = vmatprep.subr.mxu0 0.0
    %2683 = vmatpush1.msra.mxu0 0.0
    %2684 = vmatprep.subr.mxu0 0.0
    %2685 = vmatpush1.msra.mxu0 0.0
    %2686 = vmatprep.subr.mxu0 0.0
    %2687 = vmatpush1.msra.mxu0 0.0
    %2688 = vmatprep.subr.mxu0 0.0
    %2689 = vmatpush1.msra.mxu0 0.0
    %2690 = vmatprep.subr.mxu0 0.0
    %2691 = vmatpush1.msra.mxu0 0.0
    %2692 = vmatprep.subr.mxu0 0.0
    %2693 = vmatpush1.msra.mxu0 0.0
    %2694 = vmatprep.subr.mxu0 0.0
    %2695 = vmatpush1.msra.mxu0 0.0
    %2696 = vmatprep.subr.mxu0 0.0
    %2697 = vmatpush1.msra.mxu0 0.0
    %2698 = vmatprep.subr.mxu0 0.0
    %2699 = vmatpush1.msra.mxu0 0.0
    %2700 = vmatprep.subr.mxu0 0.0
    %2701 = vmatpush1.msra.mxu0 %v2172
    %2702 = vmatprep.subr.mxu0 0.0
    %2703 = vmatpush1.msra.mxu0 %v2171
    %2704 = vmatprep.subr.mxu0 0.0
    %2705 = vmatpush1.msra.mxu0 %v2170
    %2706 = vmatprep.subr.mxu0 0.0
    %2707 = vmatpush1.msra.mxu0 %v2169
    %2708 = vmatprep.subr.mxu0 0.0
    %2709 = vmatpush2.msra.mxu0 0.0
    %2710 = vmatprep.subr.mxu0 0.0
    %2711 = vmatpush2.msra.mxu0 0.0
    %2712 = vmatprep.subr.mxu0 0.0
    %2713 = vmatpush2.msra.mxu0 0.0
    %2714 = vmatprep.subr.mxu0 0.0
    %2715 = vmatpush2.msra.mxu0 0.0
    %2716 = vmatprep.subr.mxu0 0.0
    %2717 = vmatpush2.msra.mxu0 0.0
    %2718 = vmatprep.subr.mxu0 0.0
    %2719 = vmatpush2.msra.mxu0 0.0
    %2720 = vmatprep.subr.mxu0 0.0
    %2721 = vmatpush2.msra.mxu0 0.0
    %2722 = vmatprep.subr.mxu0 0.0
    %2723 = vmatpush2.msra.mxu0 0.0
    %2724 = vmatprep.subr.mxu0 0.0
    %2725 = vmatpush2.msra.mxu0 0.0
    %2726 = vmatprep.subr.mxu0 0.0
    %2727 = vmatpush2.msra.mxu0 0.0
    %2728 = vmatprep.subr.mxu0 0.0
    %2729 = vmatpush2.msra.mxu0 0.0
    %2730 = vmatprep.subr.mxu0 0.0
    %2731 = vmatpush2.msra.mxu0 0.0
    %2732 = vmatprep.subr.mxu0 0.0
    %2733 = vmatpush2.msra.mxu0 0.0
    %2734 = vmatprep.subr.mxu0 0.0
    %2735 = vmatpush2.msra.mxu0 0.0
    %2736 = vmatprep.subr.mxu0 0.0
    %2737 = vmatpush2.msra.mxu0 0.0
    %2738 = vmatprep.subr.mxu0 0.0
    %2739 = vmatpush2.msra.mxu0 0.0
    %2740 = vmatprep.mubr.f32.mxu0 0.0
    %2741 = vmatmul.mubr.f32.gmra.mxu0 %v2674
    %v2742 = vpop.f32.mrf.mxu0
    %v2743 = vadd.f32 0.0, %v2742
    %v2744 = vpop.f32.mrf.mxu0
    %2745 = vdwg.mxu0
    %v2747 = vrot.slane %v2743, 4
    %v2749 = vadd.f32 %v2359, %v2747
    %v2750 = vxor.u32 %v2749, 2147483648
    %v2751 = vmul.f32 %v2750, 1.442695
    %v2752 = vpow.pop %v2751
    %v2753 = vadd.f32 %v2752, 1.0
    %v2754 = vrcp.pop %v2753
    %v2755 = vmul.f32 1.0, %v2754
    %v2756 = vtanh.pop %v2749
    %v2757 = vsel %vm474, %v2756, %v2755
    %v2759 = vrot.slane %v2550, 2
    %v2761 = vmul.f32 %v2757, %v2759
    %2763 = vrot.lane.b32.xlu0 %v2757, 64
    %v2764 = vpop.permute.xlu0 %2763
    %v2766 = vmul.f32 %v2757, %v2764
    %2768 = vrot.lane.b32.xlu0 %v2766, 32
    %v2769 = vpop.permute.xlu0 %2768
    %v2771 = vadd.f32 %v2761, %v2769
    %v2772 = vtanh.pop %v2771
    %2774 = vrot.lane.b32.xlu0 %v2772, 64
    %v2775 = vpop.permute.xlu0 %2774
    %v2777 = vmul.f32 %v2757, %v2775
    %2779 = vrot.lane.b32.xlu0 %v2670, 32
    %v2780 = vpop.permute.xlu0 %2779
    %2782 = vst.msk [vmem:[#allocation3] sm:$0xc] %vm819, %v2780
    %2784 = vrot.lane.b32.xlu0 %v2777, 64
    %v2785 = vpop.permute.xlu0 %2784
    %2787 = vst.msk [vmem:[#allocation3 + $0x8] sm:$0x30] %vm825, %v2785
    %v2788 = vrot.slane %v2670, 2
    %2789 = vrot.lane.b32.xlu0 %v2788, 32
    %v2790 = vpop.permute.xlu0 %2789
    %v2791 = vsel %vm121, %v2790, 0
    %2793 = vmatprep.subr.mxu0 0.0
    %2794 = vmatpush1.msra.mxu0 0.0
    %2795 = vmatprep.subr.mxu0 0.0
    %2796 = vmatpush1.msra.mxu0 0.0
    %2797 = vmatprep.subr.mxu0 0.0
    %2798 = vmatpush1.msra.mxu0 0.0
    %2799 = vmatprep.subr.mxu0 0.0
    %2800 = vmatpush1.msra.mxu0 0.0
    %2801 = vmatprep.subr.mxu0 0.0
    %2802 = vmatpush1.msra.mxu0 0.0
    %2803 = vmatprep.subr.mxu0 0.0
    %2804 = vmatpush1.msra.mxu0 0.0
    %2805 = vmatprep.subr.mxu0 0.0
    %2806 = vmatpush1.msra.mxu0 0.0
    %2807 = vmatprep.subr.mxu0 0.0
    %2808 = vmatpush1.msra.mxu0 0.0
    %2809 = vmatprep.subr.mxu0 0.0
    %2810 = vmatpush1.msra.mxu0 0.0
    %2811 = vmatprep.subr.mxu0 0.0
    %2812 = vmatpush1.msra.mxu0 0.0
    %2813 = vmatprep.subr.mxu0 0.0
    %2814 = vmatpush1.msra.mxu0 0.0
    %2815 = vmatprep.subr.mxu0 0.0
    %2816 = vmatpush1.msra.mxu0 0.0
    %2817 = vmatprep.subr.mxu0 0.0
    %2818 = vmatpush1.msra.mxu0 %v2167
    %2819 = vmatprep.subr.mxu0 0.0
    %2820 = vmatpush1.msra.mxu0 %v2166
    %2821 = vmatprep.subr.mxu0 0.0
    %2822 = vmatpush1.msra.mxu0 %v2165
    %2823 = vmatprep.subr.mxu0 0.0
    %2824 = vmatpush1.msra.mxu0 %v2164
    %2825 = vmatprep.subr.mxu0 0.0
    %2826 = vmatpush2.msra.mxu0 0.0
    %2827 = vmatprep.subr.mxu0 0.0
    %2828 = vmatpush2.msra.mxu0 0.0
    %2829 = vmatprep.subr.mxu0 0.0
    %2830 = vmatpush2.msra.mxu0 0.0
    %2831 = vmatprep.subr.mxu0 0.0
    %2832 = vmatpush2.msra.mxu0 0.0
    %2833 = vmatprep.subr.mxu0 0.0
    %2834 = vmatpush2.msra.mxu0 0.0
    %2835 = vmatprep.subr.mxu0 0.0
    %2836 = vmatpush2.msra.mxu0 0.0
    %2837 = vmatprep.subr.mxu0 0.0
    %2838 = vmatpush2.msra.mxu0 0.0
    %2839 = vmatprep.subr.mxu0 0.0
    %2840 = vmatpush2.msra.mxu0 0.0
    %2841 = vmatprep.subr.mxu0 0.0
    %2842 = vmatpush2.msra.mxu0 0.0
    %2843 = vmatprep.subr.mxu0 0.0
    %2844 = vmatpush2.msra.mxu0 0.0
    %2845 = vmatprep.subr.mxu0 0.0
    %2846 = vmatpush2.msra.mxu0 0.0
    %2847 = vmatprep.subr.mxu0 0.0
    %2848 = vmatpush2.msra.mxu0 0.0
    %2849 = vmatprep.subr.mxu0 0.0
    %2850 = vmatpush2.msra.mxu0 0.0
    %2851 = vmatprep.subr.mxu0 0.0
    %2852 = vmatpush2.msra.mxu0 0.0
    %2853 = vmatprep.subr.mxu0 0.0
    %2854 = vmatpush2.msra.mxu0 0.0
    %2855 = vmatprep.subr.mxu0 0.0
    %2856 = vmatpush2.msra.mxu0 0.0
    %2857 = vmatprep.mubr.f32.mxu0 0.0
    %2858 = vmatmul.mubr.f32.gmra.mxu0 %v2791
    %v2859 = vpop.f32.mrf.mxu0
    %v2860 = vadd.f32 0.0, %v2859
    %v2861 = vpop.f32.mrf.mxu0
    %2862 = vdwg.mxu0
    %v2864 = vrot.slane %v2860, 4
    %v2866 = vadd.f32 %v2262, %v2864
    %v2867 = vxor.u32 %v2866, 2147483648
    %v2868 = vmul.f32 %v2867, 1.442695
    %v2869 = vpow.pop %v2868
    %v2870 = vadd.f32 %v2869, 1.0
    %v2871 = vrcp.pop %v2870
    %v2872 = vmul.f32 1.0, %v2871
    %v2873 = vtanh.pop %v2866
    %v2874 = vsel %vm474, %v2873, %v2872
    %v2876 = vrot.slane %v2664, 6
    %v2878 = vmul.f32 %v2874, %v2876
    %2880 = vrot.lane.b32.xlu0 %v2874, 64
    %v2881 = vpop.permute.xlu0 %2880
    %v2883 = vmul.f32 %v2874, %v2881
    %2885 = vrot.lane.b32.xlu0 %v2883, 32
    %v2886 = vpop.permute.xlu0 %2885
    %v2888 = vadd.f32 %v2878, %v2886
    %v2889 = vtanh.pop %v2888
    %2891 = vrot.lane.b32.xlu0 %v2889, 64
    %v2892 = vpop.permute.xlu0 %2891
    %v2894 = vmul.f32 %v2874, %v2892
    %v2895 = vrot.slane %v2777, 4
    %2896 = vrot.lane.b32.xlu0 %v2895, 32
    %v2897 = vpop.permute.xlu0 %2896
    %v2898 = vsel %vm121, %v2897, 0
    %2900 = vmatprep.subr.mxu0 0.0
    %2901 = vmatpush1.msra.mxu0 0.0
    %2902 = vmatprep.subr.mxu0 0.0
    %2903 = vmatpush1.msra.mxu0 0.0
    %2904 = vmatprep.subr.mxu0 0.0
    %2905 = vmatpush1.msra.mxu0 0.0
    %2906 = vmatprep.subr.mxu0 0.0
    %2907 = vmatpush1.msra.mxu0 0.0
    %2908 = vmatprep.subr.mxu0 0.0
    %2909 = vmatpush1.msra.mxu0 0.0
    %2910 = vmatprep.subr.mxu0 0.0
    %2911 = vmatpush1.msra.mxu0 0.0
    %2912 = vmatprep.subr.mxu0 0.0
    %2913 = vmatpush1.msra.mxu0 0.0
    %2914 = vmatprep.subr.mxu0 0.0
    %2915 = vmatpush1.msra.mxu0 0.0
    %2916 = vmatprep.subr.mxu0 0.0
    %2917 = vmatpush1.msra.mxu0 0.0
    %2918 = vmatprep.subr.mxu0 0.0
    %2919 = vmatpush1.msra.mxu0 0.0
    %2920 = vmatprep.subr.mxu0 0.0
    %2921 = vmatpush1.msra.mxu0 0.0
    %2922 = vmatprep.subr.mxu0 0.0
    %2923 = vmatpush1.msra.mxu0 0.0
    %2924 = vmatprep.subr.mxu0 0.0
    %2925 = vmatpush1.msra.mxu0 %v2172
    %2926 = vmatprep.subr.mxu0 0.0
    %2927 = vmatpush1.msra.mxu0 %v2171
    %2928 = vmatprep.subr.mxu0 0.0
    %2929 = vmatpush1.msra.mxu0 %v2170
    %2930 = vmatprep.subr.mxu0 0.0
    %2931 = vmatpush1.msra.mxu0 %v2169
    %2932 = vmatprep.subr.mxu0 0.0
    %2933 = vmatpush2.msra.mxu0 0.0
    %2934 = vmatprep.subr.mxu0 0.0
    %2935 = vmatpush2.msra.mxu0 0.0
    %2936 = vmatprep.subr.mxu0 0.0
    %2937 = vmatpush2.msra.mxu0 0.0
    %2938 = vmatprep.subr.mxu0 0.0
    %2939 = vmatpush2.msra.mxu0 0.0
    %2940 = vmatprep.subr.mxu0 0.0
    %2941 = vmatpush2.msra.mxu0 0.0
    %2942 = vmatprep.subr.mxu0 0.0
    %2943 = vmatpush2.msra.mxu0 0.0
    %2944 = vmatprep.subr.mxu0 0.0
    %2945 = vmatpush2.msra.mxu0 0.0
    %2946 = vmatprep.subr.mxu0 0.0
    %2947 = vmatpush2.msra.mxu0 0.0
    %2948 = vmatprep.subr.mxu0 0.0
    %2949 = vmatpush2.msra.mxu0 0.0
    %2950 = vmatprep.subr.mxu0 0.0
    %2951 = vmatpush2.msra.mxu0 0.0
    %2952 = vmatprep.subr.mxu0 0.0
    %2953 = vmatpush2.msra.mxu0 0.0
    %2954 = vmatprep.subr.mxu0 0.0
    %2955 = vmatpush2.msra.mxu0 0.0
    %2956 = vmatprep.subr.mxu0 0.0
    %2957 = vmatpush2.msra.mxu0 0.0
    %2958 = vmatprep.subr.mxu0 0.0
    %2959 = vmatpush2.msra.mxu0 0.0
    %2960 = vmatprep.subr.mxu0 0.0
    %2961 = vmatpush2.msra.mxu0 0.0
    %2962 = vmatprep.subr.mxu0 0.0
    %2963 = vmatpush2.msra.mxu0 0.0
    %2964 = vmatprep.mubr.f32.mxu0 0.0
    %2965 = vmatmul.mubr.f32.gmra.mxu0 %v2898
    %v2966 = vpop.f32.mrf.mxu0
    %v2967 = vadd.f32 0.0, %v2966
    %v2968 = vpop.f32.mrf.mxu0
    %2969 = vdwg.mxu0
    %v2971 = vrot.slane %v2967, 6
    %v2973 = vadd.f32 %v2359, %v2971
    %v2974 = vxor.u32 %v2973, 2147483648
    %v2975 = vmul.f32 %v2974, 1.442695
    %v2976 = vpow.pop %v2975
    %v2977 = vadd.f32 %v2976, 1.0
    %v2978 = vrcp.pop %v2977
    %v2979 = vmul.f32 1.0, %v2978
    %v2980 = vtanh.pop %v2973
    %v2981 = vsel %vm474, %v2980, %v2979
    %v2983 = vrot.slane %v2771, 2
    %v2985 = vmul.f32 %v2981, %v2983
    %2987 = vrot.lane.b32.xlu0 %v2981, 64
    %v2988 = vpop.permute.xlu0 %2987
    %v2990 = vmul.f32 %v2981, %v2988
    %2992 = vrot.lane.b32.xlu0 %v2990, 32
    %v2993 = vpop.permute.xlu0 %2992
    %v2995 = vadd.f32 %v2985, %v2993
    %v2996 = vtanh.pop %v2995
    %2998 = vrot.lane.b32.xlu0 %v2996, 64
    %v2999 = vpop.permute.xlu0 %2998
    %v3001 = vmul.f32 %v2981, %v2999
    %3003 = vrot.lane.b32.xlu0 %v2894, 32
    %v3004 = vpop.permute.xlu0 %3003
    %3006 = vst.msk [vmem:[#allocation3] sm:$0x30] %vm1045, %v3004
    %3008 = vrot.lane.b32.xlu0 %v3001, 64
    %v3009 = vpop.permute.xlu0 %3008
    %3011 = vst.msk [vmem:[#allocation3 + $0x8] sm:$0xc] %vm1051, %v3009
    %v3012 = vrot.slane %v2894, 4
    %3013 = vrot.lane.b32.xlu0 %v3012, 32
    %v3014 = vpop.permute.xlu0 %3013
    %v3015 = vsel %vm121, %v3014, 0
    %3017 = vmatprep.subr.mxu0 0.0
    %3018 = vmatpush1.msra.mxu0 0.0
    %3019 = vmatprep.subr.mxu0 0.0
    %3020 = vmatpush1.msra.mxu0 0.0
    %3021 = vmatprep.subr.mxu0 0.0
    %3022 = vmatpush1.msra.mxu0 0.0
    %3023 = vmatprep.subr.mxu0 0.0
    %3024 = vmatpush1.msra.mxu0 0.0
    %3025 = vmatprep.subr.mxu0 0.0
    %3026 = vmatpush1.msra.mxu0 0.0
    %3027 = vmatprep.subr.mxu0 0.0
    %3028 = vmatpush1.msra.mxu0 0.0
    %3029 = vmatprep.subr.mxu0 0.0
    %3030 = vmatpush1.msra.mxu0 0.0
    %3031 = vmatprep.subr.mxu0 0.0
    %3032 = vmatpush1.msra.mxu0 0.0
    %3033 = vmatprep.subr.mxu0 0.0
    %3034 = vmatpush1.msra.mxu0 0.0
    %3035 = vmatprep.subr.mxu0 0.0
    %3036 = vmatpush1.msra.mxu0 0.0
    %3037 = vmatprep.subr.mxu0 0.0
    %3038 = vmatpush1.msra.mxu0 0.0
    %3039 = vmatprep.subr.mxu0 0.0
    %3040 = vmatpush1.msra.mxu0 0.0
    %3041 = vmatprep.subr.mxu0 0.0
    %3042 = vmatpush1.msra.mxu0 %v2167
    %3043 = vmatprep.subr.mxu0 0.0
    %3044 = vmatpush1.msra.mxu0 %v2166
    %3045 = vmatprep.subr.mxu0 0.0
    %3046 = vmatpush1.msra.mxu0 %v2165
    %3047 = vmatprep.subr.mxu0 0.0
    %3048 = vmatpush1.msra.mxu0 %v2164
    %3049 = vmatprep.subr.mxu0 0.0
    %3050 = vmatpush2.msra.mxu0 0.0
    %3051 = vmatprep.subr.mxu0 0.0
    %3052 = vmatpush2.msra.mxu0 0.0
    %3053 = vmatprep.subr.mxu0 0.0
    %3054 = vmatpush2.msra.mxu0 0.0
    %3055 = vmatprep.subr.mxu0 0.0
    %3056 = vmatpush2.msra.mxu0 0.0
    %3057 = vmatprep.subr.mxu0 0.0
    %3058 = vmatpush2.msra.mxu0 0.0
    %3059 = vmatprep.subr.mxu0 0.0
    %3060 = vmatpush2.msra.mxu0 0.0
    %3061 = vmatprep.subr.mxu0 0.0
    %3062 = vmatpush2.msra.mxu0 0.0
    %3063 = vmatprep.subr.mxu0 0.0
    %3064 = vmatpush2.msra.mxu0 0.0
    %3065 = vmatprep.subr.mxu0 0.0
    %3066 = vmatpush2.msra.mxu0 0.0
    %3067 = vmatprep.subr.mxu0 0.0
    %3068 = vmatpush2.msra.mxu0 0.0
    %3069 = vmatprep.subr.mxu0 0.0
    %3070 = vmatpush2.msra.mxu0 0.0
    %3071 = vmatprep.subr.mxu0 0.0
    %3072 = vmatpush2.msra.mxu0 0.0
    %3073 = vmatprep.subr.mxu0 0.0
    %3074 = vmatpush2.msra.mxu0 0.0
    %3075 = vmatprep.subr.mxu0 0.0
    %3076 = vmatpush2.msra.mxu0 0.0
    %3077 = vmatprep.subr.mxu0 0.0
    %3078 = vmatpush2.msra.mxu0 0.0
    %3079 = vmatprep.subr.mxu0 0.0
    %3080 = vmatpush2.msra.mxu0 0.0
    %3081 = vmatprep.mubr.f32.mxu0 0.0
    %3082 = vmatmul.mubr.f32.gmra.mxu0 %v3015
    %v3083 = vpop.f32.mrf.mxu0
    %v3084 = vadd.f32 0.0, %v3083
    %v3085 = vpop.f32.mrf.mxu0
    %3086 = vdwg.mxu0
    %v3088 = vrot.slane %v3084, 2
    %v3090 = vadd.f32 %v2262, %v3088
    %v3091 = vxor.u32 %v3090, 2147483648
    %v3092 = vmul.f32 %v3091, 1.442695
    %v3093 = vpow.pop %v3092
    %v3094 = vadd.f32 %v3093, 1.0
    %v3095 = vrcp.pop %v3094
    %v3096 = vmul.f32 1.0, %v3095
    %v3097 = vtanh.pop %v3090
    %v3098 = vsel %vm474, %v3097, %v3096
    %v3100 = vrot.slane %v2888, 6
    %v3102 = vmul.f32 %v3098, %v3100
    %3104 = vrot.lane.b32.xlu0 %v3098, 64
    %v3105 = vpop.permute.xlu0 %3104
    %v3107 = vmul.f32 %v3098, %v3105
    %3109 = vrot.lane.b32.xlu0 %v3107, 32
    %v3110 = vpop.permute.xlu0 %3109
    %v3112 = vadd.f32 %v3102, %v3110
    %v3113 = vtanh.pop %v3112
    %3115 = vrot.lane.b32.xlu0 %v3113, 64
    %v3116 = vpop.permute.xlu0 %3115
    %v3118 = vmul.f32 %v3098, %v3116
    %v3119 = vrot.slane %v3001, 2
    %3120 = vrot.lane.b32.xlu0 %v3119, 32
    %v3121 = vpop.permute.xlu0 %3120
    %v3122 = vsel %vm121, %v3121, 0
    %3124 = vmatprep.subr.mxu0 0.0
    %3125 = vmatpush1.msra.mxu0 0.0
    %3126 = vmatprep.subr.mxu0 0.0
    %3127 = vmatpush1.msra.mxu0 0.0
    %3128 = vmatprep.subr.mxu0 0.0
    %3129 = vmatpush1.msra.mxu0 0.0
    %3130 = vmatprep.subr.mxu0 0.0
    %3131 = vmatpush1.msra.mxu0 0.0
    %3132 = vmatprep.subr.mxu0 0.0
    %3133 = vmatpush1.msra.mxu0 0.0
    %3134 = vmatprep.subr.mxu0 0.0
    %3135 = vmatpush1.msra.mxu0 0.0
    %3136 = vmatprep.subr.mxu0 0.0
    %3137 = vmatpush1.msra.mxu0 0.0
    %3138 = vmatprep.subr.mxu0 0.0
    %3139 = vmatpush1.msra.mxu0 0.0
    %3140 = vmatprep.subr.mxu0 0.0
    %3141 = vmatpush1.msra.mxu0 0.0
    %3142 = vmatprep.subr.mxu0 0.0
    %3143 = vmatpush1.msra.mxu0 0.0
    %3144 = vmatprep.subr.mxu0 0.0
    %3145 = vmatpush1.msra.mxu0 0.0
    %3146 = vmatprep.subr.mxu0 0.0
    %3147 = vmatpush1.msra.mxu0 0.0
    %3148 = vmatprep.subr.mxu0 0.0
    %3149 = vmatpush1.msra.mxu0 %v2172
    %3150 = vmatprep.subr.mxu0 0.0
    %3151 = vmatpush1.msra.mxu0 %v2171
    %3152 = vmatprep.subr.mxu0 0.0
    %3153 = vmatpush1.msra.mxu0 %v2170
    %3154 = vmatprep.subr.mxu0 0.0
    %3155 = vmatpush1.msra.mxu0 %v2169
    %3156 = vmatprep.subr.mxu0 0.0
    %3157 = vmatpush2.msra.mxu0 0.0
    %3158 = vmatprep.subr.mxu0 0.0
    %3159 = vmatpush2.msra.mxu0 0.0
    %3160 = vmatprep.subr.mxu0 0.0
    %3161 = vmatpush2.msra.mxu0 0.0
    %3162 = vmatprep.subr.mxu0 0.0
    %3163 = vmatpush2.msra.mxu0 0.0
    %3164 = vmatprep.subr.mxu0 0.0
    %3165 = vmatpush2.msra.mxu0 0.0
    %3166 = vmatprep.subr.mxu0 0.0
    %3167 = vmatpush2.msra.mxu0 0.0
    %3168 = vmatprep.subr.mxu0 0.0
    %3169 = vmatpush2.msra.mxu0 0.0
    %3170 = vmatprep.subr.mxu0 0.0
    %3171 = vmatpush2.msra.mxu0 0.0
    %3172 = vmatprep.subr.mxu0 0.0
    %3173 = vmatpush2.msra.mxu0 0.0
    %3174 = vmatprep.subr.mxu0 0.0
    %3175 = vmatpush2.msra.mxu0 0.0
    %3176 = vmatprep.subr.mxu0 0.0
    %3177 = vmatpush2.msra.mxu0 0.0
    %3178 = vmatprep.subr.mxu0 0.0
    %3179 = vmatpush2.msra.mxu0 0.0
    %3180 = vmatprep.subr.mxu0 0.0
    %3181 = vmatpush2.msra.mxu0 0.0
    %3182 = vmatprep.subr.mxu0 0.0
    %3183 = vmatpush2.msra.mxu0 0.0
    %3184 = vmatprep.subr.mxu0 0.0
    %3185 = vmatpush2.msra.mxu0 0.0
    %3186 = vmatprep.subr.mxu0 0.0
    %3187 = vmatpush2.msra.mxu0 0.0
    %3188 = vmatprep.mubr.f32.mxu0 0.0
    %3189 = vmatmul.mubr.f32.gmra.mxu0 %v3122
    %v3190 = vpop.f32.mrf.mxu0
    %v3191 = vadd.f32 0.0, %v3190
    %v3192 = vpop.f32.mrf.mxu0
    %3193 = vdwg.mxu0
    %v3194 = vadd.f32 %v2359, %v3191
    %v3195 = vxor.u32 %v3194, 2147483648
    %v3196 = vmul.f32 %v3195, 1.442695
    %v3197 = vpow.pop %v3196
    %v3198 = vadd.f32 %v3197, 1.0
    %v3199 = vrcp.pop %v3198
    %v3200 = vmul.f32 1.0, %v3199
    %v3201 = vtanh.pop %v3194
    %v3202 = vsel %vm474, %v3201, %v3200
    %v3204 = vrot.slane %v2995, 2
    %v3206 = vmul.f32 %v3202, %v3204
    %3208 = vrot.lane.b32.xlu0 %v3202, 64
    %v3209 = vpop.permute.xlu0 %3208
    %v3211 = vmul.f32 %v3202, %v3209
    %3213 = vrot.lane.b32.xlu0 %v3211, 32
    %v3214 = vpop.permute.xlu0 %3213
    %v3216 = vadd.f32 %v3206, %v3214
    %v3217 = vtanh.pop %v3216
    %3219 = vrot.lane.b32.xlu0 %v3217, 64
    %v3220 = vpop.permute.xlu0 %3219
    %v3222 = vmul.f32 %v3202, %v3220
    %3224 = vrot.lane.b32.xlu0 %v3118, 32
    %v3225 = vpop.permute.xlu0 %3224
    %3227 = vst.msk [vmem:[#allocation3] sm:$0xc0] %vm1268, %v3225
    %3229 = vrot.lane.b32.xlu0 %v3222, 64
    %v3230 = vpop.permute.xlu0 %3229
    %3232 = vst.msk [vmem:[#allocation3 + $0x8] sm:$0x3] %vm1274, %v3230
    %v3233 = vrot.slane %v3118, 6
    %3234 = vrot.lane.b32.xlu0 %v3233, 32
    %v3235 = vpop.permute.xlu0 %3234
    %v3236 = vsel %vm121, %v3235, 0
    %3238 = vmatprep.subr.mxu0 0.0
    %3239 = vmatpush1.msra.mxu0 0.0
    %3240 = vmatprep.subr.mxu0 0.0
    %3241 = vmatpush1.msra.mxu0 0.0
    %3242 = vmatprep.subr.mxu0 0.0
    %3243 = vmatpush1.msra.mxu0 0.0
    %3244 = vmatprep.subr.mxu0 0.0
    %3245 = vmatpush1.msra.mxu0 0.0
    %3246 = vmatprep.subr.mxu0 0.0
    %3247 = vmatpush1.msra.mxu0 0.0
    %3248 = vmatprep.subr.mxu0 0.0
    %3249 = vmatpush1.msra.mxu0 0.0
    %3250 = vmatprep.subr.mxu0 0.0
    %3251 = vmatpush1.msra.mxu0 0.0
    %3252 = vmatprep.subr.mxu0 0.0
    %3253 = vmatpush1.msra.mxu0 0.0
    %3254 = vmatprep.subr.mxu0 0.0
    %3255 = vmatpush1.msra.mxu0 0.0
    %3256 = vmatprep.subr.mxu0 0.0
    %3257 = vmatpush1.msra.mxu0 0.0
    %3258 = vmatprep.subr.mxu0 0.0
    %3259 = vmatpush1.msra.mxu0 0.0
    %3260 = vmatprep.subr.mxu0 0.0
    %3261 = vmatpush1.msra.mxu0 0.0
    %3262 = vmatprep.subr.mxu0 0.0
    %3263 = vmatpush1.msra.mxu0 %v2167
    %3264 = vmatprep.subr.mxu0 0.0
    %3265 = vmatpush1.msra.mxu0 %v2166
    %3266 = vmatprep.subr.mxu0 0.0
    %3267 = vmatpush1.msra.mxu0 %v2165
    %3268 = vmatprep.subr.mxu0 0.0
    %3269 = vmatpush1.msra.mxu0 %v2164
    %3270 = vmatprep.subr.mxu0 0.0
    %3271 = vmatpush2.msra.mxu0 0.0
    %3272 = vmatprep.subr.mxu0 0.0
    %3273 = vmatpush2.msra.mxu0 0.0
    %3274 = vmatprep.subr.mxu0 0.0
    %3275 = vmatpush2.msra.mxu0 0.0
    %3276 = vmatprep.subr.mxu0 0.0
    %3277 = vmatpush2.msra.mxu0 0.0
    %3278 = vmatprep.subr.mxu0 0.0
    %3279 = vmatpush2.msra.mxu0 0.0
    %3280 = vmatprep.subr.mxu0 0.0
    %3281 = vmatpush2.msra.mxu0 0.0
    %3282 = vmatprep.subr.mxu0 0.0
    %3283 = vmatpush2.msra.mxu0 0.0
    %3284 = vmatprep.subr.mxu0 0.0
    %3285 = vmatpush2.msra.mxu0 0.0
    %3286 = vmatprep.subr.mxu0 0.0
    %3287 = vmatpush2.msra.mxu0 0.0
    %3288 = vmatprep.subr.mxu0 0.0
    %3289 = vmatpush2.msra.mxu0 0.0
    %3290 = vmatprep.subr.mxu0 0.0
    %3291 = vmatpush2.msra.mxu0 0.0
    %3292 = vmatprep.subr.mxu0 0.0
    %3293 = vmatpush2.msra.mxu0 0.0
    %3294 = vmatprep.subr.mxu0 0.0
    %3295 = vmatpush2.msra.mxu0 0.0
    %3296 = vmatprep.subr.mxu0 0.0
    %3297 = vmatpush2.msra.mxu0 0.0
    %3298 = vmatprep.subr.mxu0 0.0
    %3299 = vmatpush2.msra.mxu0 0.0
    %3300 = vmatprep.subr.mxu0 0.0
    %3301 = vmatpush2.msra.mxu0 0.0
    %3302 = vmatprep.mubr.f32.mxu0 0.0
    %3303 = vmatmul.mubr.f32.gmra.mxu0 %v3236
    %v3304 = vpop.f32.mrf.mxu0
    %v3305 = vadd.f32 0.0, %v3304
    %v3306 = vpop.f32.mrf.mxu0
    %3307 = vdwg.mxu0
    %v3308 = vadd.f32 %v2267, %v3305
    %v3309 = vxor.u32 %v3308, 2147483648
    %v3310 = vmul.f32 %v3309, 1.442695
    %v3311 = vpow.pop %v3310
    %v3312 = vadd.f32 %v3311, 1.0
    %v3313 = vrcp.pop %v3312
    %v3314 = vmul.f32 1.0, %v3313
    %v3315 = vtanh.pop %v3308
    %v3316 = vsel %vm474, %v3315, %v3314
    %v3318 = vrot.slane %v3112, 6
    %v3320 = vmul.f32 %v3316, %v3318
    %3322 = vrot.lane.b32.xlu0 %v3316, 64
    %v3323 = vpop.permute.xlu0 %3322
    %v3325 = vmul.f32 %v3316, %v3323
    %3327 = vrot.lane.b32.xlu0 %v3325, 32
    %v3328 = vpop.permute.xlu0 %3327
    %v3330 = vadd.f32 %v3320, %v3328
    %v3331 = vtanh.pop %v3330
    %3333 = vrot.lane.b32.xlu0 %v3331, 64
    %v3334 = vpop.permute.xlu0 %3333
    %v3336 = vmul.f32 %v3316, %v3334
    %3337 = vrot.lane.b32.xlu0 %v3222, 32
    %v3338 = vpop.permute.xlu0 %3337
    %v3339 = vsel %vm121, %v3338, 0
    %3341 = vmatprep.subr.mxu0 0.0
    %3342 = vmatpush1.msra.mxu0 0.0
    %3343 = vmatprep.subr.mxu0 0.0
    %3344 = vmatpush1.msra.mxu0 0.0
    %3345 = vmatprep.subr.mxu0 0.0
    %3346 = vmatpush1.msra.mxu0 0.0
    %3347 = vmatprep.subr.mxu0 0.0
    %3348 = vmatpush1.msra.mxu0 0.0
    %3349 = vmatprep.subr.mxu0 0.0
    %3350 = vmatpush1.msra.mxu0 0.0
    %3351 = vmatprep.subr.mxu0 0.0
    %3352 = vmatpush1.msra.mxu0 0.0
    %3353 = vmatprep.subr.mxu0 0.0
    %3354 = vmatpush1.msra.mxu0 0.0
    %3355 = vmatprep.subr.mxu0 0.0
    %3356 = vmatpush1.msra.mxu0 0.0
    %3357 = vmatprep.subr.mxu0 0.0
    %3358 = vmatpush1.msra.mxu0 0.0
    %3359 = vmatprep.subr.mxu0 0.0
    %3360 = vmatpush1.msra.mxu0 0.0
    %3361 = vmatprep.subr.mxu0 0.0
    %3362 = vmatpush1.msra.mxu0 0.0
    %3363 = vmatprep.subr.mxu0 0.0
    %3364 = vmatpush1.msra.mxu0 0.0
    %3365 = vmatprep.subr.mxu0 0.0
    %3366 = vmatpush1.msra.mxu0 %v2172
    %3367 = vmatprep.subr.mxu0 0.0
    %3368 = vmatpush1.msra.mxu0 %v2171
    %3369 = vmatprep.subr.mxu0 0.0
    %3370 = vmatpush1.msra.mxu0 %v2170
    %3371 = vmatprep.subr.mxu0 0.0
    %3372 = vmatpush1.msra.mxu0 %v2169
    %3373 = vmatprep.subr.mxu0 0.0
    %3374 = vmatpush2.msra.mxu0 0.0
    %3375 = vmatprep.subr.mxu0 0.0
    %3376 = vmatpush2.msra.mxu0 0.0
    %3377 = vmatprep.subr.mxu0 0.0
    %3378 = vmatpush2.msra.mxu0 0.0
    %3379 = vmatprep.subr.mxu0 0.0
    %3380 = vmatpush2.msra.mxu0 0.0
    %3381 = vmatprep.subr.mxu0 0.0
    %3382 = vmatpush2.msra.mxu0 0.0
    %3383 = vmatprep.subr.mxu0 0.0
    %3384 = vmatpush2.msra.mxu0 0.0
    %3385 = vmatprep.subr.mxu0 0.0
    %3386 = vmatpush2.msra.mxu0 0.0
    %3387 = vmatprep.subr.mxu0 0.0
    %3388 = vmatpush2.msra.mxu0 0.0
    %3389 = vmatprep.subr.mxu0 0.0
    %3390 = vmatpush2.msra.mxu0 0.0
    %3391 = vmatprep.subr.mxu0 0.0
    %3392 = vmatpush2.msra.mxu0 0.0
    %3393 = vmatprep.subr.mxu0 0.0
    %3394 = vmatpush2.msra.mxu0 0.0
    %3395 = vmatprep.subr.mxu0 0.0
    %3396 = vmatpush2.msra.mxu0 0.0
    %3397 = vmatprep.subr.mxu0 0.0
    %3398 = vmatpush2.msra.mxu0 0.0
    %3399 = vmatprep.subr.mxu0 0.0
    %3400 = vmatpush2.msra.mxu0 0.0
    %3401 = vmatprep.subr.mxu0 0.0
    %3402 = vmatpush2.msra.mxu0 0.0
    %3403 = vmatprep.subr.mxu0 0.0
    %3404 = vmatpush2.msra.mxu0 0.0
    %3405 = vmatprep.mubr.f32.mxu0 0.0
    %3406 = vmatmul.mubr.f32.gmra.mxu0 %v3339
    %v3407 = vpop.f32.mrf.mxu0
    %v3408 = vadd.f32 0.0, %v3407
    %v3409 = vpop.f32.mrf.mxu0
    %3410 = vdwg.mxu0
    %v3412 = vrot.slane %v3408, 2
    %v3414 = vadd.f32 %v2354, %v3412
    %v3415 = vxor.u32 %v3414, 2147483648
    %v3416 = vmul.f32 %v3415, 1.442695
    %v3417 = vpow.pop %v3416
    %v3418 = vadd.f32 %v3417, 1.0
    %v3419 = vrcp.pop %v3418
    %v3420 = vmul.f32 1.0, %v3419
    %v3421 = vtanh.pop %v3414
    %v3422 = vsel %vm474, %v3421, %v3420
    %v3424 = vrot.slane %v3216, 2
    %v3426 = vmul.f32 %v3422, %v3424
    %3428 = vrot.lane.b32.xlu0 %v3422, 64
    %v3429 = vpop.permute.xlu0 %3428
    %v3431 = vmul.f32 %v3422, %v3429
    %3433 = vrot.lane.b32.xlu0 %v3431, 32
    %v3434 = vpop.permute.xlu0 %3433
    %v3436 = vadd.f32 %v3426, %v3434
    %v3437 = vtanh.pop %v3436
    %3439 = vrot.lane.b32.xlu0 %v3437, 64
    %v3440 = vpop.permute.xlu0 %3439
    %v3442 = vmul.f32 %v3422, %v3440
    %3444 = vrot.lane.b32.xlu0 %v3336, 32
    %v3445 = vpop.permute.xlu0 %3444
    %3447 = vst.msk [vmem:[#allocation3 + $0x8] sm:$0x3] %vm596, %v3445
    %3449 = vrot.lane.b32.xlu0 %v3442, 64
    %v3450 = vpop.permute.xlu0 %3449
    %3452 = vst.msk [vmem:[#allocation3] sm:$0xc0] %vm602, %v3450
    %v3453 = vsel %vm121, %v3445, 0
    %3455 = vmatprep.subr.mxu0 0.0
    %3456 = vmatpush1.msra.mxu0 0.0
    %3457 = vmatprep.subr.mxu0 0.0
    %3458 = vmatpush1.msra.mxu0 0.0
    %3459 = vmatprep.subr.mxu0 0.0
    %3460 = vmatpush1.msra.mxu0 0.0
    %3461 = vmatprep.subr.mxu0 0.0
    %3462 = vmatpush1.msra.mxu0 0.0
    %3463 = vmatprep.subr.mxu0 0.0
    %3464 = vmatpush1.msra.mxu0 0.0
    %3465 = vmatprep.subr.mxu0 0.0
    %3466 = vmatpush1.msra.mxu0 0.0
    %3467 = vmatprep.subr.mxu0 0.0
    %3468 = vmatpush1.msra.mxu0 0.0
    %3469 = vmatprep.subr.mxu0 0.0
    %3470 = vmatpush1.msra.mxu0 0.0
    %3471 = vmatprep.subr.mxu0 0.0
    %3472 = vmatpush1.msra.mxu0 0.0
    %3473 = vmatprep.subr.mxu0 0.0
    %3474 = vmatpush1.msra.mxu0 0.0
    %3475 = vmatprep.subr.mxu0 0.0
    %3476 = vmatpush1.msra.mxu0 0.0
    %3477 = vmatprep.subr.mxu0 0.0
    %3478 = vmatpush1.msra.mxu0 0.0
    %3479 = vmatprep.subr.mxu0 0.0
    %3480 = vmatpush1.msra.mxu0 %v2167
    %3481 = vmatprep.subr.mxu0 0.0
    %3482 = vmatpush1.msra.mxu0 %v2166
    %3483 = vmatprep.subr.mxu0 0.0
    %3484 = vmatpush1.msra.mxu0 %v2165
    %3485 = vmatprep.subr.mxu0 0.0
    %3486 = vmatpush1.msra.mxu0 %v2164
    %3487 = vmatprep.subr.mxu0 0.0
    %3488 = vmatpush2.msra.mxu0 0.0
    %3489 = vmatprep.subr.mxu0 0.0
    %3490 = vmatpush2.msra.mxu0 0.0
    %3491 = vmatprep.subr.mxu0 0.0
    %3492 = vmatpush2.msra.mxu0 0.0
    %3493 = vmatprep.subr.mxu0 0.0
    %3494 = vmatpush2.msra.mxu0 0.0
    %3495 = vmatprep.subr.mxu0 0.0
    %3496 = vmatpush2.msra.mxu0 0.0
    %3497 = vmatprep.subr.mxu0 0.0
    %3498 = vmatpush2.msra.mxu0 0.0
    %3499 = vmatprep.subr.mxu0 0.0
    %3500 = vmatpush2.msra.mxu0 0.0
    %3501 = vmatprep.subr.mxu0 0.0
    %3502 = vmatpush2.msra.mxu0 0.0
    %3503 = vmatprep.subr.mxu0 0.0
    %3504 = vmatpush2.msra.mxu0 0.0
    %3505 = vmatprep.subr.mxu0 0.0
    %3506 = vmatpush2.msra.mxu0 0.0
    %3507 = vmatprep.subr.mxu0 0.0
    %3508 = vmatpush2.msra.mxu0 0.0
    %3509 = vmatprep.subr.mxu0 0.0
    %3510 = vmatpush2.msra.mxu0 0.0
    %3511 = vmatprep.subr.mxu0 0.0
    %3512 = vmatpush2.msra.mxu0 0.0
    %3513 = vmatprep.subr.mxu0 0.0
    %3514 = vmatpush2.msra.mxu0 0.0
    %3515 = vmatprep.subr.mxu0 0.0
    %3516 = vmatpush2.msra.mxu0 0.0
    %3517 = vmatprep.subr.mxu0 0.0
    %3518 = vmatpush2.msra.mxu0 0.0
    %3519 = vmatprep.mubr.f32.mxu0 0.0
    %3520 = vmatmul.mubr.f32.gmra.mxu0 %v3453
    %v3521 = vpop.f32.mrf.mxu0
    %v3522 = vadd.f32 0.0, %v3521
    %v3523 = vpop.f32.mrf.mxu0
    %3524 = vdwg.mxu0
    %v3526 = vrot.slane %v3522, 6
    %v3528 = vadd.f32 %v2267, %v3526
    %v3529 = vxor.u32 %v3528, 2147483648
    %v3530 = vmul.f32 %v3529, 1.442695
    %v3531 = vpow.pop %v3530
    %v3532 = vadd.f32 %v3531, 1.0
    %v3533 = vrcp.pop %v3532
    %v3534 = vmul.f32 1.0, %v3533
    %v3535 = vtanh.pop %v3528
    %v3536 = vsel %vm474, %v3535, %v3534
    %v3538 = vrot.slane %v3330, 6
    %v3540 = vmul.f32 %v3536, %v3538
    %3542 = vrot.lane.b32.xlu0 %v3536, 64
    %v3543 = vpop.permute.xlu0 %3542
    %v3545 = vmul.f32 %v3536, %v3543
    %3547 = vrot.lane.b32.xlu0 %v3545, 32
    %v3548 = vpop.permute.xlu0 %3547
    %v3550 = vadd.f32 %v3540, %v3548
    %v3551 = vtanh.pop %v3550
    %3553 = vrot.lane.b32.xlu0 %v3551, 64
    %v3554 = vpop.permute.xlu0 %3553
    %v3556 = vmul.f32 %v3536, %v3554
    %v3557 = vrot.slane %v3442, 6
    %3558 = vrot.lane.b32.xlu0 %v3557, 32
    %v3559 = vpop.permute.xlu0 %3558
    %v3560 = vsel %vm121, %v3559, 0
    %3562 = vmatprep.subr.mxu0 0.0
    %3563 = vmatpush1.msra.mxu0 0.0
    %3564 = vmatprep.subr.mxu0 0.0
    %3565 = vmatpush1.msra.mxu0 0.0
    %3566 = vmatprep.subr.mxu0 0.0
    %3567 = vmatpush1.msra.mxu0 0.0
    %3568 = vmatprep.subr.mxu0 0.0
    %3569 = vmatpush1.msra.mxu0 0.0
    %3570 = vmatprep.subr.mxu0 0.0
    %3571 = vmatpush1.msra.mxu0 0.0
    %3572 = vmatprep.subr.mxu0 0.0
    %3573 = vmatpush1.msra.mxu0 0.0
    %3574 = vmatprep.subr.mxu0 0.0
    %3575 = vmatpush1.msra.mxu0 0.0
    %3576 = vmatprep.subr.mxu0 0.0
    %3577 = vmatpush1.msra.mxu0 0.0
    %3578 = vmatprep.subr.mxu0 0.0
    %3579 = vmatpush1.msra.mxu0 0.0
    %3580 = vmatprep.subr.mxu0 0.0
    %3581 = vmatpush1.msra.mxu0 0.0
    %3582 = vmatprep.subr.mxu0 0.0
    %3583 = vmatpush1.msra.mxu0 0.0
    %3584 = vmatprep.subr.mxu0 0.0
    %3585 = vmatpush1.msra.mxu0 0.0
    %3586 = vmatprep.subr.mxu0 0.0
    %3587 = vmatpush1.msra.mxu0 %v2172
    %3588 = vmatprep.subr.mxu0 0.0
    %3589 = vmatpush1.msra.mxu0 %v2171
    %3590 = vmatprep.subr.mxu0 0.0
    %3591 = vmatpush1.msra.mxu0 %v2170
    %3592 = vmatprep.subr.mxu0 0.0
    %3593 = vmatpush1.msra.mxu0 %v2169
    %3594 = vmatprep.subr.mxu0 0.0
    %3595 = vmatpush2.msra.mxu0 0.0
    %3596 = vmatprep.subr.mxu0 0.0
    %3597 = vmatpush2.msra.mxu0 0.0
    %3598 = vmatprep.subr.mxu0 0.0
    %3599 = vmatpush2.msra.mxu0 0.0
    %3600 = vmatprep.subr.mxu0 0.0
    %3601 = vmatpush2.msra.mxu0 0.0
    %3602 = vmatprep.subr.mxu0 0.0
    %3603 = vmatpush2.msra.mxu0 0.0
    %3604 = vmatprep.subr.mxu0 0.0
    %3605 = vmatpush2.msra.mxu0 0.0
    %3606 = vmatprep.subr.mxu0 0.0
    %3607 = vmatpush2.msra.mxu0 0.0
    %3608 = vmatprep.subr.mxu0 0.0
    %3609 = vmatpush2.msra.mxu0 0.0
    %3610 = vmatprep.subr.mxu0 0.0
    %3611 = vmatpush2.msra.mxu0 0.0
    %3612 = vmatprep.subr.mxu0 0.0
    %3613 = vmatpush2.msra.mxu0 0.0
    %3614 = vmatprep.subr.mxu0 0.0
    %3615 = vmatpush2.msra.mxu0 0.0
    %3616 = vmatprep.subr.mxu0 0.0
    %3617 = vmatpush2.msra.mxu0 0.0
    %3618 = vmatprep.subr.mxu0 0.0
    %3619 = vmatpush2.msra.mxu0 0.0
    %3620 = vmatprep.subr.mxu0 0.0
    %3621 = vmatpush2.msra.mxu0 0.0
    %3622 = vmatprep.subr.mxu0 0.0
    %3623 = vmatpush2.msra.mxu0 0.0
    %3624 = vmatprep.subr.mxu0 0.0
    %3625 = vmatpush2.msra.mxu0 0.0
    %3626 = vmatprep.mubr.f32.mxu0 0.0
    %3627 = vmatmul.mubr.f32.gmra.mxu0 %v3560
    %v3628 = vpop.f32.mrf.mxu0
    %v3629 = vadd.f32 0.0, %v3628
    %v3630 = vpop.f32.mrf.mxu0
    %3631 = vdwg.mxu0
    %v3633 = vrot.slane %v3629, 4
    %v3635 = vadd.f32 %v2354, %v3633
    %v3636 = vxor.u32 %v3635, 2147483648
    %v3637 = vmul.f32 %v3636, 1.442695
    %v3638 = vpow.pop %v3637
    %v3639 = vadd.f32 %v3638, 1.0
    %v3640 = vrcp.pop %v3639
    %v3641 = vmul.f32 1.0, %v3640
    %v3642 = vtanh.pop %v3635
    %v3643 = vsel %vm474, %v3642, %v3641
    %v3645 = vrot.slane %v3436, 2
    %v3647 = vmul.f32 %v3643, %v3645
    %3649 = vrot.lane.b32.xlu0 %v3643, 64
    %v3650 = vpop.permute.xlu0 %3649
    %v3652 = vmul.f32 %v3643, %v3650
    %3654 = vrot.lane.b32.xlu0 %v3652, 32
    %v3655 = vpop.permute.xlu0 %3654
    %v3657 = vadd.f32 %v3647, %v3655
    %v3658 = vtanh.pop %v3657
    %3660 = vrot.lane.b32.xlu0 %v3658, 64
    %v3661 = vpop.permute.xlu0 %3660
    %v3663 = vmul.f32 %v3643, %v3661
    %3665 = vrot.lane.b32.xlu0 %v3556, 32
    %v3666 = vpop.permute.xlu0 %3665
    %3668 = vst.msk [vmem:[#allocation3 + $0x8] sm:$0xc] %vm819, %v3666
    %3670 = vrot.lane.b32.xlu0 %v3663, 64
    %v3671 = vpop.permute.xlu0 %3670
    %3673 = vst.msk [vmem:[#allocation3] sm:$0x30] %vm825, %v3671
    %v3674 = vrot.slane %v3556, 2
    %3675 = vrot.lane.b32.xlu0 %v3674, 32
    %v3676 = vpop.permute.xlu0 %3675
    %v3677 = vsel %vm121, %v3676, 0
    %3679 = vmatprep.subr.mxu0 0.0
    %3680 = vmatpush1.msra.mxu0 0.0
    %3681 = vmatprep.subr.mxu0 0.0
    %3682 = vmatpush1.msra.mxu0 0.0
    %3683 = vmatprep.subr.mxu0 0.0
    %3684 = vmatpush1.msra.mxu0 0.0
    %3685 = vmatprep.subr.mxu0 0.0
    %3686 = vmatpush1.msra.mxu0 0.0
    %3687 = vmatprep.subr.mxu0 0.0
    %3688 = vmatpush1.msra.mxu0 0.0
    %3689 = vmatprep.subr.mxu0 0.0
    %3690 = vmatpush1.msra.mxu0 0.0
    %3691 = vmatprep.subr.mxu0 0.0
    %3692 = vmatpush1.msra.mxu0 0.0
    %3693 = vmatprep.subr.mxu0 0.0
    %3694 = vmatpush1.msra.mxu0 0.0
    %3695 = vmatprep.subr.mxu0 0.0
    %3696 = vmatpush1.msra.mxu0 0.0
    %3697 = vmatprep.subr.mxu0 0.0
    %3698 = vmatpush1.msra.mxu0 0.0
    %3699 = vmatprep.subr.mxu0 0.0
    %3700 = vmatpush1.msra.mxu0 0.0
    %3701 = vmatprep.subr.mxu0 0.0
    %3702 = vmatpush1.msra.mxu0 0.0
    %3703 = vmatprep.subr.mxu0 0.0
    %3704 = vmatpush1.msra.mxu0 %v2167
    %3705 = vmatprep.subr.mxu0 0.0
    %3706 = vmatpush1.msra.mxu0 %v2166
    %3707 = vmatprep.subr.mxu0 0.0
    %3708 = vmatpush1.msra.mxu0 %v2165
    %3709 = vmatprep.subr.mxu0 0.0
    %3710 = vmatpush1.msra.mxu0 %v2164
    %3711 = vmatprep.subr.mxu0 0.0
    %3712 = vmatpush2.msra.mxu0 0.0
    %3713 = vmatprep.subr.mxu0 0.0
    %3714 = vmatpush2.msra.mxu0 0.0
    %3715 = vmatprep.subr.mxu0 0.0
    %3716 = vmatpush2.msra.mxu0 0.0
    %3717 = vmatprep.subr.mxu0 0.0
    %3718 = vmatpush2.msra.mxu0 0.0
    %3719 = vmatprep.subr.mxu0 0.0
    %3720 = vmatpush2.msra.mxu0 0.0
    %3721 = vmatprep.subr.mxu0 0.0
    %3722 = vmatpush2.msra.mxu0 0.0
    %3723 = vmatprep.subr.mxu0 0.0
    %3724 = vmatpush2.msra.mxu0 0.0
    %3725 = vmatprep.subr.mxu0 0.0
    %3726 = vmatpush2.msra.mxu0 0.0
    %3727 = vmatprep.subr.mxu0 0.0
    %3728 = vmatpush2.msra.mxu0 0.0
    %3729 = vmatprep.subr.mxu0 0.0
    %3730 = vmatpush2.msra.mxu0 0.0
    %3731 = vmatprep.subr.mxu0 0.0
    %3732 = vmatpush2.msra.mxu0 0.0
    %3733 = vmatprep.subr.mxu0 0.0
    %3734 = vmatpush2.msra.mxu0 0.0
    %3735 = vmatprep.subr.mxu0 0.0
    %3736 = vmatpush2.msra.mxu0 0.0
    %3737 = vmatprep.subr.mxu0 0.0
    %3738 = vmatpush2.msra.mxu0 0.0
    %3739 = vmatprep.subr.mxu0 0.0
    %3740 = vmatpush2.msra.mxu0 0.0
    %3741 = vmatprep.subr.mxu0 0.0
    %3742 = vmatpush2.msra.mxu0 0.0
    %3743 = vmatprep.mubr.f32.mxu0 0.0
    %3744 = vmatmul.mubr.f32.gmra.mxu0 %v3677
    %v3745 = vpop.f32.mrf.mxu0
    %v3746 = vadd.f32 0.0, %v3745
    %v3747 = vpop.f32.mrf.mxu0
    %3748 = vdwg.mxu0
    %v3750 = vrot.slane %v3746, 4
    %v3752 = vadd.f32 %v2267, %v3750
    %v3753 = vxor.u32 %v3752, 2147483648
    %v3754 = vmul.f32 %v3753, 1.442695
    %v3755 = vpow.pop %v3754
    %v3756 = vadd.f32 %v3755, 1.0
    %v3757 = vrcp.pop %v3756
    %v3758 = vmul.f32 1.0, %v3757
    %v3759 = vtanh.pop %v3752
    %v3760 = vsel %vm474, %v3759, %v3758
    %v3762 = vrot.slane %v3550, 6
    %v3764 = vmul.f32 %v3760, %v3762
    %3766 = vrot.lane.b32.xlu0 %v3760, 64
    %v3767 = vpop.permute.xlu0 %3766
    %v3769 = vmul.f32 %v3760, %v3767
    %3771 = vrot.lane.b32.xlu0 %v3769, 32
    %v3772 = vpop.permute.xlu0 %3771
    %v3774 = vadd.f32 %v3764, %v3772
    %v3775 = vtanh.pop %v3774
    %3777 = vrot.lane.b32.xlu0 %v3775, 64
    %v3778 = vpop.permute.xlu0 %3777
    %v3780 = vmul.f32 %v3760, %v3778
    %v3781 = vrot.slane %v3663, 4
    %3782 = vrot.lane.b32.xlu0 %v3781, 32
    %v3783 = vpop.permute.xlu0 %3782
    %v3784 = vsel %vm121, %v3783, 0
    %3786 = vmatprep.subr.mxu0 0.0
    %3787 = vmatpush1.msra.mxu0 0.0
    %3788 = vmatprep.subr.mxu0 0.0
    %3789 = vmatpush1.msra.mxu0 0.0
    %3790 = vmatprep.subr.mxu0 0.0
    %3791 = vmatpush1.msra.mxu0 0.0
    %3792 = vmatprep.subr.mxu0 0.0
    %3793 = vmatpush1.msra.mxu0 0.0
    %3794 = vmatprep.subr.mxu0 0.0
    %3795 = vmatpush1.msra.mxu0 0.0
    %3796 = vmatprep.subr.mxu0 0.0
    %3797 = vmatpush1.msra.mxu0 0.0
    %3798 = vmatprep.subr.mxu0 0.0
    %3799 = vmatpush1.msra.mxu0 0.0
    %3800 = vmatprep.subr.mxu0 0.0
    %3801 = vmatpush1.msra.mxu0 0.0
    %3802 = vmatprep.subr.mxu0 0.0
    %3803 = vmatpush1.msra.mxu0 0.0
    %3804 = vmatprep.subr.mxu0 0.0
    %3805 = vmatpush1.msra.mxu0 0.0
    %3806 = vmatprep.subr.mxu0 0.0
    %3807 = vmatpush1.msra.mxu0 0.0
    %3808 = vmatprep.subr.mxu0 0.0
    %3809 = vmatpush1.msra.mxu0 0.0
    %3810 = vmatprep.subr.mxu0 0.0
    %3811 = vmatpush1.msra.mxu0 %v2172
    %3812 = vmatprep.subr.mxu0 0.0
    %3813 = vmatpush1.msra.mxu0 %v2171
    %3814 = vmatprep.subr.mxu0 0.0
    %3815 = vmatpush1.msra.mxu0 %v2170
    %3816 = vmatprep.subr.mxu0 0.0
    %3817 = vmatpush1.msra.mxu0 %v2169
    %3818 = vmatprep.subr.mxu0 0.0
    %3819 = vmatpush2.msra.mxu0 0.0
    %3820 = vmatprep.subr.mxu0 0.0
    %3821 = vmatpush2.msra.mxu0 0.0
    %3822 = vmatprep.subr.mxu0 0.0
    %3823 = vmatpush2.msra.mxu0 0.0
    %3824 = vmatprep.subr.mxu0 0.0
    %3825 = vmatpush2.msra.mxu0 0.0
    %3826 = vmatprep.subr.mxu0 0.0
    %3827 = vmatpush2.msra.mxu0 0.0
    %3828 = vmatprep.subr.mxu0 0.0
    %3829 = vmatpush2.msra.mxu0 0.0
    %3830 = vmatprep.subr.mxu0 0.0
    %3831 = vmatpush2.msra.mxu0 0.0
    %3832 = vmatprep.subr.mxu0 0.0
    %3833 = vmatpush2.msra.mxu0 0.0
    %3834 = vmatprep.subr.mxu0 0.0
    %3835 = vmatpush2.msra.mxu0 0.0
    %3836 = vmatprep.subr.mxu0 0.0
    %3837 = vmatpush2.msra.mxu0 0.0
    %3838 = vmatprep.subr.mxu0 0.0
    %3839 = vmatpush2.msra.mxu0 0.0
    %3840 = vmatprep.subr.mxu0 0.0
    %3841 = vmatpush2.msra.mxu0 0.0
    %3842 = vmatprep.subr.mxu0 0.0
    %3843 = vmatpush2.msra.mxu0 0.0
    %3844 = vmatprep.subr.mxu0 0.0
    %3845 = vmatpush2.msra.mxu0 0.0
    %3846 = vmatprep.subr.mxu0 0.0
    %3847 = vmatpush2.msra.mxu0 0.0
    %3848 = vmatprep.subr.mxu0 0.0
    %3849 = vmatpush2.msra.mxu0 0.0
    %3850 = vmatprep.mubr.f32.mxu0 0.0
    %3851 = vmatmul.mubr.f32.gmra.mxu0 %v3784
    %v3852 = vpop.f32.mrf.mxu0
    %v3853 = vadd.f32 0.0, %v3852
    %v3854 = vpop.f32.mrf.mxu0
    %3855 = vdwg.mxu0
    %v3857 = vrot.slane %v3853, 6
    %v3859 = vadd.f32 %v2354, %v3857
    %v3860 = vxor.u32 %v3859, 2147483648
    %v3861 = vmul.f32 %v3860, 1.442695
    %v3862 = vpow.pop %v3861
    %v3863 = vadd.f32 %v3862, 1.0
    %v3864 = vrcp.pop %v3863
    %v3865 = vmul.f32 1.0, %v3864
    %v3866 = vtanh.pop %v3859
    %v3867 = vsel %vm474, %v3866, %v3865
    %v3869 = vrot.slane %v3657, 2
    %v3871 = vmul.f32 %v3867, %v3869
    %3873 = vrot.lane.b32.xlu0 %v3867, 64
    %v3874 = vpop.permute.xlu0 %3873
    %v3876 = vmul.f32 %v3867, %v3874
    %3878 = vrot.lane.b32.xlu0 %v3876, 32
    %v3879 = vpop.permute.xlu0 %3878
    %v3881 = vadd.f32 %v3871, %v3879
    %v3882 = vtanh.pop %v3881
    %3884 = vrot.lane.b32.xlu0 %v3882, 64
    %v3885 = vpop.permute.xlu0 %3884
    %v3887 = vmul.f32 %v3867, %v3885
    %3889 = vrot.lane.b32.xlu0 %v3780, 32
    %v3890 = vpop.permute.xlu0 %3889
    %3892 = vst.msk [vmem:[#allocation3 + $0x8] sm:$0x30] %vm1045, %v3890
    %3894 = vrot.lane.b32.xlu0 %v3887, 64
    %v3895 = vpop.permute.xlu0 %3894
    %3897 = vst.msk [vmem:[#allocation3] sm:$0xc] %vm1051, %v3895
    %v3898 = vrot.slane %v3780, 4
    %3899 = vrot.lane.b32.xlu0 %v3898, 32
    %v3900 = vpop.permute.xlu0 %3899
    %v3901 = vsel %vm121, %v3900, 0
    %3903 = vmatprep.subr.mxu0 0.0
    %3904 = vmatpush1.msra.mxu0 0.0
    %3905 = vmatprep.subr.mxu0 0.0
    %3906 = vmatpush1.msra.mxu0 0.0
    %3907 = vmatprep.subr.mxu0 0.0
    %3908 = vmatpush1.msra.mxu0 0.0
    %3909 = vmatprep.subr.mxu0 0.0
    %3910 = vmatpush1.msra.mxu0 0.0
    %3911 = vmatprep.subr.mxu0 0.0
    %3912 = vmatpush1.msra.mxu0 0.0
    %3913 = vmatprep.subr.mxu0 0.0
    %3914 = vmatpush1.msra.mxu0 0.0
    %3915 = vmatprep.subr.mxu0 0.0
    %3916 = vmatpush1.msra.mxu0 0.0
    %3917 = vmatprep.subr.mxu0 0.0
    %3918 = vmatpush1.msra.mxu0 0.0
    %3919 = vmatprep.subr.mxu0 0.0
    %3920 = vmatpush1.msra.mxu0 0.0
    %3921 = vmatprep.subr.mxu0 0.0
    %3922 = vmatpush1.msra.mxu0 0.0
    %3923 = vmatprep.subr.mxu0 0.0
    %3924 = vmatpush1.msra.mxu0 0.0
    %3925 = vmatprep.subr.mxu0 0.0
    %3926 = vmatpush1.msra.mxu0 0.0
    %3927 = vmatprep.subr.mxu0 0.0
    %3928 = vmatpush1.msra.mxu0 %v2167
    %3929 = vmatprep.subr.mxu0 0.0
    %3930 = vmatpush1.msra.mxu0 %v2166
    %3931 = vmatprep.subr.mxu0 0.0
    %3932 = vmatpush1.msra.mxu0 %v2165
    %3933 = vmatprep.subr.mxu0 0.0
    %3934 = vmatpush1.msra.mxu0 %v2164
    %3935 = vmatprep.subr.mxu0 0.0
    %3936 = vmatpush2.msra.mxu0 0.0
    %3937 = vmatprep.subr.mxu0 0.0
    %3938 = vmatpush2.msra.mxu0 0.0
    %3939 = vmatprep.subr.mxu0 0.0
    %3940 = vmatpush2.msra.mxu0 0.0
    %3941 = vmatprep.subr.mxu0 0.0
    %3942 = vmatpush2.msra.mxu0 0.0
    %3943 = vmatprep.subr.mxu0 0.0
    %3944 = vmatpush2.msra.mxu0 0.0
    %3945 = vmatprep.subr.mxu0 0.0
    %3946 = vmatpush2.msra.mxu0 0.0
    %3947 = vmatprep.subr.mxu0 0.0
    %3948 = vmatpush2.msra.mxu0 0.0
    %3949 = vmatprep.subr.mxu0 0.0
    %3950 = vmatpush2.msra.mxu0 0.0
    %3951 = vmatprep.subr.mxu0 0.0
    %3952 = vmatpush2.msra.mxu0 0.0
    %3953 = vmatprep.subr.mxu0 0.0
    %3954 = vmatpush2.msra.mxu0 0.0
    %3955 = vmatprep.subr.mxu0 0.0
    %3956 = vmatpush2.msra.mxu0 0.0
    %3957 = vmatprep.subr.mxu0 0.0
    %3958 = vmatpush2.msra.mxu0 0.0
    %3959 = vmatprep.subr.mxu0 0.0
    %3960 = vmatpush2.msra.mxu0 0.0
    %3961 = vmatprep.subr.mxu0 0.0
    %3962 = vmatpush2.msra.mxu0 0.0
    %3963 = vmatprep.subr.mxu0 0.0
    %3964 = vmatpush2.msra.mxu0 0.0
    %3965 = vmatprep.subr.mxu0 0.0
    %3966 = vmatpush2.msra.mxu0 0.0
    %3967 = vmatprep.mubr.f32.mxu0 0.0
    %3968 = vmatmul.mubr.f32.gmra.mxu0 %v3901
    %v3969 = vpop.f32.mrf.mxu0
    %v3970 = vadd.f32 0.0, %v3969
    %v3971 = vpop.f32.mrf.mxu0
    %3972 = vdwg.mxu0
    %v3974 = vrot.slane %v3970, 2
    %v3976 = vadd.f32 %v2267, %v3974
    %v3977 = vxor.u32 %v3976, 2147483648
    %v3978 = vmul.f32 %v3977, 1.442695
    %v3979 = vpow.pop %v3978
    %v3980 = vadd.f32 %v3979, 1.0
    %v3981 = vrcp.pop %v3980
    %v3982 = vmul.f32 1.0, %v3981
    %v3983 = vtanh.pop %v3976
    %v3984 = vsel %vm474, %v3983, %v3982
    %v3986 = vrot.slane %v3774, 6
    %v3988 = vmul.f32 %v3984, %v3986
    %3990 = vrot.lane.b32.xlu0 %v3984, 64
    %v3991 = vpop.permute.xlu0 %3990
    %v3993 = vmul.f32 %v3984, %v3991
    %3995 = vrot.lane.b32.xlu0 %v3993, 32
    %v3996 = vpop.permute.xlu0 %3995
    %v3998 = vadd.f32 %v3988, %v3996
    %v3999 = vtanh.pop %v3998
    %4001 = vrot.lane.b32.xlu0 %v3999, 64
    %v4002 = vpop.permute.xlu0 %4001
    %v4004 = vmul.f32 %v3984, %v4002
    %v4005 = vrot.slane %v3887, 2
    %4006 = vrot.lane.b32.xlu0 %v4005, 32
    %v4007 = vpop.permute.xlu0 %4006
    %v4008 = vsel %vm121, %v4007, 0
    %4010 = vmatprep.subr.mxu0 0.0
    %4011 = vmatpush1.msra.mxu0 0.0
    %4012 = vmatprep.subr.mxu0 0.0
    %4013 = vmatpush1.msra.mxu0 0.0
    %4014 = vmatprep.subr.mxu0 0.0
    %4015 = vmatpush1.msra.mxu0 0.0
    %4016 = vmatprep.subr.mxu0 0.0
    %4017 = vmatpush1.msra.mxu0 0.0
    %4018 = vmatprep.subr.mxu0 0.0
    %4019 = vmatpush1.msra.mxu0 0.0
    %4020 = vmatprep.subr.mxu0 0.0
    %4021 = vmatpush1.msra.mxu0 0.0
    %4022 = vmatprep.subr.mxu0 0.0
    %4023 = vmatpush1.msra.mxu0 0.0
    %4024 = vmatprep.subr.mxu0 0.0
    %4025 = vmatpush1.msra.mxu0 0.0
    %4026 = vmatprep.subr.mxu0 0.0
    %4027 = vmatpush1.msra.mxu0 0.0
    %4028 = vmatprep.subr.mxu0 0.0
    %4029 = vmatpush1.msra.mxu0 0.0
    %4030 = vmatprep.subr.mxu0 0.0
    %4031 = vmatpush1.msra.mxu0 0.0
    %4032 = vmatprep.subr.mxu0 0.0
    %4033 = vmatpush1.msra.mxu0 0.0
    %4034 = vmatprep.subr.mxu0 0.0
    %4035 = vmatpush1.msra.mxu0 %v2172
    %4036 = vmatprep.subr.mxu0 0.0
    %4037 = vmatpush1.msra.mxu0 %v2171
    %4038 = vmatprep.subr.mxu0 0.0
    %4039 = vmatpush1.msra.mxu0 %v2170
    %4040 = vmatprep.subr.mxu0 0.0
    %4041 = vmatpush1.msra.mxu0 %v2169
    %4042 = vmatprep.subr.mxu0 0.0
    %4043 = vmatpush2.msra.mxu0 0.0
    %4044 = vmatprep.subr.mxu0 0.0
    %4045 = vmatpush2.msra.mxu0 0.0
    %4046 = vmatprep.subr.mxu0 0.0
    %4047 = vmatpush2.msra.mxu0 0.0
    %4048 = vmatprep.subr.mxu0 0.0
    %4049 = vmatpush2.msra.mxu0 0.0
    %4050 = vmatprep.subr.mxu0 0.0
    %4051 = vmatpush2.msra.mxu0 0.0
    %4052 = vmatprep.subr.mxu0 0.0
    %4053 = vmatpush2.msra.mxu0 0.0
    %4054 = vmatprep.subr.mxu0 0.0
    %4055 = vmatpush2.msra.mxu0 0.0
    %4056 = vmatprep.subr.mxu0 0.0
    %4057 = vmatpush2.msra.mxu0 0.0
    %4058 = vmatprep.subr.mxu0 0.0
    %4059 = vmatpush2.msra.mxu0 0.0
    %4060 = vmatprep.subr.mxu0 0.0
    %4061 = vmatpush2.msra.mxu0 0.0
    %4062 = vmatprep.subr.mxu0 0.0
    %4063 = vmatpush2.msra.mxu0 0.0
    %4064 = vmatprep.subr.mxu0 0.0
    %4065 = vmatpush2.msra.mxu0 0.0
    %4066 = vmatprep.subr.mxu0 0.0
    %4067 = vmatpush2.msra.mxu0 0.0
    %4068 = vmatprep.subr.mxu0 0.0
    %4069 = vmatpush2.msra.mxu0 0.0
    %4070 = vmatprep.subr.mxu0 0.0
    %4071 = vmatpush2.msra.mxu0 0.0
    %4072 = vmatprep.subr.mxu0 0.0
    %4073 = vmatpush2.msra.mxu0 0.0
    %4074 = vmatprep.mubr.f32.mxu0 0.0
    %4075 = vmatmul.mubr.f32.gmra.mxu0 %v4008
    %v4076 = vpop.f32.mrf.mxu0
    %v4077 = vadd.f32 0.0, %v4076
    %v4078 = vpop.f32.mrf.mxu0
    %4079 = vdwg.mxu0
    %v4080 = vadd.f32 %v2354, %v4077
    %v4081 = vxor.u32 %v4080, 2147483648
    %v4082 = vmul.f32 %v4081, 1.442695
    %v4083 = vpow.pop %v4082
    %v4084 = vadd.f32 %v4083, 1.0
    %v4085 = vrcp.pop %v4084
    %v4086 = vmul.f32 1.0, %v4085
    %v4087 = vtanh.pop %v4080
    %v4088 = vsel %vm474, %v4087, %v4086
    %v4090 = vrot.slane %v3881, 2
    %v4092 = vmul.f32 %v4088, %v4090
    %4094 = vrot.lane.b32.xlu0 %v4088, 64
    %v4095 = vpop.permute.xlu0 %4094
    %v4097 = vmul.f32 %v4088, %v4095
    %4099 = vrot.lane.b32.xlu0 %v4097, 32
    %v4100 = vpop.permute.xlu0 %4099
    %v4102 = vadd.f32 %v4092, %v4100
    %v4103 = vtanh.pop %v4102
    %4105 = vrot.lane.b32.xlu0 %v4103, 64
    %v4106 = vpop.permute.xlu0 %4105
    %v4108 = vmul.f32 %v4088, %v4106
    %4110 = vrot.lane.b32.xlu0 %v4004, 32
    %v4111 = vpop.permute.xlu0 %4110
    %4113 = vst.msk [vmem:[#allocation3 + $0x8] sm:$0xc0] %vm1268, %v4111
    %4115 = vrot.lane.b32.xlu0 %v4108, 64
    %v4116 = vpop.permute.xlu0 %4115
    %4118 = vst.msk [vmem:[#allocation3] sm:$0x3] %vm1274, %v4116
    %v4119 = vld [vmem:[#allocation3] sm:$0xff]
    %v4120 = vld [vmem:[#allocation3 + $0x8] sm:$0xff]
    %v4121 = vld [vmem:[%s8] sm:$0xff]
    %v4122 = vld [vmem:[%s8 + $0x8] sm:$0xff]
    %v4123 = vld [vmem:[%s8 + $0x10] sm:$0xff]
    %v4124 = vld [vmem:[%s8 + $0x18] sm:$0xff]
    %v4125 = vld [vmem:[%s8 + $0x20] sm:$0xff]
    %v4126 = vld [vmem:[%s8 + $0x28] sm:$0xff]
    %v4127 = vld [vmem:[%s8 + $0x30] sm:$0xff]
    %v4128 = vld [vmem:[%s8 + $0x38] sm:$0xff]
    %v4129 = vld [vmem:[#allocation11] sm:$0x1]
    %v4131 = vlaneseq
    %v4132 = vshrl.u32 %v4131, 7
    %v4133 = vsub.s32 0, %v4132
    %v4134 = vrot.slane %v4129, %v4133
    %v4137 = vsel %vm2188, %v4119, 0
    %v4140 = vsel %vm2188, %v4120, 0
    %4142 = vmatprep.subr.mxu0 0.0
    %4143 = vmatpush1.msra.mxu0 0.0
    %4144 = vmatprep.subr.mxu0 0.0
    %4145 = vmatpush1.msra.mxu0 0.0
    %4146 = vmatprep.subr.mxu0 0.0
    %4147 = vmatpush1.msra.mxu0 0.0
    %4148 = vmatprep.subr.mxu0 0.0
    %4149 = vmatpush1.msra.mxu0 0.0
    %4150 = vmatprep.subr.mxu0 0.0
    %4151 = vmatpush1.msra.mxu0 0.0
    %4152 = vmatprep.subr.mxu0 0.0
    %4153 = vmatpush1.msra.mxu0 0.0
    %4154 = vmatprep.subr.mxu0 0.0
    %4155 = vmatpush1.msra.mxu0 0.0
    %4156 = vmatprep.subr.mxu0 0.0
    %4157 = vmatpush1.msra.mxu0 0.0
    %4158 = vmatprep.subr.mxu0 0.0
    %4159 = vmatpush1.msra.mxu0 %v4128
    %4160 = vmatprep.subr.mxu0 0.0
    %4161 = vmatpush1.msra.mxu0 %v4127
    %4162 = vmatprep.subr.mxu0 0.0
    %4163 = vmatpush1.msra.mxu0 %v4126
    %4164 = vmatprep.subr.mxu0 0.0
    %4165 = vmatpush1.msra.mxu0 %v4125
    %4166 = vmatprep.subr.mxu0 0.0
    %4167 = vmatpush1.msra.mxu0 %v4124
    %4168 = vmatprep.subr.mxu0 0.0
    %4169 = vmatpush1.msra.mxu0 %v4123
    %4170 = vmatprep.subr.mxu0 0.0
    %4171 = vmatpush1.msra.mxu0 %v4122
    %4172 = vmatprep.subr.mxu0 0.0
    %4173 = vmatpush1.msra.mxu0 %v4121
    %4174 = vmatprep.subr.mxu0 0.0
    %4175 = vmatpush2.msra.mxu0 0.0
    %4176 = vmatprep.subr.mxu0 0.0
    %4177 = vmatpush2.msra.mxu0 0.0
    %4178 = vmatprep.subr.mxu0 0.0
    %4179 = vmatpush2.msra.mxu0 0.0
    %4180 = vmatprep.subr.mxu0 0.0
    %4181 = vmatpush2.msra.mxu0 0.0
    %4182 = vmatprep.subr.mxu0 0.0
    %4183 = vmatpush2.msra.mxu0 0.0
    %4184 = vmatprep.subr.mxu0 0.0
    %4185 = vmatpush2.msra.mxu0 0.0
    %4186 = vmatprep.subr.mxu0 0.0
    %4187 = vmatpush2.msra.mxu0 0.0
    %4188 = vmatprep.subr.mxu0 0.0
    %4189 = vmatpush2.msra.mxu0 0.0
    %4190 = vmatprep.subr.mxu0 0.0
    %4191 = vmatpush2.msra.mxu0 0.0
    %4192 = vmatprep.subr.mxu0 0.0
    %4193 = vmatpush2.msra.mxu0 0.0
    %4194 = vmatprep.subr.mxu0 0.0
    %4195 = vmatpush2.msra.mxu0 0.0
    %4196 = vmatprep.subr.mxu0 0.0
    %4197 = vmatpush2.msra.mxu0 0.0
    %4198 = vmatprep.subr.mxu0 0.0
    %4199 = vmatpush2.msra.mxu0 0.0
    %4200 = vmatprep.subr.mxu0 0.0
    %4201 = vmatpush2.msra.mxu0 0.0
    %4202 = vmatprep.subr.mxu0 0.0
    %4203 = vmatpush2.msra.mxu0 0.0
    %4204 = vmatprep.subr.mxu0 0.0
    %4205 = vmatpush2.msra.mxu0 0.0
    %4206 = vmatprep.mubr.f32.mxu0 0.0
    %4207 = vmatmul.mubr.f32.gmra.mxu0 %v4137
    %v4208 = vpop.f32.mrf.mxu0
    %v4209 = vadd.f32 %v4134, %v4208
    %v4210 = vpop.f32.mrf.mxu0
    %4211 = vmatprep.mubr.f32.mxu0 0.0
    %4212 = vmatmul.mubr.f32.gmra.mxu0 %v4140
    %v4213 = vpop.f32.mrf.mxu0
    %v4214 = vadd.f32 %v4134, %v4213
    %v4215 = vpop.f32.mrf.mxu0
    %4216 = vdwg.mxu0
    %vm4217 = vcmask 39936
    %4218 = vst.msk [vmem:[%s10] sm:$0xff] %vm4217, %v4209
    %4219 = vst.msk [vmem:[%s10 + $0x8] sm:$0xff] %vm4217, %v4214
    // Predicated region
    $region62: #{forward.1} parent=1 // pred_check
      _
    $region63: #{forward.1} parent=1 // pred_check_branch
      %4221 = sbr.rel (0) target = $region65
    $region64: #{forward.1} parent=1 // pred_region
      _
    $region65: #{forward.1} parent=1 // pred_fallthru
      _
    // Predicated region
    $region66: #{forward.1} parent=1 // pred_check
      _
    $region67: #{forward.1} parent=1 // pred_check_branch
      %4223 = sbr.rel (0) target = $region69
    $region68: #{forward.1} parent=1 // pred_region
      _
    $region69: #{forward.1} parent=1 // pred_fallthru
      _
    %4224 = vsyncpa [#allocation5], 1
    %4225 = vsyncpa [#allocation7], 1
    %4226 = vsyncpa [#allocation10], 1

</llo_original>
